<compile_context>
chip_gen: v6e
topology: v6e:2x2x1
jax: 0.10.0
libtpu: 0.0.40
codegen_flags: <defaults>
</compile_context>

<pallas_src>
import math

import jax
import jax.numpy as jnp
from jax.experimental import pallas as pl
from jax.experimental.pallas import tpu as pltpu

KSIZE = 5
PAD = 2
BN_EPS = 1e-5
LANES = 128


def _round_up(x, m):
    return ((x + m - 1) // m) * m


def postnet_fused_kernel(x_ref, w_ref, shift_ref, o_ref, buf0, buf1):
    """All 5 Postnet layers fused; activations stay in VMEM ping-pong scratch.

    x_ref:     (B, Cm, T)        NCW input (like the PyTorch module)
    w_ref:     (NL, K*CP, CP)    folded conv+BN weights, tap-major, lane-padded
    shift_ref: (NL, 1, CP)       folded conv-bias + BN shift, lane-padded
    o_ref:     (B, Cm, T)        NCW output
    buf0/buf1: (B, T+2*PAD, CP)  VMEM ping-pong activation buffers (time halo)
    """
    B, Cm, T = x_ref.shape
    NL = w_ref.shape[0]
    CP = w_ref.shape[2]

    # Zero only the halo rows once; interior rows are always fully overwritten
    # before they are read (layer l writes the interior of the buffer layer
    # l+1 reads), so the halo stays zero for every layer.
    halo = jnp.zeros((B, PAD, CP), jnp.float32)
    for buf in (buf0, buf1):
        buf[:, :PAD, :] = halo
        buf[:, PAD + T:, :] = halo

    # Load input, pad channels (to CP lanes) and transpose NCW -> NWC so that
    # channels land on the lane axis; place it in buf0's interior.
    x = x_ref[...]                                                 # (B, Cm, T)
    if CP > Cm:
        x = jnp.concatenate(
            [x, jnp.zeros((B, CP - Cm, T), jnp.float32)], axis=1)  # (B, CP, T)
    x = jnp.transpose(x, (0, 2, 1))                                # (B, T, CP)
    buf0[:, PAD:PAD + T, :] = x

    bufs = (buf0, buf1)

    def layer(src_ref, l):
        xp = src_ref[...]                                          # (B, TP, CP)
        # im2col: 5 shifted time-windows concatenated on the lane axis,
        # batch merged into the matmul M dimension -> one big-K MXU matmul.
        cols = jnp.concatenate(
            [xp[:, k:k + T, :] for k in range(KSIZE)], axis=-1)    # (B, T, K*CP)
        cols = cols.reshape(B * T, KSIZE * CP)
        acc = jnp.dot(cols, w_ref[l], preferred_element_type=jnp.float32)
        # Conv bias + BatchNorm already folded into w/shift; Dropout = identity.
        return jnp.tanh(acc + shift_ref[l])                        # (B*T, CP)

    # Layers 0..NL-2 ping-pong through VMEM; no HBM round trips.
    for l in range(NL - 1):
        y = layer(bufs[l % 2], l)
        bufs[(l + 1) % 2][:, PAD:PAD + T, :] = y.reshape(B, T, CP)

    # Last layer writes straight to the NCW output: drop the lane padding
    # first (smaller transpose), then NWC -> NCW.
    y = layer(bufs[(NL - 1) % 2], NL - 1).reshape(B, T, CP)        # (B, T, CP)
    y = y[:, :, :Cm]                                               # (B, T, Cm)
    o_ref[...] = jnp.transpose(y, (0, 2, 1))                       # (B, Cm, T)


def postnet_forward(x_ncw, w_packed, shift_packed):
    """x_ncw: (B, n_mel, T) NCW, like the PyTorch module."""
    B, Cm, T = x_ncw.shape
    NL, KCP, CP = w_packed.shape
    return pl.pallas_call(
        postnet_fused_kernel,
        out_shape=jax.ShapeDtypeStruct((B, Cm, T), jnp.float32),
        grid=(1,),
        in_specs=[
            pl.BlockSpec((B, Cm, T), lambda i: (0, 0, 0)),
            pl.BlockSpec((NL, KCP, CP), lambda i: (0, 0, 0)),
            pl.BlockSpec((NL, 1, CP), lambda i: (0, 0, 0)),
        ],
        out_specs=pl.BlockSpec((B, Cm, T), lambda i: (0, 0, 0)),
        scratch_shapes=[
            pltpu.VMEM((B, T + 2 * PAD, CP), jnp.float32),
            pltpu.VMEM((B, T + 2 * PAD, CP), jnp.float32),
        ],
        compiler_params=pltpu.CompilerParams(
            dimension_semantics=("arbitrary",),
            vmem_limit_bytes=32 * 1024 * 1024,
        ),
    )(x_ncw, w_packed, shift_packed)


def init_postnet_params(key, n_mel, embed_dim):
    """Deterministic params matching Postnet.__init__ shapes/inits (eval mode)."""
    dims = [(n_mel, embed_dim), (embed_dim, embed_dim), (embed_dim, embed_dim),
            (embed_dim, embed_dim), (embed_dim, n_mel)]
    gains = [5.0 / 3.0] * 4 + [1.0]          # tanh gain for layers 1-4, linear for 5
    params = []
    for (cin, cout), gain in zip(dims, gains):
        key, kw, kb = jax.random.split(key, 3)
        fan_in, fan_out = cin * KSIZE, cout * KSIZE
        bound_w = gain * math.sqrt(6.0 / (fan_in + fan_out))     # xavier_uniform_
        w_pt = jax.random.uniform(kw, (cout, cin, KSIZE), jnp.float32,
                                  -bound_w, bound_w)
        w_kio = jnp.transpose(w_pt, (2, 1, 0))                   # (K, Cin, Cout)
        bound_b = 1.0 / math.sqrt(fan_in)                        # Conv1d default bias
        bias = jax.random.uniform(kb, (cout,), jnp.float32, -bound_b, bound_b)
        # BatchNorm1d right after __init__ (eval): gamma=1, beta=0, mean=0, var=1
        scale = jnp.ones((cout,), jnp.float32) / jnp.sqrt(1.0 + BN_EPS)
        shift = jnp.zeros((cout,), jnp.float32)
        params.append((w_kio, bias, scale, shift))
    return params


def pack_params(params, cp):
    """Fold conv bias + BN into weights, pad channels to cp lanes, stack layers."""
    nl = len(params)
    w_packed = jnp.zeros((nl, KSIZE, cp, cp), jnp.float32)
    s_packed = jnp.zeros((nl, 1, cp), jnp.float32)
    for l, (w_kio, bias, scale, shift) in enumerate(params):
        cin, cout = w_kio.shape[1], w_kio.shape[2]
        w_fold = w_kio * scale[None, None, :]          # fold BN scale into conv weight
        s_fold = bias * scale + shift                  # fold conv bias + BN shift
        w_packed = w_packed.at[l, :, :cin, :cout].set(w_fold)
        s_packed = s_packed.at[l, 0, :cout].set(s_fold)
    return w_packed.reshape(nl, KSIZE * cp, cp), s_packed


def postnet_reference(x_ncw, params):
    """Plain-JAX reference mirroring the PyTorch module (inference mode)."""
    x = jnp.transpose(x_ncw, (0, 2, 1))
    for (w, b, sc, sh) in params:
        B, T, _ = x.shape
        xp = jnp.pad(x, ((0, 0), (PAD, PAD), (0, 0)))
        acc = jnp.zeros((B, T, w.shape[2]), jnp.float32) + b[None, None, :]
        for k in range(KSIZE):
            acc = acc + jnp.einsum("bti,io->bto", xp[:, k:k + T, :], w[k],
                                   precision=jax.lax.Precision.HIGHEST)
        # NOTE: this module's 5th layer also applies Tanh (per the given spec).
        x = jnp.tanh(acc * sc[None, None, :] + sh[None, None, :])
    return jnp.transpose(x, (0, 2, 1))


if __name__ == "__main__":
    # small shapes: batch=2, n_mel_channels=16, postnet_embedding_dim=32, T=32
    B, N_MEL, EMBED, T = 2, 16, 32, 32

    key = jax.random.PRNGKey(0)
    key, kx = jax.random.split(key)
    x = jax.random.normal(kx, (B, N_MEL, T), jnp.float32)   # NCW like PyTorch

    params = init_postnet_params(key, N_MEL, EMBED)
    cp = _round_up(max(N_MEL, EMBED), LANES)                 # lane-dense channel width
    w_packed, shift_packed = pack_params(params, cp)

    fwd = jax.jit(postnet_forward)
    out = jax.block_until_ready(fwd(x, w_packed, shift_packed))

    ref = postnet_reference(x, params)
    assert out.shape == (B, N_MEL, T), out.shape
    err = float(jnp.max(jnp.abs(out - ref)))
    assert err < 1e-4, err

    print("KERNEL_OK")
</pallas_src>

<mosaic_0001>
module attributes {stable_mosaic.version = 11 : i64} {
  func.func @postnet_fused_kernel(%arg0: i32, %arg1: memref<2x16x32xf32, #tpu.memory_space<vmem>>, %arg2: memref<5x640x128xf32, #tpu.memory_space<vmem>>, %arg3: memref<5x1x128xf32, #tpu.memory_space<vmem>>, %arg4: memref<2x16x32xf32, #tpu.memory_space<vmem>>, %arg5: memref<2x36x128xf32, #tpu.memory_space<vmem>>, %arg6: memref<2x36x128xf32, #tpu.memory_space<vmem>>) attributes {dimension_semantics = [#tpu.dimension_semantics<arbitrary>], iteration_bounds = array<i64: 1>, scalar_prefetch = 0 : i64, scratch_operands = 2 : i64, tpu.core_type = #tpu.core_type<tc>, window_params = [{pipeline_mode = #tpu.pipeline_mode<synchronous>, transform_indices = @transform_0, window_bounds = array<i64: 2, 16, 32>}, {pipeline_mode = #tpu.pipeline_mode<synchronous>, transform_indices = @transform_1, window_bounds = array<i64: 5, 640, 128>}, {pipeline_mode = #tpu.pipeline_mode<synchronous>, transform_indices = @transform_2, window_bounds = array<i64: 5, 1, 128>}, {pipeline_mode = #tpu.pipeline_mode<synchronous>, transform_indices = @transform_3, window_bounds = array<i64: 2, 16, 32>}]} {
    %cst = arith.constant 0.000000e+00 : f32
    %0 = vector.broadcast %cst : f32 to vector<2x2x128xf32>
    %c0 = arith.constant 0 : index
    %c0_0 = arith.constant 0 : index
    %c0_1 = arith.constant 0 : index
    %1 = vector.load %arg5[%c0, %c0_0, %c0_1] : memref<2x36x128xf32, #tpu.memory_space<vmem>>, vector<2x2x128xf32>
    tpu.vector_store %arg5[%c0, %c0_0, %c0_1], %0 {strides = array<i32>} : memref<2x36x128xf32, #tpu.memory_space<vmem>>, vector<2x2x128xf32>,
    %c0_2 = arith.constant 0 : index
    %c34 = arith.constant 34 : index
    %c0_3 = arith.constant 0 : index
    %2 = vector.load %arg5[%c0_2, %c34, %c0_3] : memref<2x36x128xf32, #tpu.memory_space<vmem>>, vector<2x2x128xf32>
    tpu.vector_store %arg5[%c0_2, %c34, %c0_3], %0 {strides = array<i32>} : memref<2x36x128xf32, #tpu.memory_space<vmem>>, vector<2x2x128xf32>,
    %c0_4 = arith.constant 0 : index
    %c0_5 = arith.constant 0 : index
    %c0_6 = arith.constant 0 : index
    %3 = vector.load %arg6[%c0_4, %c0_5, %c0_6] : memref<2x36x128xf32, #tpu.memory_space<vmem>>, vector<2x2x128xf32>
    tpu.vector_store %arg6[%c0_4, %c0_5, %c0_6], %0 {strides = array<i32>} : memref<2x36x128xf32, #tpu.memory_space<vmem>>, vector<2x2x128xf32>,
    %c0_7 = arith.constant 0 : index
    %c34_8 = arith.constant 34 : index
    %c0_9 = arith.constant 0 : index
    %4 = vector.load %arg6[%c0_7, %c34_8, %c0_9] : memref<2x36x128xf32, #tpu.memory_space<vmem>>, vector<2x2x128xf32>
    tpu.vector_store %arg6[%c0_7, %c34_8, %c0_9], %0 {strides = array<i32>} : memref<2x36x128xf32, #tpu.memory_space<vmem>>, vector<2x2x128xf32>,
    %c0_10 = arith.constant 0 : index
    %c0_11 = arith.constant 0 : index
    %c0_12 = arith.constant 0 : index
    %5 = vector.load %arg1[%c0_10, %c0_11, %c0_12] : memref<2x16x32xf32, #tpu.memory_space<vmem>>, vector<2x16x32xf32>
    %cst_13 = arith.constant 0.000000e+00 : f32
    %6 = vector.broadcast %cst_13 : f32 to vector<2x112x32xf32>
    %7 = tpu.concatenate %5, %6 in 1 : vector<2x16x32xf32>, vector<2x112x32xf32> -> vector<2x128x32xf32>
    %8 = tpu.transpose %7, [0, 2, 1] : vector<2x128x32xf32> -> vector<2x32x128xf32>
    %c0_14 = arith.constant 0 : index
    %c2 = arith.constant 2 : index
    %c0_15 = arith.constant 0 : index
    %9 = vector.load %arg5[%c0_14, %c2, %c0_15] : memref<2x36x128xf32, #tpu.memory_space<vmem>>, vector<2x32x128xf32>
    tpu.vector_store %arg5[%c0_14, %c2, %c0_15], %8 {strides = array<i32>} : memref<2x36x128xf32, #tpu.memory_space<vmem>>, vector<2x32x128xf32>,
    %c0_16 = arith.constant 0 : index
    %c0_17 = arith.constant 0 : index
    %c0_18 = arith.constant 0 : index
    %10 = vector.load %arg5[%c0_16, %c0_17, %c0_18] : memref<2x36x128xf32, #tpu.memory_space<vmem>>, vector<2x36x128xf32>
    %11 = vector.extract_strided_slice %10 {offsets = [0, 0, 0], sizes = [2, 32, 128], strides = [1, 1, 1]} : vector<2x36x128xf32> to vector<2x32x128xf32>
    %12 = vector.extract_strided_slice %10 {offsets = [0, 1, 0], sizes = [2, 32, 128], strides = [1, 1, 1]} : vector<2x36x128xf32> to vector<2x32x128xf32>
    %13 = vector.extract_strided_slice %10 {offsets = [0, 2, 0], sizes = [2, 32, 128], strides = [1, 1, 1]} : vector<2x36x128xf32> to vector<2x32x128xf32>
    %14 = vector.extract_strided_slice %10 {offsets = [0, 3, 0], sizes = [2, 32, 128], strides = [1, 1, 1]} : vector<2x36x128xf32> to vector<2x32x128xf32>
    %15 = vector.extract_strided_slice %10 {offsets = [0, 4, 0], sizes = [2, 32, 128], strides = [1, 1, 1]} : vector<2x36x128xf32> to vector<2x32x128xf32>
    %16 = tpu.concatenate %11, %12, %13, %14, %15 in 2 : vector<2x32x128xf32>, vector<2x32x128xf32>, vector<2x32x128xf32>, vector<2x32x128xf32>, vector<2x32x128xf32> -> vector<2x32x640xf32>
    %17 = vector.shape_cast %16 : vector<2x32x640xf32> to vector<64x640xf32>
    %c0_19 = arith.constant 0 : index
    %c0_20 = arith.constant 0 : index
    %c0_21 = arith.constant 0 : index
    %18 = vector.load %arg2[%c0_19, %c0_20, %c0_21] : memref<5x640x128xf32, #tpu.memory_space<vmem>>, vector<1x640x128xf32>
    %19 = vector.shape_cast %18 : vector<1x640x128xf32> to vector<640x128xf32>
    %cst_22 = arith.constant dense<0.000000e+00> : vector<64x128xf32>
    %20 = tpu.matmul %17, %19, %cst_22 {dimension_numbers = #tpu.dot_dimension_numbers<[1], [0], [0], [1], [0, 0, 1, 1], [], []>} : vector<64x640xf32>, vector<640x128xf32>, vector<64x128xf32> -> vector<64x128xf32>
    %c0_23 = arith.constant 0 : index
    %c0_24 = arith.constant 0 : index
    %c0_25 = arith.constant 0 : index
    %21 = vector.load %arg3[%c0_23, %c0_24, %c0_25] : memref<5x1x128xf32, #tpu.memory_space<vmem>>, vector<1x1x128xf32>
    %22 = vector.shape_cast %21 : vector<1x1x128xf32> to vector<1x128xf32>
    %23 = vector.broadcast %22 : vector<1x128xf32> to vector<64x128xf32>
    %24 = arith.addf %20, %23 : vector<64x128xf32>
    %25 = math.tanh %24 : vector<64x128xf32>
    %26 = vector.shape_cast %25 : vector<64x128xf32> to vector<2x32x128xf32>
    %c0_26 = arith.constant 0 : index
    %c2_27 = arith.constant 2 : index
    %c0_28 = arith.constant 0 : index
    %27 = vector.load %arg6[%c0_26, %c2_27, %c0_28] : memref<2x36x128xf32, #tpu.memory_space<vmem>>, vector<2x32x128xf32>
    tpu.vector_store %arg6[%c0_26, %c2_27, %c0_28], %26 {strides = array<i32>} : memref<2x36x128xf32, #tpu.memory_space<vmem>>, vector<2x32x128xf32>,
    %c0_29 = arith.constant 0 : index
    %c0_30 = arith.constant 0 : index
    %c0_31 = arith.constant 0 : index
    %28 = vector.load %arg6[%c0_29, %c0_30, %c0_31] : memref<2x36x128xf32, #tpu.memory_space<vmem>>, vector<2x36x128xf32>
    %29 = vector.extract_strided_slice %28 {offsets = [0, 0, 0], sizes = [2, 32, 128], strides = [1, 1, 1]} : vector<2x36x128xf32> to vector<2x32x128xf32>
    %30 = vector.extract_strided_slice %28 {offsets = [0, 1, 0], sizes = [2, 32, 128], strides = [1, 1, 1]} : vector<2x36x128xf32> to vector<2x32x128xf32>
    %31 = vector.extract_strided_slice %28 {offsets = [0, 2, 0], sizes = [2, 32, 128], strides = [1, 1, 1]} : vector<2x36x128xf32> to vector<2x32x128xf32>
    %32 = vector.extract_strided_slice %28 {offsets = [0, 3, 0], sizes = [2, 32, 128], strides = [1, 1, 1]} : vector<2x36x128xf32> to vector<2x32x128xf32>
    %33 = vector.extract_strided_slice %28 {offsets = [0, 4, 0], sizes = [2, 32, 128], strides = [1, 1, 1]} : vector<2x36x128xf32> to vector<2x32x128xf32>
    %34 = tpu.concatenate %29, %30, %31, %32, %33 in 2 : vector<2x32x128xf32>, vector<2x32x128xf32>, vector<2x32x128xf32>, vector<2x32x128xf32>, vector<2x32x128xf32> -> vector<2x32x640xf32>
    %35 = vector.shape_cast %34 : vector<2x32x640xf32> to vector<64x640xf32>
    %c1 = arith.constant 1 : index
    %c0_32 = arith.constant 0 : index
    %c0_33 = arith.constant 0 : index
    %36 = vector.load %arg2[%c1, %c0_32, %c0_33] : memref<5x640x128xf32, #tpu.memory_space<vmem>>, vector<1x640x128xf32>
    %37 = vector.shape_cast %36 : vector<1x640x128xf32> to vector<640x128xf32>
    %cst_34 = arith.constant dense<0.000000e+00> : vector<64x128xf32>
    %38 = tpu.matmul %35, %37, %cst_34 {dimension_numbers = #tpu.dot_dimension_numbers<[1], [0], [0], [1], [0, 0, 1, 1], [], []>} : vector<64x640xf32>, vector<640x128xf32>, vector<64x128xf32> -> vector<64x128xf32>
    %c1_35 = arith.constant 1 : index
    %c0_36 = arith.constant 0 : index
    %c0_37 = arith.constant 0 : index
    %39 = vector.load %arg3[%c1_35, %c0_36, %c0_37] : memref<5x1x128xf32, #tpu.memory_space<vmem>>, vector<1x1x128xf32>
    %40 = vector.shape_cast %39 : vector<1x1x128xf32> to vector<1x128xf32>
    %41 = vector.broadcast %40 : vector<1x128xf32> to vector<64x128xf32>
    %42 = arith.addf %38, %41 : vector<64x128xf32>
    %43 = math.tanh %42 : vector<64x128xf32>
    %44 = vector.shape_cast %43 : vector<64x128xf32> to vector<2x32x128xf32>
    %c0_38 = arith.constant 0 : index
    %c2_39 = arith.constant 2 : index
    %c0_40 = arith.constant 0 : index
    %45 = vector.load %arg5[%c0_38, %c2_39, %c0_40] : memref<2x36x128xf32, #tpu.memory_space<vmem>>, vector<2x32x128xf32>
    tpu.vector_store %arg5[%c0_38, %c2_39, %c0_40], %44 {strides = array<i32>} : memref<2x36x128xf32, #tpu.memory_space<vmem>>, vector<2x32x128xf32>,
    %c0_41 = arith.constant 0 : index
    %c0_42 = arith.constant 0 : index
    %c0_43 = arith.constant 0 : index
    %46 = vector.load %arg5[%c0_41, %c0_42, %c0_43] : memref<2x36x128xf32, #tpu.memory_space<vmem>>, vector<2x36x128xf32>
    %47 = vector.extract_strided_slice %46 {offsets = [0, 0, 0], sizes = [2, 32, 128], strides = [1, 1, 1]} : vector<2x36x128xf32> to vector<2x32x128xf32>
    %48 = vector.extract_strided_slice %46 {offsets = [0, 1, 0], sizes = [2, 32, 128], strides = [1, 1, 1]} : vector<2x36x128xf32> to vector<2x32x128xf32>
    %49 = vector.extract_strided_slice %46 {offsets = [0, 2, 0], sizes = [2, 32, 128], strides = [1, 1, 1]} : vector<2x36x128xf32> to vector<2x32x128xf32>
    %50 = vector.extract_strided_slice %46 {offsets = [0, 3, 0], sizes = [2, 32, 128], strides = [1, 1, 1]} : vector<2x36x128xf32> to vector<2x32x128xf32>
    %51 = vector.extract_strided_slice %46 {offsets = [0, 4, 0], sizes = [2, 32, 128], strides = [1, 1, 1]} : vector<2x36x128xf32> to vector<2x32x128xf32>
    %52 = tpu.concatenate %47, %48, %49, %50, %51 in 2 : vector<2x32x128xf32>, vector<2x32x128xf32>, vector<2x32x128xf32>, vector<2x32x128xf32>, vector<2x32x128xf32> -> vector<2x32x640xf32>
    %53 = vector.shape_cast %52 : vector<2x32x640xf32> to vector<64x640xf32>
    %c2_44 = arith.constant 2 : index
    %c0_45 = arith.constant 0 : index
    %c0_46 = arith.constant 0 : index
    %54 = vector.load %arg2[%c2_44, %c0_45, %c0_46] : memref<5x640x128xf32, #tpu.memory_space<vmem>>, vector<1x640x128xf32>
    %55 = vector.shape_cast %54 : vector<1x640x128xf32> to vector<640x128xf32>
    %cst_47 = arith.constant dense<0.000000e+00> : vector<64x128xf32>
    %56 = tpu.matmul %53, %55, %cst_47 {dimension_numbers = #tpu.dot_dimension_numbers<[1], [0], [0], [1], [0, 0, 1, 1], [], []>} : vector<64x640xf32>, vector<640x128xf32>, vector<64x128xf32> -> vector<64x128xf32>
    %c2_48 = arith.constant 2 : index
    %c0_49 = arith.constant 0 : index
    %c0_50 = arith.constant 0 : index
    %57 = vector.load %arg3[%c2_48, %c0_49, %c0_50] : memref<5x1x128xf32, #tpu.memory_space<vmem>>, vector<1x1x128xf32>
    %58 = vector.shape_cast %57 : vector<1x1x128xf32> to vector<1x128xf32>
    %59 = vector.broadcast %58 : vector<1x128xf32> to vector<64x128xf32>
    %60 = arith.addf %56, %59 : vector<64x128xf32>
    %61 = math.tanh %60 : vector<64x128xf32>
    %62 = vector.shape_cast %61 : vector<64x128xf32> to vector<2x32x128xf32>
    %c0_51 = arith.constant 0 : index
    %c2_52 = arith.constant 2 : index
    %c0_53 = arith.constant 0 : index
    %63 = vector.load %arg6[%c0_51, %c2_52, %c0_53] : memref<2x36x128xf32, #tpu.memory_space<vmem>>, vector<2x32x128xf32>
    tpu.vector_store %arg6[%c0_51, %c2_52, %c0_53], %62 {strides = array<i32>} : memref<2x36x128xf32, #tpu.memory_space<vmem>>, vector<2x32x128xf32>,
    %c0_54 = arith.constant 0 : index
    %c0_55 = arith.constant 0 : index
    %c0_56 = arith.constant 0 : index
    %64 = vector.load %arg6[%c0_54, %c0_55, %c0_56] : memref<2x36x128xf32, #tpu.memory_space<vmem>>, vector<2x36x128xf32>
    %65 = vector.extract_strided_slice %64 {offsets = [0, 0, 0], sizes = [2, 32, 128], strides = [1, 1, 1]} : vector<2x36x128xf32> to vector<2x32x128xf32>
    %66 = vector.extract_strided_slice %64 {offsets = [0, 1, 0], sizes = [2, 32, 128], strides = [1, 1, 1]} : vector<2x36x128xf32> to vector<2x32x128xf32>
    %67 = vector.extract_strided_slice %64 {offsets = [0, 2, 0], sizes = [2, 32, 128], strides = [1, 1, 1]} : vector<2x36x128xf32> to vector<2x32x128xf32>
    %68 = vector.extract_strided_slice %64 {offsets = [0, 3, 0], sizes = [2, 32, 128], strides = [1, 1, 1]} : vector<2x36x128xf32> to vector<2x32x128xf32>
    %69 = vector.extract_strided_slice %64 {offsets = [0, 4, 0], sizes = [2, 32, 128], strides = [1, 1, 1]} : vector<2x36x128xf32> to vector<2x32x128xf32>
    %70 = tpu.concatenate %65, %66, %67, %68, %69 in 2 : vector<2x32x128xf32>, vector<2x32x128xf32>, vector<2x32x128xf32>, vector<2x32x128xf32>, vector<2x32x128xf32> -> vector<2x32x640xf32>
    %71 = vector.shape_cast %70 : vector<2x32x640xf32> to vector<64x640xf32>
    %c3 = arith.constant 3 : index
    %c0_57 = arith.constant 0 : index
    %c0_58 = arith.constant 0 : index
    %72 = vector.load %arg2[%c3, %c0_57, %c0_58] : memref<5x640x128xf32, #tpu.memory_space<vmem>>, vector<1x640x128xf32>
    %73 = vector.shape_cast %72 : vector<1x640x128xf32> to vector<640x128xf32>
    %cst_59 = arith.constant dense<0.000000e+00> : vector<64x128xf32>
    %74 = tpu.matmul %71, %73, %cst_59 {dimension_numbers = #tpu.dot_dimension_numbers<[1], [0], [0], [1], [0, 0, 1, 1], [], []>} : vector<64x640xf32>, vector<640x128xf32>, vector<64x128xf32> -> vector<64x128xf32>
    %c3_60 = arith.constant 3 : index
    %c0_61 = arith.constant 0 : index
    %c0_62 = arith.constant 0 : index
    %75 = vector.load %arg3[%c3_60, %c0_61, %c0_62] : memref<5x1x128xf32, #tpu.memory_space<vmem>>, vector<1x1x128xf32>
    %76 = vector.shape_cast %75 : vector<1x1x128xf32> to vector<1x128xf32>
    %77 = vector.broadcast %76 : vector<1x128xf32> to vector<64x128xf32>
    %78 = arith.addf %74, %77 : vector<64x128xf32>
    %79 = math.tanh %78 : vector<64x128xf32>
    %80 = vector.shape_cast %79 : vector<64x128xf32> to vector<2x32x128xf32>
    %c0_63 = arith.constant 0 : index
    %c2_64 = arith.constant 2 : index
    %c0_65 = arith.constant 0 : index
    %81 = vector.load %arg5[%c0_63, %c2_64, %c0_65] : memref<2x36x128xf32, #tpu.memory_space<vmem>>, vector<2x32x128xf32>
    tpu.vector_store %arg5[%c0_63, %c2_64, %c0_65], %80 {strides = array<i32>} : memref<2x36x128xf32, #tpu.memory_space<vmem>>, vector<2x32x128xf32>,
    %c0_66 = arith.constant 0 : index
    %c0_67 = arith.constant 0 : index
    %c0_68 = arith.constant 0 : index
    %82 = vector.load %arg5[%c0_66, %c0_67, %c0_68] : memref<2x36x128xf32, #tpu.memory_space<vmem>>, vector<2x36x128xf32>
    %83 = vector.extract_strided_slice %82 {offsets = [0, 0, 0], sizes = [2, 32, 128], strides = [1, 1, 1]} : vector<2x36x128xf32> to vector<2x32x128xf32>
    %84 = vector.extract_strided_slice %82 {offsets = [0, 1, 0], sizes = [2, 32, 128], strides = [1, 1, 1]} : vector<2x36x128xf32> to vector<2x32x128xf32>
    %85 = vector.extract_strided_slice %82 {offsets = [0, 2, 0], sizes = [2, 32, 128], strides = [1, 1, 1]} : vector<2x36x128xf32> to vector<2x32x128xf32>
    %86 = vector.extract_strided_slice %82 {offsets = [0, 3, 0], sizes = [2, 32, 128], strides = [1, 1, 1]} : vector<2x36x128xf32> to vector<2x32x128xf32>
    %87 = vector.extract_strided_slice %82 {offsets = [0, 4, 0], sizes = [2, 32, 128], strides = [1, 1, 1]} : vector<2x36x128xf32> to vector<2x32x128xf32>
    %88 = tpu.concatenate %83, %84, %85, %86, %87 in 2 : vector<2x32x128xf32>, vector<2x32x128xf32>, vector<2x32x128xf32>, vector<2x32x128xf32>, vector<2x32x128xf32> -> vector<2x32x640xf32>
    %89 = vector.shape_cast %88 : vector<2x32x640xf32> to vector<64x640xf32>
    %c4 = arith.constant 4 : index
    %c0_69 = arith.constant 0 : index
    %c0_70 = arith.constant 0 : index
    %90 = vector.load %arg2[%c4, %c0_69, %c0_70] : memref<5x640x128xf32, #tpu.memory_space<vmem>>, vector<1x640x128xf32>
    %91 = vector.shape_cast %90 : vector<1x640x128xf32> to vector<640x128xf32>
    %cst_71 = arith.constant dense<0.000000e+00> : vector<64x128xf32>
    %92 = tpu.matmul %89, %91, %cst_71 {dimension_numbers = #tpu.dot_dimension_numbers<[1], [0], [0], [1], [0, 0, 1, 1], [], []>} : vector<64x640xf32>, vector<640x128xf32>, vector<64x128xf32> -> vector<64x128xf32>
    %c4_72 = arith.constant 4 : index
    %c0_73 = arith.constant 0 : index
    %c0_74 = arith.constant 0 : index
    %93 = vector.load %arg3[%c4_72, %c0_73, %c0_74] : memref<5x1x128xf32, #tpu.memory_space<vmem>>, vector<1x1x128xf32>
    %94 = vector.shape_cast %93 : vector<1x1x128xf32> to vector<1x128xf32>
    %95 = vector.broadcast %94 : vector<1x128xf32> to vector<64x128xf32>
    %96 = arith.addf %92, %95 : vector<64x128xf32>
    %97 = math.tanh %96 : vector<64x128xf32>
    %98 = vector.shape_cast %97 : vector<64x128xf32> to vector<2x32x128xf32>
    %99 = vector.extract_strided_slice %98 {offsets = [0, 0, 0], sizes = [2, 32, 16], strides = [1, 1, 1]} : vector<2x32x128xf32> to vector<2x32x16xf32>
    %100 = tpu.transpose %99, [0, 2, 1] : vector<2x32x16xf32> -> vector<2x16x32xf32>
    %c0_75 = arith.constant 0 : index
    %c0_76 = arith.constant 0 : index
    %c0_77 = arith.constant 0 : index
    %101 = vector.load %arg4[%c0_75, %c0_76, %c0_77] : memref<2x16x32xf32, #tpu.memory_space<vmem>>, vector<2x16x32xf32>
    tpu.vector_store %arg4[%c0_75, %c0_76, %c0_77], %100 {strides = array<i32>} : memref<2x16x32xf32, #tpu.memory_space<vmem>>, vector<2x16x32xf32>,
    return
  }
  func.func @transform_0(%arg0: i32) -> (i32, i32, i32) {
    %c0_i32 = arith.constant 0 : i32
    %c0_i32_0 = arith.constant 0 : i32
    %c0_i32_1 = arith.constant 0 : i32
    %c0_i32_2 = arith.constant 0 : i32
    return %c0_i32, %c0_i32_0, %c0_i32_1 : i32, i32, i32
  }
  func.func @transform_1(%arg0: i32) -> (i32, i32, i32) {
    %c0_i32 = arith.constant 0 : i32
    %c0_i32_0 = arith.constant 0 : i32
    %c0_i32_1 = arith.constant 0 : i32
    %c0_i32_2 = arith.constant 0 : i32
    return %c0_i32, %c0_i32_0, %c0_i32_1 : i32, i32, i32
  }
  func.func @transform_2(%arg0: i32) -> (i32, i32, i32) {
    %c0_i32 = arith.constant 0 : i32
    %c0_i32_0 = arith.constant 0 : i32
    %c0_i32_1 = arith.constant 0 : i32
    %c0_i32_2 = arith.constant 0 : i32
    return %c0_i32, %c0_i32_0, %c0_i32_1 : i32, i32, i32
  }
  func.func @transform_3(%arg0: i32) -> (i32, i32, i32) {
    %c0_i32 = arith.constant 0 : i32
    %c0_i32_0 = arith.constant 0 : i32
    %c0_i32_1 = arith.constant 0 : i32
    %c0_i32_2 = arith.constant 0 : i32
    return %c0_i32, %c0_i32_0, %c0_i32_1 : i32, i32, i32
  }
}

</mosaic_0001>

<llo_original>
// kernel: postnet_forward.1
$region0: #{postnet_forward.1}
  #allocation0 [shape = 'u32[]', space=smem, size = 0x4, offset = 0x4, fixed_abs, tag = 'smem constant byte address 0x4 - core index']
  #allocation1 [shape = 'u32[144,128]{1,0:T(1,128)}', space=vmem, size = 0x12000, scoped, tag = 'internal scratch']
  #allocation2 [shape = 'f32[2,36,128]{2,1,0:T(8,128)}', space=vmem, size = 0xa000, scoped, tag = 'scratch operand']
  #allocation3 [shape = 'f32[2,36,128]{2,1,0:T(8,128)}', space=vmem, size = 0xa000, scoped, tag = 'scratch operand']
  %s0 = inlined_call_operand.hbm [shape: f32[2,16,32], index: 0, kind: input, shape index: {}]
  %s1 = inlined_call_operand.hbm [shape: f32[5,640,128], index: 1, kind: input, shape index: {}]
  %s2 = inlined_call_operand.hbm [shape: f32[5,1,128], index: 2, kind: input, shape index: {}]
  %s3 = inlined_call_operand.hbm [shape: f32[2,16,32], index: 3, kind: output, shape index: {}]
  %s4 = sld [smem:[#allocation0]]
  $region34: #{postnet_forward.1} parent=0
    _
  %s6 = ssub.s32 1, %s4
  %s7 = scalar_select 0, %s6, %s4
  $region1: #{postnet_forward.1} parent=0
    #allocation4 [shape = 'u8[16384]{0}', space=vmem, size = 0x4000, scoped, tag = 'input window, operand 0, single buffered']
    #allocation5 [shape = 's32[1]{0}', space=sflag, size = 0x4, scoped, tag = 'scoped memory for postnet_forward.1']
    #allocation6 [shape = 's32[1]{0}', space=sflag, size = 0x4, scoped, tag = 'scoped memory for postnet_forward.1']
    #allocation7 [shape = 'u8[1638400]{0}', space=vmem, size = 0x190000, scoped, tag = 'input window, operand 1, single buffered']
    #allocation8 [shape = 's32[1]{0}', space=sflag, size = 0x4, scoped, tag = 'scoped memory for postnet_forward.1']
    #allocation9 [shape = 'u8[2560]{0}', space=vmem, size = 0xc00, scoped, tag = 'input window, operand 2, single buffered']
    #allocation10 [shape = 'u8[16384]{0}', space=vmem, size = 0x4000, scoped, tag = 'output window, operand 0, single buffered']
    %8 = vsyncpa [#allocation5], 0
    %9 = vsyncpa [#allocation8], 0
    %10 = vsyncpa [#allocation6], 0
    // Predicated region
    $region2: #{postnet_forward.1} parent=1 // pred_check
      _
    $region3: #{postnet_forward.1} parent=1 // pred_check_branch
      %12 = sbr.rel (0) target = $region5
    $region4: #{postnet_forward.1} parent=1 // pred_region
      %s14 = ssub.s32 512, 512
      %15 = vsyncadd [#allocation5], %s14
      %s16 = sshll.u32 [#allocation4], 4
      %s17 = int_to_ptr.vmem [resolvable:$true] %s16
      %22 = dma.hbm_to_vmem [thread:$0]  %s0, 512, %s17, [#allocation5], 128, 128, 8
    $region5: #{postnet_forward.1} parent=1 // pred_fallthru
      _
    // Predicated region
    $region6: #{postnet_forward.1} parent=1 // pred_check
      _
    $region7: #{postnet_forward.1} parent=1 // pred_check_branch
      %24 = sbr.rel (0) target = $region9
    $region8: #{postnet_forward.1} parent=1 // pred_region
      %s26 = ssub.s32 51200, 51200
      %27 = vsyncadd [#allocation8], %s26
      %s28 = sshll.u32 [#allocation7], 4
      %s29 = int_to_ptr.vmem [resolvable:$true] %s28
      %34 = dma.hbm_to_vmem [thread:$0]  %s1, 51200, %s29, [#allocation8], 128, 128, 8
    $region9: #{postnet_forward.1} parent=1 // pred_fallthru
      _
    // Predicated region
    $region10: #{postnet_forward.1} parent=1 // pred_check
      _
    $region11: #{postnet_forward.1} parent=1 // pred_check_branch
      %36 = sbr.rel (0) target = $region13
    $region12: #{postnet_forward.1} parent=1 // pred_region
      %s38 = ssub.s32 80, 80
      %39 = vsyncadd [#allocation8], %s38
      %s40 = sshll.u32 [#allocation9], 4
      %s41 = int_to_ptr.vmem [resolvable:$true] %s40
      %46 = dma.hbm_to_vmem [thread:$0]  %s2, 80, %s41, [#allocation8], 16, 16, 1
    $region13: #{postnet_forward.1} parent=1 // pred_fallthru
      _
    // Predicated region
    $region14: #{postnet_forward.1} parent=1 // pred_check
      _
    $region15: #{postnet_forward.1} parent=1 // pred_check_branch
      %48 = sbr.rel (0) target = $region17
    $region16: #{postnet_forward.1} parent=1 // pred_region
      %49 = dma.done [#allocation5], 512
    $region17: #{postnet_forward.1} parent=1 // pred_fallthru
      _
    // Predicated region
    $region18: #{postnet_forward.1} parent=1 // pred_check
      _
    $region19: #{postnet_forward.1} parent=1 // pred_check_branch
      %51 = sbr.rel (0) target = $region21
    $region20: #{postnet_forward.1} parent=1 // pred_region
      %52 = dma.done [#allocation8], 51200
    $region21: #{postnet_forward.1} parent=1 // pred_fallthru
      _
    // Predicated region
    $region22: #{postnet_forward.1} parent=1 // pred_check
      _
    $region23: #{postnet_forward.1} parent=1 // pred_check_branch
      %54 = sbr.rel (0) target = $region25
    $region24: #{postnet_forward.1} parent=1 // pred_region
      %55 = dma.done [#allocation8], 80
    $region25: #{postnet_forward.1} parent=1 // pred_fallthru
      _
    %56 = vst [vmem:[#allocation2] sm:$0x3] 0.0
    %57 = vst [vmem:[#allocation2 + $0x28] sm:$0x3] 0.0
    %58 = vst [vmem:[#allocation2 + $0x22] sm:$0x3] 0.0
    %59 = vst [vmem:[#allocation2 + $0x4a] sm:$0x3] 0.0
    %60 = vst [vmem:[#allocation3] sm:$0x3] 0.0
    %61 = vst [vmem:[#allocation3 + $0x28] sm:$0x3] 0.0
    %62 = vst [vmem:[#allocation3 + $0x22] sm:$0x3] 0.0
    %63 = vst [vmem:[#allocation3 + $0x4a] sm:$0x3] 0.0
    %v64 = vld [vmem:[#allocation4] sm:$0xff]
    %v65 = vld [vmem:[#allocation4 + $0x8] sm:$0xff]
    %v66 = vld [vmem:[#allocation4 + $0x10] sm:$0xff]
    %v67 = vld [vmem:[#allocation4 + $0x18] sm:$0xff]
    %68 = vxpose.xlu0.b32.start [1/16] %v64, 128
    %69 = vxpose.xlu0.b32.cont [2/16] %v65, 128
    %70 = vxpose.xlu0.b32.cont [3/16] 0.0, 128
    %71 = vxpose.xlu0.b32.cont [4/16] 0.0, 128
    %72 = vxpose.xlu0.b32.cont [5/16] 0.0, 128
    %73 = vxpose.xlu0.b32.cont [6/16] 0.0, 128
    %74 = vxpose.xlu0.b32.cont [7/16] 0.0, 128
    %75 = vxpose.xlu0.b32.cont [8/16] 0.0, 128
    %76 = vxpose.xlu0.b32.cont [9/16] 0.0, 128
    %77 = vxpose.xlu0.b32.cont [10/16] 0.0, 128
    %78 = vxpose.xlu0.b32.cont [11/16] 0.0, 128
    %79 = vxpose.xlu0.b32.cont [12/16] 0.0, 128
    %80 = vxpose.xlu0.b32.cont [13/16] 0.0, 128
    %81 = vxpose.xlu0.b32.cont [14/16] 0.0, 128
    %82 = vxpose.xlu0.b32.cont [15/16] 0.0, 128
    %83 = vxpose.xlu0.b32.end [16/16] 0.0, 128
    %v84 = vpop.trf.xlu0
    %v85 = vpop.trf.xlu0
    %v86 = vpop.trf.xlu0
    %v87 = vpop.trf.xlu0
    %v88 = vpop.trf.xlu0
    %v89 = vpop.trf.xlu0
    %v90 = vpop.trf.xlu0
    %v91 = vpop.trf.xlu0
    %v92 = vpop.trf.xlu0
    %v93 = vpop.trf.xlu0
    %v94 = vpop.trf.xlu0
    %v95 = vpop.trf.xlu0
    %v96 = vpop.trf.xlu0
    %v97 = vpop.trf.xlu0
    %v98 = vpop.trf.xlu0
    %v99 = vpop.trf.xlu0
    %100 = vxpose.xlu0.b32.start [1/16] %v66, 128
    %101 = vxpose.xlu0.b32.cont [2/16] %v67, 128
    %102 = vxpose.xlu0.b32.cont [3/16] 0.0, 128
    %103 = vxpose.xlu0.b32.cont [4/16] 0.0, 128
    %104 = vxpose.xlu0.b32.cont [5/16] 0.0, 128
    %105 = vxpose.xlu0.b32.cont [6/16] 0.0, 128
    %106 = vxpose.xlu0.b32.cont [7/16] 0.0, 128
    %107 = vxpose.xlu0.b32.cont [8/16] 0.0, 128
    %108 = vxpose.xlu0.b32.cont [9/16] 0.0, 128
    %109 = vxpose.xlu0.b32.cont [10/16] 0.0, 128
    %110 = vxpose.xlu0.b32.cont [11/16] 0.0, 128
    %111 = vxpose.xlu0.b32.cont [12/16] 0.0, 128
    %112 = vxpose.xlu0.b32.cont [13/16] 0.0, 128
    %113 = vxpose.xlu0.b32.cont [14/16] 0.0, 128
    %114 = vxpose.xlu0.b32.cont [15/16] 0.0, 128
    %115 = vxpose.xlu0.b32.end [16/16] 0.0, 128
    %v116 = vpop.trf.xlu0
    %v117 = vpop.trf.xlu0
    %v118 = vpop.trf.xlu0
    %v119 = vpop.trf.xlu0
    %v120 = vpop.trf.xlu0
    %v121 = vpop.trf.xlu0
    %v122 = vpop.trf.xlu0
    %v123 = vpop.trf.xlu0
    %v124 = vpop.trf.xlu0
    %v125 = vpop.trf.xlu0
    %v126 = vpop.trf.xlu0
    %v127 = vpop.trf.xlu0
    %v128 = vpop.trf.xlu0
    %v129 = vpop.trf.xlu0
    %v130 = vpop.trf.xlu0
    %v131 = vpop.trf.xlu0
    %132 = vst [vmem:[#allocation2 + $0x2] sm:$0xff] %v84
    %133 = vst [vmem:[#allocation2 + $0xa] sm:$0xff] %v85
    %134 = vst [vmem:[#allocation2 + $0x12] sm:$0xff] %v86
    %135 = vst [vmem:[#allocation2 + $0x1a] sm:$0xff] %v87
    %136 = vst [vmem:[#allocation2 + $0x2a] sm:$0xff] %v116
    %137 = vst [vmem:[#allocation2 + $0x32] sm:$0xff] %v117
    %138 = vst [vmem:[#allocation2 + $0x3a] sm:$0xff] %v118
    %139 = vst [vmem:[#allocation2 + $0x42] sm:$0xff] %v119
    %v140 = vld [vmem:[#allocation2] sm:$0xff]
    %v141 = vld [vmem:[#allocation2 + $0x8] sm:$0xff]
    %v142 = vld [vmem:[#allocation2 + $0x10] sm:$0xff]
    %v143 = vld [vmem:[#allocation2 + $0x18] sm:$0xff]
    %v144 = vld [vmem:[#allocation2 + $0x20] sm:$0xf]
    %v145 = vld [vmem:[#allocation2 + $0x28] sm:$0xff]
    %v146 = vld [vmem:[#allocation2 + $0x30] sm:$0xff]
    %v147 = vld [vmem:[#allocation2 + $0x38] sm:$0xff]
    %v148 = vld [vmem:[#allocation2 + $0x40] sm:$0xff]
    %v149 = vld [vmem:[#allocation2 + $0x48] sm:$0xf]
    %vm160 = vcmask 1046528
    %v161 = vrot.slane %v140, 1
    %v162 = vrot.slane %v141, 1
    %v163 = vsel %vm160, %v161, %v162
    %v164 = vrot.slane %v142, 1
    %v165 = vsel %vm160, %v162, %v164
    %v166 = vrot.slane %v143, 1
    %v167 = vsel %vm160, %v164, %v166
    %v168 = vrot.slane %v144, 1
    %v169 = vsel %vm160, %v166, %v168
    %v170 = vrot.slane %v145, 1
    %v171 = vrot.slane %v146, 1
    %v172 = vsel %vm160, %v170, %v171
    %v173 = vrot.slane %v147, 1
    %v174 = vsel %vm160, %v171, %v173
    %v175 = vrot.slane %v148, 1
    %v176 = vsel %vm160, %v173, %v175
    %v177 = vrot.slane %v149, 1
    %v178 = vsel %vm160, %v175, %v177
    %vm187 = vcmask 1045504
    %v188 = vrot.slane %v140, 2
    %v189 = vrot.slane %v141, 2
    %v190 = vsel %vm187, %v188, %v189
    %v191 = vrot.slane %v142, 2
    %v192 = vsel %vm187, %v189, %v191
    %v193 = vrot.slane %v143, 2
    %v194 = vsel %vm187, %v191, %v193
    %v195 = vrot.slane %v144, 2
    %v196 = vsel %vm187, %v193, %v195
    %v197 = vrot.slane %v145, 2
    %v198 = vrot.slane %v146, 2
    %v199 = vsel %vm187, %v197, %v198
    %v200 = vrot.slane %v147, 2
    %v201 = vsel %vm187, %v198, %v200
    %v202 = vrot.slane %v148, 2
    %v203 = vsel %vm187, %v200, %v202
    %v204 = vrot.slane %v149, 2
    %v205 = vsel %vm187, %v202, %v204
    %vm214 = vcmask 1044480
    %v215 = vrot.slane %v140, 3
    %v216 = vrot.slane %v141, 3
    %v217 = vsel %vm214, %v215, %v216
    %v218 = vrot.slane %v142, 3
    %v219 = vsel %vm214, %v216, %v218
    %v220 = vrot.slane %v143, 3
    %v221 = vsel %vm214, %v218, %v220
    %v222 = vrot.slane %v144, 3
    %v223 = vsel %vm214, %v220, %v222
    %v224 = vrot.slane %v145, 3
    %v225 = vrot.slane %v146, 3
    %v226 = vsel %vm214, %v224, %v225
    %v227 = vrot.slane %v147, 3
    %v228 = vsel %vm214, %v225, %v227
    %v229 = vrot.slane %v148, 3
    %v230 = vsel %vm214, %v227, %v229
    %v231 = vrot.slane %v149, 3
    %v232 = vsel %vm214, %v229, %v231
    %vm241 = vcmask 1043456
    %v242 = vrot.slane %v140, 4
    %v243 = vrot.slane %v141, 4
    %v244 = vsel %vm241, %v242, %v243
    %v245 = vrot.slane %v142, 4
    %v246 = vsel %vm241, %v243, %v245
    %v247 = vrot.slane %v143, 4
    %v248 = vsel %vm241, %v245, %v247
    %v249 = vrot.slane %v144, 4
    %v250 = vsel %vm241, %v247, %v249
    %v251 = vrot.slane %v145, 4
    %v252 = vrot.slane %v146, 4
    %v253 = vsel %vm241, %v251, %v252
    %v254 = vrot.slane %v147, 4
    %v255 = vsel %vm241, %v252, %v254
    %v256 = vrot.slane %v148, 4
    %v257 = vsel %vm241, %v254, %v256
    %v258 = vrot.slane %v149, 4
    %v259 = vsel %vm241, %v256, %v258
    %v268 = vld [vmem:[#allocation7] sm:$0xff]
    %v269 = vld [vmem:[#allocation7 + $0x8] sm:$0xff]
    %v270 = vld [vmem:[#allocation7 + $0x10] sm:$0xff]
    %v271 = vld [vmem:[#allocation7 + $0x18] sm:$0xff]
    %v272 = vld [vmem:[#allocation7 + $0x20] sm:$0xff]
    %v273 = vld [vmem:[#allocation7 + $0x28] sm:$0xff]
    %v274 = vld [vmem:[#allocation7 + $0x30] sm:$0xff]
    %v275 = vld [vmem:[#allocation7 + $0x38] sm:$0xff]
    %v276 = vld [vmem:[#allocation7 + $0x40] sm:$0xff]
    %v277 = vld [vmem:[#allocation7 + $0x48] sm:$0xff]
    %v278 = vld [vmem:[#allocation7 + $0x50] sm:$0xff]
    %v279 = vld [vmem:[#allocation7 + $0x58] sm:$0xff]
    %v280 = vld [vmem:[#allocation7 + $0x60] sm:$0xff]
    %v281 = vld [vmem:[#allocation7 + $0x68] sm:$0xff]
    %v282 = vld [vmem:[#allocation7 + $0x70] sm:$0xff]
    %v283 = vld [vmem:[#allocation7 + $0x78] sm:$0xff]
    %v284 = vld [vmem:[#allocation7 + $0x80] sm:$0xff]
    %v285 = vld [vmem:[#allocation7 + $0x88] sm:$0xff]
    %v286 = vld [vmem:[#allocation7 + $0x90] sm:$0xff]
    %v287 = vld [vmem:[#allocation7 + $0x98] sm:$0xff]
    %v288 = vld [vmem:[#allocation7 + $0xa0] sm:$0xff]
    %v289 = vld [vmem:[#allocation7 + $0xa8] sm:$0xff]
    %v290 = vld [vmem:[#allocation7 + $0xb0] sm:$0xff]
    %v291 = vld [vmem:[#allocation7 + $0xb8] sm:$0xff]
    %v292 = vld [vmem:[#allocation7 + $0xc0] sm:$0xff]
    %v293 = vld [vmem:[#allocation7 + $0xc8] sm:$0xff]
    %v294 = vld [vmem:[#allocation7 + $0xd0] sm:$0xff]
    %v295 = vld [vmem:[#allocation7 + $0xd8] sm:$0xff]
    %v296 = vld [vmem:[#allocation7 + $0xe0] sm:$0xff]
    %v297 = vld [vmem:[#allocation7 + $0xe8] sm:$0xff]
    %v298 = vld [vmem:[#allocation7 + $0xf0] sm:$0xff]
    %v299 = vld [vmem:[#allocation7 + $0xf8] sm:$0xff]
    %v300 = vld [vmem:[#allocation7 + $0x100] sm:$0xff]
    %v301 = vld [vmem:[#allocation7 + $0x108] sm:$0xff]
    %v302 = vld [vmem:[#allocation7 + $0x110] sm:$0xff]
    %v303 = vld [vmem:[#allocation7 + $0x118] sm:$0xff]
    %v304 = vld [vmem:[#allocation7 + $0x120] sm:$0xff]
    %v305 = vld [vmem:[#allocation7 + $0x128] sm:$0xff]
    %v306 = vld [vmem:[#allocation7 + $0x130] sm:$0xff]
    %v307 = vld [vmem:[#allocation7 + $0x138] sm:$0xff]
    %v308 = vld [vmem:[#allocation7 + $0x140] sm:$0xff]
    %v309 = vld [vmem:[#allocation7 + $0x148] sm:$0xff]
    %v310 = vld [vmem:[#allocation7 + $0x150] sm:$0xff]
    %v311 = vld [vmem:[#allocation7 + $0x158] sm:$0xff]
    %v312 = vld [vmem:[#allocation7 + $0x160] sm:$0xff]
    %v313 = vld [vmem:[#allocation7 + $0x168] sm:$0xff]
    %v314 = vld [vmem:[#allocation7 + $0x170] sm:$0xff]
    %v315 = vld [vmem:[#allocation7 + $0x178] sm:$0xff]
    %v316 = vld [vmem:[#allocation7 + $0x180] sm:$0xff]
    %v317 = vld [vmem:[#allocation7 + $0x188] sm:$0xff]
    %v318 = vld [vmem:[#allocation7 + $0x190] sm:$0xff]
    %v319 = vld [vmem:[#allocation7 + $0x198] sm:$0xff]
    %v320 = vld [vmem:[#allocation7 + $0x1a0] sm:$0xff]
    %v321 = vld [vmem:[#allocation7 + $0x1a8] sm:$0xff]
    %v322 = vld [vmem:[#allocation7 + $0x1b0] sm:$0xff]
    %v323 = vld [vmem:[#allocation7 + $0x1b8] sm:$0xff]
    %v324 = vld [vmem:[#allocation7 + $0x1c0] sm:$0xff]
    %v325 = vld [vmem:[#allocation7 + $0x1c8] sm:$0xff]
    %v326 = vld [vmem:[#allocation7 + $0x1d0] sm:$0xff]
    %v327 = vld [vmem:[#allocation7 + $0x1d8] sm:$0xff]
    %v328 = vld [vmem:[#allocation7 + $0x1e0] sm:$0xff]
    %v329 = vld [vmem:[#allocation7 + $0x1e8] sm:$0xff]
    %v330 = vld [vmem:[#allocation7 + $0x1f0] sm:$0xff]
    %v331 = vld [vmem:[#allocation7 + $0x1f8] sm:$0xff]
    %v332 = vld [vmem:[#allocation7 + $0x200] sm:$0xff]
    %v333 = vld [vmem:[#allocation7 + $0x208] sm:$0xff]
    %v334 = vld [vmem:[#allocation7 + $0x210] sm:$0xff]
    %v335 = vld [vmem:[#allocation7 + $0x218] sm:$0xff]
    %v336 = vld [vmem:[#allocation7 + $0x220] sm:$0xff]
    %v337 = vld [vmem:[#allocation7 + $0x228] sm:$0xff]
    %v338 = vld [vmem:[#allocation7 + $0x230] sm:$0xff]
    %v339 = vld [vmem:[#allocation7 + $0x238] sm:$0xff]
    %v340 = vld [vmem:[#allocation7 + $0x240] sm:$0xff]
    %v341 = vld [vmem:[#allocation7 + $0x248] sm:$0xff]
    %v342 = vld [vmem:[#allocation7 + $0x250] sm:$0xff]
    %v343 = vld [vmem:[#allocation7 + $0x258] sm:$0xff]
    %v344 = vld [vmem:[#allocation7 + $0x260] sm:$0xff]
    %v345 = vld [vmem:[#allocation7 + $0x268] sm:$0xff]
    %v346 = vld [vmem:[#allocation7 + $0x270] sm:$0xff]
    %v347 = vld [vmem:[#allocation7 + $0x278] sm:$0xff]
    %v348 = vld [vmem:[#allocation9] sm:$0x1]
    %v350 = vlaneseq
    %v351 = vshrl.u32 %v350, 7
    %v352 = vsub.s32 0, %v351
    %v353 = vrot.slane %v348, %v352
    %355 = vmatprep.subr.mxu0 0.0
    %356 = vmatpush1.msra.mxu0 %v283
    %357 = vmatprep.subr.mxu0 0.0
    %358 = vmatpush1.msra.mxu0 %v282
    %359 = vmatprep.subr.mxu0 0.0
    %360 = vmatpush1.msra.mxu0 %v281
    %361 = vmatprep.subr.mxu0 0.0
    %362 = vmatpush1.msra.mxu0 %v280
    %363 = vmatprep.subr.mxu0 0.0
    %364 = vmatpush1.msra.mxu0 %v279
    %365 = vmatprep.subr.mxu0 0.0
    %366 = vmatpush1.msra.mxu0 %v278
    %367 = vmatprep.subr.mxu0 0.0
    %368 = vmatpush1.msra.mxu0 %v277
    %369 = vmatprep.subr.mxu0 0.0
    %370 = vmatpush1.msra.mxu0 %v276
    %371 = vmatprep.subr.mxu0 0.0
    %372 = vmatpush1.msra.mxu0 %v275
    %373 = vmatprep.subr.mxu0 0.0
    %374 = vmatpush1.msra.mxu0 %v274
    %375 = vmatprep.subr.mxu0 0.0
    %376 = vmatpush1.msra.mxu0 %v273
    %377 = vmatprep.subr.mxu0 0.0
    %378 = vmatpush1.msra.mxu0 %v272
    %379 = vmatprep.subr.mxu0 0.0
    %380 = vmatpush1.msra.mxu0 %v271
    %381 = vmatprep.subr.mxu0 0.0
    %382 = vmatpush1.msra.mxu0 %v270
    %383 = vmatprep.subr.mxu0 0.0
    %384 = vmatpush1.msra.mxu0 %v269
    %385 = vmatprep.subr.mxu0 0.0
    %386 = vmatpush1.msra.mxu0 %v268
    %387 = vmatprep.subr.mxu0 0.0
    %388 = vmatpush2.msra.mxu0 %v299
    %389 = vmatprep.subr.mxu0 0.0
    %390 = vmatpush2.msra.mxu0 %v298
    %391 = vmatprep.subr.mxu0 0.0
    %392 = vmatpush2.msra.mxu0 %v297
    %393 = vmatprep.subr.mxu0 0.0
    %394 = vmatpush2.msra.mxu0 %v296
    %395 = vmatprep.subr.mxu0 0.0
    %396 = vmatpush2.msra.mxu0 %v295
    %397 = vmatprep.subr.mxu0 0.0
    %398 = vmatpush2.msra.mxu0 %v294
    %399 = vmatprep.subr.mxu0 0.0
    %400 = vmatpush2.msra.mxu0 %v293
    %401 = vmatprep.subr.mxu0 0.0
    %402 = vmatpush2.msra.mxu0 %v292
    %403 = vmatprep.subr.mxu0 0.0
    %404 = vmatpush2.msra.mxu0 %v291
    %405 = vmatprep.subr.mxu0 0.0
    %406 = vmatpush2.msra.mxu0 %v290
    %407 = vmatprep.subr.mxu0 0.0
    %408 = vmatpush2.msra.mxu0 %v289
    %409 = vmatprep.subr.mxu0 0.0
    %410 = vmatpush2.msra.mxu0 %v288
    %411 = vmatprep.subr.mxu0 0.0
    %412 = vmatpush2.msra.mxu0 %v287
    %413 = vmatprep.subr.mxu0 0.0
    %414 = vmatpush2.msra.mxu0 %v286
    %415 = vmatprep.subr.mxu0 0.0
    %416 = vmatpush2.msra.mxu0 %v285
    %417 = vmatprep.subr.mxu0 0.0
    %418 = vmatpush2.msra.mxu0 %v284
    %419 = vmatprep.mubr.f32.mxu0 %v163
    %420 = vmatmul.mubr.f32.gmra.mxu0 %v140
    %v421 = vpop.f32.mrf.mxu0
    %v422 = vadd.f32 %v353, %v421
    %v423 = vpop.f32.mrf.mxu0
    %424 = vmatprep.mubr.f32.mxu0 %v165
    %425 = vmatmul.mubr.f32.gmra.mxu0 %v141
    %v426 = vpop.f32.mrf.mxu0
    %v427 = vadd.f32 %v353, %v426
    %v428 = vpop.f32.mrf.mxu0
    %429 = vmatprep.mubr.f32.mxu0 %v167
    %430 = vmatmul.mubr.f32.gmra.mxu0 %v142
    %v431 = vpop.f32.mrf.mxu0
    %v432 = vadd.f32 %v353, %v431
    %v433 = vpop.f32.mrf.mxu0
    %434 = vmatprep.mubr.f32.mxu0 %v169
    %435 = vmatmul.mubr.f32.gmra.mxu0 %v143
    %v436 = vpop.f32.mrf.mxu0
    %v437 = vadd.f32 %v353, %v436
    %v438 = vpop.f32.mrf.mxu0
    %439 = vmatprep.mubr.f32.mxu0 %v172
    %440 = vmatmul.mubr.f32.gmra.mxu0 %v145
    %v441 = vpop.f32.mrf.mxu0
    %v442 = vadd.f32 %v353, %v441
    %v443 = vpop.f32.mrf.mxu0
    %444 = vmatprep.mubr.f32.mxu0 %v174
    %445 = vmatmul.mubr.f32.gmra.mxu0 %v146
    %v446 = vpop.f32.mrf.mxu0
    %v447 = vadd.f32 %v353, %v446
    %v448 = vpop.f32.mrf.mxu0
    %449 = vmatprep.mubr.f32.mxu0 %v176
    %450 = vmatmul.mubr.f32.gmra.mxu0 %v147
    %v451 = vpop.f32.mrf.mxu0
    %v452 = vadd.f32 %v353, %v451
    %v453 = vpop.f32.mrf.mxu0
    %454 = vmatprep.mubr.f32.mxu0 %v178
    %455 = vmatmul.mubr.f32.gmra.mxu0 %v148
    %v456 = vpop.f32.mrf.mxu0
    %v457 = vadd.f32 %v353, %v456
    %v458 = vpop.f32.mrf.mxu0
    %459 = vdwg.mxu0
    %460 = vmatprep.subr.mxu0 0.0
    %461 = vmatpush1.msra.mxu0 %v315
    %462 = vmatprep.subr.mxu0 0.0
    %463 = vmatpush1.msra.mxu0 %v314
    %464 = vmatprep.subr.mxu0 0.0
    %465 = vmatpush1.msra.mxu0 %v313
    %466 = vmatprep.subr.mxu0 0.0
    %467 = vmatpush1.msra.mxu0 %v312
    %468 = vmatprep.subr.mxu0 0.0
    %469 = vmatpush1.msra.mxu0 %v311
    %470 = vmatprep.subr.mxu0 0.0
    %471 = vmatpush1.msra.mxu0 %v310
    %472 = vmatprep.subr.mxu0 0.0
    %473 = vmatpush1.msra.mxu0 %v309
    %474 = vmatprep.subr.mxu0 0.0
    %475 = vmatpush1.msra.mxu0 %v308
    %476 = vmatprep.subr.mxu0 0.0
    %477 = vmatpush1.msra.mxu0 %v307
    %478 = vmatprep.subr.mxu0 0.0
    %479 = vmatpush1.msra.mxu0 %v306
    %480 = vmatprep.subr.mxu0 0.0
    %481 = vmatpush1.msra.mxu0 %v305
    %482 = vmatprep.subr.mxu0 0.0
    %483 = vmatpush1.msra.mxu0 %v304
    %484 = vmatprep.subr.mxu0 0.0
    %485 = vmatpush1.msra.mxu0 %v303
    %486 = vmatprep.subr.mxu0 0.0
    %487 = vmatpush1.msra.mxu0 %v302
    %488 = vmatprep.subr.mxu0 0.0
    %489 = vmatpush1.msra.mxu0 %v301
    %490 = vmatprep.subr.mxu0 0.0
    %491 = vmatpush1.msra.mxu0 %v300
    %492 = vmatprep.subr.mxu0 0.0
    %493 = vmatpush2.msra.mxu0 %v331
    %494 = vmatprep.subr.mxu0 0.0
    %495 = vmatpush2.msra.mxu0 %v330
    %496 = vmatprep.subr.mxu0 0.0
    %497 = vmatpush2.msra.mxu0 %v329
    %498 = vmatprep.subr.mxu0 0.0
    %499 = vmatpush2.msra.mxu0 %v328
    %500 = vmatprep.subr.mxu0 0.0
    %501 = vmatpush2.msra.mxu0 %v327
    %502 = vmatprep.subr.mxu0 0.0
    %503 = vmatpush2.msra.mxu0 %v326
    %504 = vmatprep.subr.mxu0 0.0
    %505 = vmatpush2.msra.mxu0 %v325
    %506 = vmatprep.subr.mxu0 0.0
    %507 = vmatpush2.msra.mxu0 %v324
    %508 = vmatprep.subr.mxu0 0.0
    %509 = vmatpush2.msra.mxu0 %v323
    %510 = vmatprep.subr.mxu0 0.0
    %511 = vmatpush2.msra.mxu0 %v322
    %512 = vmatprep.subr.mxu0 0.0
    %513 = vmatpush2.msra.mxu0 %v321
    %514 = vmatprep.subr.mxu0 0.0
    %515 = vmatpush2.msra.mxu0 %v320
    %516 = vmatprep.subr.mxu0 0.0
    %517 = vmatpush2.msra.mxu0 %v319
    %518 = vmatprep.subr.mxu0 0.0
    %519 = vmatpush2.msra.mxu0 %v318
    %520 = vmatprep.subr.mxu0 0.0
    %521 = vmatpush2.msra.mxu0 %v317
    %522 = vmatprep.subr.mxu0 0.0
    %523 = vmatpush2.msra.mxu0 %v316
    %524 = vmatprep.mubr.f32.mxu0 %v217
    %525 = vmatmul.mubr.f32.gmra.mxu0 %v190
    %v526 = vpop.f32.mrf.mxu0
    %v527 = vadd.f32 %v422, %v526
    %v528 = vpop.f32.mrf.mxu0
    %529 = vmatprep.mubr.f32.mxu0 %v219
    %530 = vmatmul.mubr.f32.gmra.mxu0 %v192
    %v531 = vpop.f32.mrf.mxu0
    %v532 = vadd.f32 %v427, %v531
    %v533 = vpop.f32.mrf.mxu0
    %534 = vmatprep.mubr.f32.mxu0 %v221
    %535 = vmatmul.mubr.f32.gmra.mxu0 %v194
    %v536 = vpop.f32.mrf.mxu0
    %v537 = vadd.f32 %v432, %v536
    %v538 = vpop.f32.mrf.mxu0
    %539 = vmatprep.mubr.f32.mxu0 %v223
    %540 = vmatmul.mubr.f32.gmra.mxu0 %v196
    %v541 = vpop.f32.mrf.mxu0
    %v542 = vadd.f32 %v437, %v541
    %v543 = vpop.f32.mrf.mxu0
    %544 = vmatprep.mubr.f32.mxu0 %v226
    %545 = vmatmul.mubr.f32.gmra.mxu0 %v199
    %v546 = vpop.f32.mrf.mxu0
    %v547 = vadd.f32 %v442, %v546
    %v548 = vpop.f32.mrf.mxu0
    %549 = vmatprep.mubr.f32.mxu0 %v228
    %550 = vmatmul.mubr.f32.gmra.mxu0 %v201
    %v551 = vpop.f32.mrf.mxu0
    %v552 = vadd.f32 %v447, %v551
    %v553 = vpop.f32.mrf.mxu0
    %554 = vmatprep.mubr.f32.mxu0 %v230
    %555 = vmatmul.mubr.f32.gmra.mxu0 %v203
    %v556 = vpop.f32.mrf.mxu0
    %v557 = vadd.f32 %v452, %v556
    %v558 = vpop.f32.mrf.mxu0
    %559 = vmatprep.mubr.f32.mxu0 %v232
    %560 = vmatmul.mubr.f32.gmra.mxu0 %v205
    %v561 = vpop.f32.mrf.mxu0
    %v562 = vadd.f32 %v457, %v561
    %v563 = vpop.f32.mrf.mxu0
    %564 = vdwg.mxu0
    %565 = vmatprep.subr.mxu0 0.0
    %566 = vmatpush1.msra.mxu0 %v347
    %567 = vmatprep.subr.mxu0 0.0
    %568 = vmatpush1.msra.mxu0 %v346
    %569 = vmatprep.subr.mxu0 0.0
    %570 = vmatpush1.msra.mxu0 %v345
    %571 = vmatprep.subr.mxu0 0.0
    %572 = vmatpush1.msra.mxu0 %v344
    %573 = vmatprep.subr.mxu0 0.0
    %574 = vmatpush1.msra.mxu0 %v343
    %575 = vmatprep.subr.mxu0 0.0
    %576 = vmatpush1.msra.mxu0 %v342
    %577 = vmatprep.subr.mxu0 0.0
    %578 = vmatpush1.msra.mxu0 %v341
    %579 = vmatprep.subr.mxu0 0.0
    %580 = vmatpush1.msra.mxu0 %v340
    %581 = vmatprep.subr.mxu0 0.0
    %582 = vmatpush1.msra.mxu0 %v339
    %583 = vmatprep.subr.mxu0 0.0
    %584 = vmatpush1.msra.mxu0 %v338
    %585 = vmatprep.subr.mxu0 0.0
    %586 = vmatpush1.msra.mxu0 %v337
    %587 = vmatprep.subr.mxu0 0.0
    %588 = vmatpush1.msra.mxu0 %v336
    %589 = vmatprep.subr.mxu0 0.0
    %590 = vmatpush1.msra.mxu0 %v335
    %591 = vmatprep.subr.mxu0 0.0
    %592 = vmatpush1.msra.mxu0 %v334
    %593 = vmatprep.subr.mxu0 0.0
    %594 = vmatpush1.msra.mxu0 %v333
    %595 = vmatprep.subr.mxu0 0.0
    %596 = vmatpush1.msra.mxu0 %v332
    %597 = vmatprep.subr.mxu0 0.0
    %598 = vmatpush2.msra.mxu0 0.0
    %599 = vmatprep.subr.mxu0 0.0
    %600 = vmatpush2.msra.mxu0 0.0
    %601 = vmatprep.subr.mxu0 0.0
    %602 = vmatpush2.msra.mxu0 0.0
    %603 = vmatprep.subr.mxu0 0.0
    %604 = vmatpush2.msra.mxu0 0.0
    %605 = vmatprep.subr.mxu0 0.0
    %606 = vmatpush2.msra.mxu0 0.0
    %607 = vmatprep.subr.mxu0 0.0
    %608 = vmatpush2.msra.mxu0 0.0
    %609 = vmatprep.subr.mxu0 0.0
    %610 = vmatpush2.msra.mxu0 0.0
    %611 = vmatprep.subr.mxu0 0.0
    %612 = vmatpush2.msra.mxu0 0.0
    %613 = vmatprep.subr.mxu0 0.0
    %614 = vmatpush2.msra.mxu0 0.0
    %615 = vmatprep.subr.mxu0 0.0
    %616 = vmatpush2.msra.mxu0 0.0
    %617 = vmatprep.subr.mxu0 0.0
    %618 = vmatpush2.msra.mxu0 0.0
    %619 = vmatprep.subr.mxu0 0.0
    %620 = vmatpush2.msra.mxu0 0.0
    %621 = vmatprep.subr.mxu0 0.0
    %622 = vmatpush2.msra.mxu0 0.0
    %623 = vmatprep.subr.mxu0 0.0
    %624 = vmatpush2.msra.mxu0 0.0
    %625 = vmatprep.subr.mxu0 0.0
    %626 = vmatpush2.msra.mxu0 0.0
    %627 = vmatprep.subr.mxu0 0.0
    %628 = vmatpush2.msra.mxu0 0.0
    %629 = vmatprep.mubr.f32.mxu0 0.0
    %630 = vmatmul.mubr.f32.gmra.mxu0 %v244
    %v631 = vpop.f32.mrf.mxu0
    %v632 = vadd.f32 %v527, %v631
    %v633 = vpop.f32.mrf.mxu0
    %634 = vmatprep.mubr.f32.mxu0 0.0
    %635 = vmatmul.mubr.f32.gmra.mxu0 %v246
    %v636 = vpop.f32.mrf.mxu0
    %v637 = vadd.f32 %v532, %v636
    %v638 = vpop.f32.mrf.mxu0
    %639 = vmatprep.mubr.f32.mxu0 0.0
    %640 = vmatmul.mubr.f32.gmra.mxu0 %v248
    %v641 = vpop.f32.mrf.mxu0
    %v642 = vadd.f32 %v537, %v641
    %v643 = vpop.f32.mrf.mxu0
    %644 = vmatprep.mubr.f32.mxu0 0.0
    %645 = vmatmul.mubr.f32.gmra.mxu0 %v250
    %v646 = vpop.f32.mrf.mxu0
    %v647 = vadd.f32 %v542, %v646
    %v648 = vpop.f32.mrf.mxu0
    %649 = vmatprep.mubr.f32.mxu0 0.0
    %650 = vmatmul.mubr.f32.gmra.mxu0 %v253
    %v651 = vpop.f32.mrf.mxu0
    %v652 = vadd.f32 %v547, %v651
    %v653 = vpop.f32.mrf.mxu0
    %654 = vmatprep.mubr.f32.mxu0 0.0
    %655 = vmatmul.mubr.f32.gmra.mxu0 %v255
    %v656 = vpop.f32.mrf.mxu0
    %v657 = vadd.f32 %v552, %v656
    %v658 = vpop.f32.mrf.mxu0
    %659 = vmatprep.mubr.f32.mxu0 0.0
    %660 = vmatmul.mubr.f32.gmra.mxu0 %v257
    %v661 = vpop.f32.mrf.mxu0
    %v662 = vadd.f32 %v557, %v661
    %v663 = vpop.f32.mrf.mxu0
    %664 = vmatprep.mubr.f32.mxu0 0.0
    %665 = vmatmul.mubr.f32.gmra.mxu0 %v259
    %v666 = vpop.f32.mrf.mxu0
    %v667 = vadd.f32 %v562, %v666
    %v668 = vpop.f32.mrf.mxu0
    %669 = vdwg.mxu0
    %v670 = vtanh.pop %v632
    %v671 = vtanh.pop %v637
    %v672 = vtanh.pop %v642
    %v673 = vtanh.pop %v647
    %v674 = vtanh.pop %v652
    %v675 = vtanh.pop %v657
    %v676 = vtanh.pop %v662
    %v677 = vtanh.pop %v667
    %678 = vst [vmem:[#allocation3 + $0x2] sm:$0xff] %v670
    %679 = vst [vmem:[#allocation3 + $0xa] sm:$0xff] %v671
    %680 = vst [vmem:[#allocation3 + $0x12] sm:$0xff] %v672
    %681 = vst [vmem:[#allocation3 + $0x1a] sm:$0xff] %v673
    %682 = vst [vmem:[#allocation3 + $0x2a] sm:$0xff] %v674
    %683 = vst [vmem:[#allocation3 + $0x32] sm:$0xff] %v675
    %684 = vst [vmem:[#allocation3 + $0x3a] sm:$0xff] %v676
    %685 = vst [vmem:[#allocation3 + $0x42] sm:$0xff] %v677
    %v686 = vld [vmem:[#allocation3] sm:$0xff]
    %v687 = vld [vmem:[#allocation3 + $0x8] sm:$0xff]
    %v688 = vld [vmem:[#allocation3 + $0x10] sm:$0xff]
    %v689 = vld [vmem:[#allocation3 + $0x18] sm:$0xff]
    %v690 = vld [vmem:[#allocation3 + $0x20] sm:$0xf]
    %v691 = vld [vmem:[#allocation3 + $0x28] sm:$0xff]
    %v692 = vld [vmem:[#allocation3 + $0x30] sm:$0xff]
    %v693 = vld [vmem:[#allocation3 + $0x38] sm:$0xff]
    %v694 = vld [vmem:[#allocation3 + $0x40] sm:$0xff]
    %v695 = vld [vmem:[#allocation3 + $0x48] sm:$0xf]
    %v706 = vrot.slane %v686, 1
    %v707 = vrot.slane %v687, 1
    %v708 = vsel %vm160, %v706, %v707
    %v709 = vrot.slane %v688, 1
    %v710 = vsel %vm160, %v707, %v709
    %v711 = vrot.slane %v689, 1
    %v712 = vsel %vm160, %v709, %v711
    %v713 = vrot.slane %v690, 1
    %v714 = vsel %vm160, %v711, %v713
    %v715 = vrot.slane %v691, 1
    %v716 = vrot.slane %v692, 1
    %v717 = vsel %vm160, %v715, %v716
    %v718 = vrot.slane %v693, 1
    %v719 = vsel %vm160, %v716, %v718
    %v720 = vrot.slane %v694, 1
    %v721 = vsel %vm160, %v718, %v720
    %v722 = vrot.slane %v695, 1
    %v723 = vsel %vm160, %v720, %v722
    %v732 = vrot.slane %v686, 2
    %v733 = vrot.slane %v687, 2
    %v734 = vsel %vm187, %v732, %v733
    %v735 = vrot.slane %v688, 2
    %v736 = vsel %vm187, %v733, %v735
    %v737 = vrot.slane %v689, 2
    %v738 = vsel %vm187, %v735, %v737
    %v739 = vrot.slane %v690, 2
    %v740 = vsel %vm187, %v737, %v739
    %v741 = vrot.slane %v691, 2
    %v742 = vrot.slane %v692, 2
    %v743 = vsel %vm187, %v741, %v742
    %v744 = vrot.slane %v693, 2
    %v745 = vsel %vm187, %v742, %v744
    %v746 = vrot.slane %v694, 2
    %v747 = vsel %vm187, %v744, %v746
    %v748 = vrot.slane %v695, 2
    %v749 = vsel %vm187, %v746, %v748
    %v758 = vrot.slane %v686, 3
    %v759 = vrot.slane %v687, 3
    %v760 = vsel %vm214, %v758, %v759
    %v761 = vrot.slane %v688, 3
    %v762 = vsel %vm214, %v759, %v761
    %v763 = vrot.slane %v689, 3
    %v764 = vsel %vm214, %v761, %v763
    %v765 = vrot.slane %v690, 3
    %v766 = vsel %vm214, %v763, %v765
    %v767 = vrot.slane %v691, 3
    %v768 = vrot.slane %v692, 3
    %v769 = vsel %vm214, %v767, %v768
    %v770 = vrot.slane %v693, 3
    %v771 = vsel %vm214, %v768, %v770
    %v772 = vrot.slane %v694, 3
    %v773 = vsel %vm214, %v770, %v772
    %v774 = vrot.slane %v695, 3
    %v775 = vsel %vm214, %v772, %v774
    %v784 = vrot.slane %v686, 4
    %v785 = vrot.slane %v687, 4
    %v786 = vsel %vm241, %v784, %v785
    %v787 = vrot.slane %v688, 4
    %v788 = vsel %vm241, %v785, %v787
    %v789 = vrot.slane %v689, 4
    %v790 = vsel %vm241, %v787, %v789
    %v791 = vrot.slane %v690, 4
    %v792 = vsel %vm241, %v789, %v791
    %v793 = vrot.slane %v691, 4
    %v794 = vrot.slane %v692, 4
    %v795 = vsel %vm241, %v793, %v794
    %v796 = vrot.slane %v693, 4
    %v797 = vsel %vm241, %v794, %v796
    %v798 = vrot.slane %v694, 4
    %v799 = vsel %vm241, %v796, %v798
    %v800 = vrot.slane %v695, 4
    %v801 = vsel %vm241, %v798, %v800
    %s810 = scalar_lea.vmem [#allocation7], 640
    %v811 = vld [vmem:[%s810] sm:$0xff]
    %v812 = vld [vmem:[%s810 + $0x8] sm:$0xff]
    %v813 = vld [vmem:[%s810 + $0x10] sm:$0xff]
    %v814 = vld [vmem:[%s810 + $0x18] sm:$0xff]
    %v815 = vld [vmem:[%s810 + $0x20] sm:$0xff]
    %v816 = vld [vmem:[%s810 + $0x28] sm:$0xff]
    %v817 = vld [vmem:[%s810 + $0x30] sm:$0xff]
    %v818 = vld [vmem:[%s810 + $0x38] sm:$0xff]
    %v819 = vld [vmem:[%s810 + $0x40] sm:$0xff]
    %v820 = vld [vmem:[%s810 + $0x48] sm:$0xff]
    %v821 = vld [vmem:[%s810 + $0x50] sm:$0xff]
    %v822 = vld [vmem:[%s810 + $0x58] sm:$0xff]
    %v823 = vld [vmem:[%s810 + $0x60] sm:$0xff]
    %v824 = vld [vmem:[%s810 + $0x68] sm:$0xff]
    %v825 = vld [vmem:[%s810 + $0x70] sm:$0xff]
    %v826 = vld [vmem:[%s810 + $0x78] sm:$0xff]
    %v827 = vld [vmem:[%s810 + $0x80] sm:$0xff]
    %v828 = vld [vmem:[%s810 + $0x88] sm:$0xff]
    %v829 = vld [vmem:[%s810 + $0x90] sm:$0xff]
    %v830 = vld [vmem:[%s810 + $0x98] sm:$0xff]
    %v831 = vld [vmem:[%s810 + $0xa0] sm:$0xff]
    %v832 = vld [vmem:[%s810 + $0xa8] sm:$0xff]
    %v833 = vld [vmem:[%s810 + $0xb0] sm:$0xff]
    %v834 = vld [vmem:[%s810 + $0xb8] sm:$0xff]
    %v835 = vld [vmem:[%s810 + $0xc0] sm:$0xff]
    %v836 = vld [vmem:[%s810 + $0xc8] sm:$0xff]
    %v837 = vld [vmem:[%s810 + $0xd0] sm:$0xff]
    %v838 = vld [vmem:[%s810 + $0xd8] sm:$0xff]
    %v839 = vld [vmem:[%s810 + $0xe0] sm:$0xff]
    %v840 = vld [vmem:[%s810 + $0xe8] sm:$0xff]
    %v841 = vld [vmem:[%s810 + $0xf0] sm:$0xff]
    %v842 = vld [vmem:[%s810 + $0xf8] sm:$0xff]
    %v843 = vld [vmem:[%s810 + $0x100] sm:$0xff]
    %v844 = vld [vmem:[%s810 + $0x108] sm:$0xff]
    %v845 = vld [vmem:[%s810 + $0x110] sm:$0xff]
    %v846 = vld [vmem:[%s810 + $0x118] sm:$0xff]
    %v847 = vld [vmem:[%s810 + $0x120] sm:$0xff]
    %v848 = vld [vmem:[%s810 + $0x128] sm:$0xff]
    %v849 = vld [vmem:[%s810 + $0x130] sm:$0xff]
    %v850 = vld [vmem:[%s810 + $0x138] sm:$0xff]
    %v851 = vld [vmem:[%s810 + $0x140] sm:$0xff]
    %v852 = vld [vmem:[%s810 + $0x148] sm:$0xff]
    %v853 = vld [vmem:[%s810 + $0x150] sm:$0xff]
    %v854 = vld [vmem:[%s810 + $0x158] sm:$0xff]
    %v855 = vld [vmem:[%s810 + $0x160] sm:$0xff]
    %v856 = vld [vmem:[%s810 + $0x168] sm:$0xff]
    %v857 = vld [vmem:[%s810 + $0x170] sm:$0xff]
    %v858 = vld [vmem:[%s810 + $0x178] sm:$0xff]
    %v859 = vld [vmem:[%s810 + $0x180] sm:$0xff]
    %v860 = vld [vmem:[%s810 + $0x188] sm:$0xff]
    %v861 = vld [vmem:[%s810 + $0x190] sm:$0xff]
    %v862 = vld [vmem:[%s810 + $0x198] sm:$0xff]
    %v863 = vld [vmem:[%s810 + $0x1a0] sm:$0xff]
    %v864 = vld [vmem:[%s810 + $0x1a8] sm:$0xff]
    %v865 = vld [vmem:[%s810 + $0x1b0] sm:$0xff]
    %v866 = vld [vmem:[%s810 + $0x1b8] sm:$0xff]
    %v867 = vld [vmem:[%s810 + $0x1c0] sm:$0xff]
    %v868 = vld [vmem:[%s810 + $0x1c8] sm:$0xff]
    %v869 = vld [vmem:[%s810 + $0x1d0] sm:$0xff]
    %v870 = vld [vmem:[%s810 + $0x1d8] sm:$0xff]
    %v871 = vld [vmem:[%s810 + $0x1e0] sm:$0xff]
    %v872 = vld [vmem:[%s810 + $0x1e8] sm:$0xff]
    %v873 = vld [vmem:[%s810 + $0x1f0] sm:$0xff]
    %v874 = vld [vmem:[%s810 + $0x1f8] sm:$0xff]
    %v875 = vld [vmem:[%s810 + $0x200] sm:$0xff]
    %v876 = vld [vmem:[%s810 + $0x208] sm:$0xff]
    %v877 = vld [vmem:[%s810 + $0x210] sm:$0xff]
    %v878 = vld [vmem:[%s810 + $0x218] sm:$0xff]
    %v879 = vld [vmem:[%s810 + $0x220] sm:$0xff]
    %v880 = vld [vmem:[%s810 + $0x228] sm:$0xff]
    %v881 = vld [vmem:[%s810 + $0x230] sm:$0xff]
    %v882 = vld [vmem:[%s810 + $0x238] sm:$0xff]
    %v883 = vld [vmem:[%s810 + $0x240] sm:$0xff]
    %v884 = vld [vmem:[%s810 + $0x248] sm:$0xff]
    %v885 = vld [vmem:[%s810 + $0x250] sm:$0xff]
    %v886 = vld [vmem:[%s810 + $0x258] sm:$0xff]
    %v887 = vld [vmem:[%s810 + $0x260] sm:$0xff]
    %v888 = vld [vmem:[%s810 + $0x268] sm:$0xff]
    %v889 = vld [vmem:[%s810 + $0x270] sm:$0xff]
    %v890 = vld [vmem:[%s810 + $0x278] sm:$0xff]
    %s891 = scalar_lea.vmem [#allocation9], 1
    %v892 = vld [vmem:[%s891] sm:$0x1]
    %v894 = vlaneseq
    %v895 = vshrl.u32 %v894, 7
    %v896 = vsub.s32 0, %v895
    %v897 = vrot.slane %v892, %v896
    %899 = vmatprep.subr.mxu0 0.0
    %900 = vmatpush1.msra.mxu0 %v826
    %901 = vmatprep.subr.mxu0 0.0
    %902 = vmatpush1.msra.mxu0 %v825
    %903 = vmatprep.subr.mxu0 0.0
    %904 = vmatpush1.msra.mxu0 %v824
    %905 = vmatprep.subr.mxu0 0.0
    %906 = vmatpush1.msra.mxu0 %v823
    %907 = vmatprep.subr.mxu0 0.0
    %908 = vmatpush1.msra.mxu0 %v822
    %909 = vmatprep.subr.mxu0 0.0
    %910 = vmatpush1.msra.mxu0 %v821
    %911 = vmatprep.subr.mxu0 0.0
    %912 = vmatpush1.msra.mxu0 %v820
    %913 = vmatprep.subr.mxu0 0.0
    %914 = vmatpush1.msra.mxu0 %v819
    %915 = vmatprep.subr.mxu0 0.0
    %916 = vmatpush1.msra.mxu0 %v818
    %917 = vmatprep.subr.mxu0 0.0
    %918 = vmatpush1.msra.mxu0 %v817
    %919 = vmatprep.subr.mxu0 0.0
    %920 = vmatpush1.msra.mxu0 %v816
    %921 = vmatprep.subr.mxu0 0.0
    %922 = vmatpush1.msra.mxu0 %v815
    %923 = vmatprep.subr.mxu0 0.0
    %924 = vmatpush1.msra.mxu0 %v814
    %925 = vmatprep.subr.mxu0 0.0
    %926 = vmatpush1.msra.mxu0 %v813
    %927 = vmatprep.subr.mxu0 0.0
    %928 = vmatpush1.msra.mxu0 %v812
    %929 = vmatprep.subr.mxu0 0.0
    %930 = vmatpush1.msra.mxu0 %v811
    %931 = vmatprep.subr.mxu0 0.0
    %932 = vmatpush2.msra.mxu0 %v842
    %933 = vmatprep.subr.mxu0 0.0
    %934 = vmatpush2.msra.mxu0 %v841
    %935 = vmatprep.subr.mxu0 0.0
    %936 = vmatpush2.msra.mxu0 %v840
    %937 = vmatprep.subr.mxu0 0.0
    %938 = vmatpush2.msra.mxu0 %v839
    %939 = vmatprep.subr.mxu0 0.0
    %940 = vmatpush2.msra.mxu0 %v838
    %941 = vmatprep.subr.mxu0 0.0
    %942 = vmatpush2.msra.mxu0 %v837
    %943 = vmatprep.subr.mxu0 0.0
    %944 = vmatpush2.msra.mxu0 %v836
    %945 = vmatprep.subr.mxu0 0.0
    %946 = vmatpush2.msra.mxu0 %v835
    %947 = vmatprep.subr.mxu0 0.0
    %948 = vmatpush2.msra.mxu0 %v834
    %949 = vmatprep.subr.mxu0 0.0
    %950 = vmatpush2.msra.mxu0 %v833
    %951 = vmatprep.subr.mxu0 0.0
    %952 = vmatpush2.msra.mxu0 %v832
    %953 = vmatprep.subr.mxu0 0.0
    %954 = vmatpush2.msra.mxu0 %v831
    %955 = vmatprep.subr.mxu0 0.0
    %956 = vmatpush2.msra.mxu0 %v830
    %957 = vmatprep.subr.mxu0 0.0
    %958 = vmatpush2.msra.mxu0 %v829
    %959 = vmatprep.subr.mxu0 0.0
    %960 = vmatpush2.msra.mxu0 %v828
    %961 = vmatprep.subr.mxu0 0.0
    %962 = vmatpush2.msra.mxu0 %v827
    %963 = vmatprep.mubr.f32.mxu0 %v708
    %964 = vmatmul.mubr.f32.gmra.mxu0 %v686
    %v965 = vpop.f32.mrf.mxu0
    %v966 = vadd.f32 %v897, %v965
    %v967 = vpop.f32.mrf.mxu0
    %968 = vmatprep.mubr.f32.mxu0 %v710
    %969 = vmatmul.mubr.f32.gmra.mxu0 %v687
    %v970 = vpop.f32.mrf.mxu0
    %v971 = vadd.f32 %v897, %v970
    %v972 = vpop.f32.mrf.mxu0
    %973 = vmatprep.mubr.f32.mxu0 %v712
    %974 = vmatmul.mubr.f32.gmra.mxu0 %v688
    %v975 = vpop.f32.mrf.mxu0
    %v976 = vadd.f32 %v897, %v975
    %v977 = vpop.f32.mrf.mxu0
    %978 = vmatprep.mubr.f32.mxu0 %v714
    %979 = vmatmul.mubr.f32.gmra.mxu0 %v689
    %v980 = vpop.f32.mrf.mxu0
    %v981 = vadd.f32 %v897, %v980
    %v982 = vpop.f32.mrf.mxu0
    %983 = vmatprep.mubr.f32.mxu0 %v717
    %984 = vmatmul.mubr.f32.gmra.mxu0 %v691
    %v985 = vpop.f32.mrf.mxu0
    %v986 = vadd.f32 %v897, %v985
    %v987 = vpop.f32.mrf.mxu0
    %988 = vmatprep.mubr.f32.mxu0 %v719
    %989 = vmatmul.mubr.f32.gmra.mxu0 %v692
    %v990 = vpop.f32.mrf.mxu0
    %v991 = vadd.f32 %v897, %v990
    %v992 = vpop.f32.mrf.mxu0
    %993 = vmatprep.mubr.f32.mxu0 %v721
    %994 = vmatmul.mubr.f32.gmra.mxu0 %v693
    %v995 = vpop.f32.mrf.mxu0
    %v996 = vadd.f32 %v897, %v995
    %v997 = vpop.f32.mrf.mxu0
    %998 = vmatprep.mubr.f32.mxu0 %v723
    %999 = vmatmul.mubr.f32.gmra.mxu0 %v694
    %v1000 = vpop.f32.mrf.mxu0
    %v1001 = vadd.f32 %v897, %v1000
    %v1002 = vpop.f32.mrf.mxu0
    %1003 = vdwg.mxu0
    %1004 = vmatprep.subr.mxu0 0.0
    %1005 = vmatpush1.msra.mxu0 %v858
    %1006 = vmatprep.subr.mxu0 0.0
    %1007 = vmatpush1.msra.mxu0 %v857
    %1008 = vmatprep.subr.mxu0 0.0
    %1009 = vmatpush1.msra.mxu0 %v856
    %1010 = vmatprep.subr.mxu0 0.0
    %1011 = vmatpush1.msra.mxu0 %v855
    %1012 = vmatprep.subr.mxu0 0.0
    %1013 = vmatpush1.msra.mxu0 %v854
    %1014 = vmatprep.subr.mxu0 0.0
    %1015 = vmatpush1.msra.mxu0 %v853
    %1016 = vmatprep.subr.mxu0 0.0
    %1017 = vmatpush1.msra.mxu0 %v852
    %1018 = vmatprep.subr.mxu0 0.0
    %1019 = vmatpush1.msra.mxu0 %v851
    %1020 = vmatprep.subr.mxu0 0.0
    %1021 = vmatpush1.msra.mxu0 %v850
    %1022 = vmatprep.subr.mxu0 0.0
    %1023 = vmatpush1.msra.mxu0 %v849
    %1024 = vmatprep.subr.mxu0 0.0
    %1025 = vmatpush1.msra.mxu0 %v848
    %1026 = vmatprep.subr.mxu0 0.0
    %1027 = vmatpush1.msra.mxu0 %v847
    %1028 = vmatprep.subr.mxu0 0.0
    %1029 = vmatpush1.msra.mxu0 %v846
    %1030 = vmatprep.subr.mxu0 0.0
    %1031 = vmatpush1.msra.mxu0 %v845
    %1032 = vmatprep.subr.mxu0 0.0
    %1033 = vmatpush1.msra.mxu0 %v844
    %1034 = vmatprep.subr.mxu0 0.0
    %1035 = vmatpush1.msra.mxu0 %v843
    %1036 = vmatprep.subr.mxu0 0.0
    %1037 = vmatpush2.msra.mxu0 %v874
    %1038 = vmatprep.subr.mxu0 0.0
    %1039 = vmatpush2.msra.mxu0 %v873
    %1040 = vmatprep.subr.mxu0 0.0
    %1041 = vmatpush2.msra.mxu0 %v872
    %1042 = vmatprep.subr.mxu0 0.0
    %1043 = vmatpush2.msra.mxu0 %v871
    %1044 = vmatprep.subr.mxu0 0.0
    %1045 = vmatpush2.msra.mxu0 %v870
    %1046 = vmatprep.subr.mxu0 0.0
    %1047 = vmatpush2.msra.mxu0 %v869
    %1048 = vmatprep.subr.mxu0 0.0
    %1049 = vmatpush2.msra.mxu0 %v868
    %1050 = vmatprep.subr.mxu0 0.0
    %1051 = vmatpush2.msra.mxu0 %v867
    %1052 = vmatprep.subr.mxu0 0.0
    %1053 = vmatpush2.msra.mxu0 %v866
    %1054 = vmatprep.subr.mxu0 0.0
    %1055 = vmatpush2.msra.mxu0 %v865
    %1056 = vmatprep.subr.mxu0 0.0
    %1057 = vmatpush2.msra.mxu0 %v864
    %1058 = vmatprep.subr.mxu0 0.0
    %1059 = vmatpush2.msra.mxu0 %v863
    %1060 = vmatprep.subr.mxu0 0.0
    %1061 = vmatpush2.msra.mxu0 %v862
    %1062 = vmatprep.subr.mxu0 0.0
    %1063 = vmatpush2.msra.mxu0 %v861
    %1064 = vmatprep.subr.mxu0 0.0
    %1065 = vmatpush2.msra.mxu0 %v860
    %1066 = vmatprep.subr.mxu0 0.0
    %1067 = vmatpush2.msra.mxu0 %v859
    %1068 = vmatprep.mubr.f32.mxu0 %v760
    %1069 = vmatmul.mubr.f32.gmra.mxu0 %v734
    %v1070 = vpop.f32.mrf.mxu0
    %v1071 = vadd.f32 %v966, %v1070
    %v1072 = vpop.f32.mrf.mxu0
    %1073 = vmatprep.mubr.f32.mxu0 %v762
    %1074 = vmatmul.mubr.f32.gmra.mxu0 %v736
    %v1075 = vpop.f32.mrf.mxu0
    %v1076 = vadd.f32 %v971, %v1075
    %v1077 = vpop.f32.mrf.mxu0
    %1078 = vmatprep.mubr.f32.mxu0 %v764
    %1079 = vmatmul.mubr.f32.gmra.mxu0 %v738
    %v1080 = vpop.f32.mrf.mxu0
    %v1081 = vadd.f32 %v976, %v1080
    %v1082 = vpop.f32.mrf.mxu0
    %1083 = vmatprep.mubr.f32.mxu0 %v766
    %1084 = vmatmul.mubr.f32.gmra.mxu0 %v740
    %v1085 = vpop.f32.mrf.mxu0
    %v1086 = vadd.f32 %v981, %v1085
    %v1087 = vpop.f32.mrf.mxu0
    %1088 = vmatprep.mubr.f32.mxu0 %v769
    %1089 = vmatmul.mubr.f32.gmra.mxu0 %v743
    %v1090 = vpop.f32.mrf.mxu0
    %v1091 = vadd.f32 %v986, %v1090
    %v1092 = vpop.f32.mrf.mxu0
    %1093 = vmatprep.mubr.f32.mxu0 %v771
    %1094 = vmatmul.mubr.f32.gmra.mxu0 %v745
    %v1095 = vpop.f32.mrf.mxu0
    %v1096 = vadd.f32 %v991, %v1095
    %v1097 = vpop.f32.mrf.mxu0
    %1098 = vmatprep.mubr.f32.mxu0 %v773
    %1099 = vmatmul.mubr.f32.gmra.mxu0 %v747
    %v1100 = vpop.f32.mrf.mxu0
    %v1101 = vadd.f32 %v996, %v1100
    %v1102 = vpop.f32.mrf.mxu0
    %1103 = vmatprep.mubr.f32.mxu0 %v775
    %1104 = vmatmul.mubr.f32.gmra.mxu0 %v749
    %v1105 = vpop.f32.mrf.mxu0
    %v1106 = vadd.f32 %v1001, %v1105
    %v1107 = vpop.f32.mrf.mxu0
    %1108 = vdwg.mxu0
    %1109 = vmatprep.subr.mxu0 0.0
    %1110 = vmatpush1.msra.mxu0 %v890
    %1111 = vmatprep.subr.mxu0 0.0
    %1112 = vmatpush1.msra.mxu0 %v889
    %1113 = vmatprep.subr.mxu0 0.0
    %1114 = vmatpush1.msra.mxu0 %v888
    %1115 = vmatprep.subr.mxu0 0.0
    %1116 = vmatpush1.msra.mxu0 %v887
    %1117 = vmatprep.subr.mxu0 0.0
    %1118 = vmatpush1.msra.mxu0 %v886
    %1119 = vmatprep.subr.mxu0 0.0
    %1120 = vmatpush1.msra.mxu0 %v885
    %1121 = vmatprep.subr.mxu0 0.0
    %1122 = vmatpush1.msra.mxu0 %v884
    %1123 = vmatprep.subr.mxu0 0.0
    %1124 = vmatpush1.msra.mxu0 %v883
    %1125 = vmatprep.subr.mxu0 0.0
    %1126 = vmatpush1.msra.mxu0 %v882
    %1127 = vmatprep.subr.mxu0 0.0
    %1128 = vmatpush1.msra.mxu0 %v881
    %1129 = vmatprep.subr.mxu0 0.0
    %1130 = vmatpush1.msra.mxu0 %v880
    %1131 = vmatprep.subr.mxu0 0.0
    %1132 = vmatpush1.msra.mxu0 %v879
    %1133 = vmatprep.subr.mxu0 0.0
    %1134 = vmatpush1.msra.mxu0 %v878
    %1135 = vmatprep.subr.mxu0 0.0
    %1136 = vmatpush1.msra.mxu0 %v877
    %1137 = vmatprep.subr.mxu0 0.0
    %1138 = vmatpush1.msra.mxu0 %v876
    %1139 = vmatprep.subr.mxu0 0.0
    %1140 = vmatpush1.msra.mxu0 %v875
    %1141 = vmatprep.subr.mxu0 0.0
    %1142 = vmatpush2.msra.mxu0 0.0
    %1143 = vmatprep.subr.mxu0 0.0
    %1144 = vmatpush2.msra.mxu0 0.0
    %1145 = vmatprep.subr.mxu0 0.0
    %1146 = vmatpush2.msra.mxu0 0.0
    %1147 = vmatprep.subr.mxu0 0.0
    %1148 = vmatpush2.msra.mxu0 0.0
    %1149 = vmatprep.subr.mxu0 0.0
    %1150 = vmatpush2.msra.mxu0 0.0
    %1151 = vmatprep.subr.mxu0 0.0
    %1152 = vmatpush2.msra.mxu0 0.0
    %1153 = vmatprep.subr.mxu0 0.0
    %1154 = vmatpush2.msra.mxu0 0.0
    %1155 = vmatprep.subr.mxu0 0.0
    %1156 = vmatpush2.msra.mxu0 0.0
    %1157 = vmatprep.subr.mxu0 0.0
    %1158 = vmatpush2.msra.mxu0 0.0
    %1159 = vmatprep.subr.mxu0 0.0
    %1160 = vmatpush2.msra.mxu0 0.0
    %1161 = vmatprep.subr.mxu0 0.0
    %1162 = vmatpush2.msra.mxu0 0.0
    %1163 = vmatprep.subr.mxu0 0.0
    %1164 = vmatpush2.msra.mxu0 0.0
    %1165 = vmatprep.subr.mxu0 0.0
    %1166 = vmatpush2.msra.mxu0 0.0
    %1167 = vmatprep.subr.mxu0 0.0
    %1168 = vmatpush2.msra.mxu0 0.0
    %1169 = vmatprep.subr.mxu0 0.0
    %1170 = vmatpush2.msra.mxu0 0.0
    %1171 = vmatprep.subr.mxu0 0.0
    %1172 = vmatpush2.msra.mxu0 0.0
    %1173 = vmatprep.mubr.f32.mxu0 0.0
    %1174 = vmatmul.mubr.f32.gmra.mxu0 %v786
    %v1175 = vpop.f32.mrf.mxu0
    %v1176 = vadd.f32 %v1071, %v1175
    %v1177 = vpop.f32.mrf.mxu0
    %1178 = vmatprep.mubr.f32.mxu0 0.0
    %1179 = vmatmul.mubr.f32.gmra.mxu0 %v788
    %v1180 = vpop.f32.mrf.mxu0
    %v1181 = vadd.f32 %v1076, %v1180
    %v1182 = vpop.f32.mrf.mxu0
    %1183 = vmatprep.mubr.f32.mxu0 0.0
    %1184 = vmatmul.mubr.f32.gmra.mxu0 %v790
    %v1185 = vpop.f32.mrf.mxu0
    %v1186 = vadd.f32 %v1081, %v1185
    %v1187 = vpop.f32.mrf.mxu0
    %1188 = vmatprep.mubr.f32.mxu0 0.0
    %1189 = vmatmul.mubr.f32.gmra.mxu0 %v792
    %v1190 = vpop.f32.mrf.mxu0
    %v1191 = vadd.f32 %v1086, %v1190
    %v1192 = vpop.f32.mrf.mxu0
    %1193 = vmatprep.mubr.f32.mxu0 0.0
    %1194 = vmatmul.mubr.f32.gmra.mxu0 %v795
    %v1195 = vpop.f32.mrf.mxu0
    %v1196 = vadd.f32 %v1091, %v1195
    %v1197 = vpop.f32.mrf.mxu0
    %1198 = vmatprep.mubr.f32.mxu0 0.0
    %1199 = vmatmul.mubr.f32.gmra.mxu0 %v797
    %v1200 = vpop.f32.mrf.mxu0
    %v1201 = vadd.f32 %v1096, %v1200
    %v1202 = vpop.f32.mrf.mxu0
    %1203 = vmatprep.mubr.f32.mxu0 0.0
    %1204 = vmatmul.mubr.f32.gmra.mxu0 %v799
    %v1205 = vpop.f32.mrf.mxu0
    %v1206 = vadd.f32 %v1101, %v1205
    %v1207 = vpop.f32.mrf.mxu0
    %1208 = vmatprep.mubr.f32.mxu0 0.0
    %1209 = vmatmul.mubr.f32.gmra.mxu0 %v801
    %v1210 = vpop.f32.mrf.mxu0
    %v1211 = vadd.f32 %v1106, %v1210
    %v1212 = vpop.f32.mrf.mxu0
    %1213 = vdwg.mxu0
    %v1214 = vtanh.pop %v1176
    %v1215 = vtanh.pop %v1181
    %v1216 = vtanh.pop %v1186
    %v1217 = vtanh.pop %v1191
    %v1218 = vtanh.pop %v1196
    %v1219 = vtanh.pop %v1201
    %v1220 = vtanh.pop %v1206
    %v1221 = vtanh.pop %v1211
    %1222 = vst [vmem:[#allocation2 + $0x2] sm:$0xff] %v1214
    %1223 = vst [vmem:[#allocation2 + $0xa] sm:$0xff] %v1215
    %1224 = vst [vmem:[#allocation2 + $0x12] sm:$0xff] %v1216
    %1225 = vst [vmem:[#allocation2 + $0x1a] sm:$0xff] %v1217
    %1226 = vst [vmem:[#allocation2 + $0x2a] sm:$0xff] %v1218
    %1227 = vst [vmem:[#allocation2 + $0x32] sm:$0xff] %v1219
    %1228 = vst [vmem:[#allocation2 + $0x3a] sm:$0xff] %v1220
    %1229 = vst [vmem:[#allocation2 + $0x42] sm:$0xff] %v1221
    %v1230 = vld [vmem:[#allocation2] sm:$0xff]
    %v1231 = vld [vmem:[#allocation2 + $0x8] sm:$0xff]
    %v1232 = vld [vmem:[#allocation2 + $0x10] sm:$0xff]
    %v1233 = vld [vmem:[#allocation2 + $0x18] sm:$0xff]
    %v1234 = vld [vmem:[#allocation2 + $0x20] sm:$0xf]
    %v1235 = vld [vmem:[#allocation2 + $0x28] sm:$0xff]
    %v1236 = vld [vmem:[#allocation2 + $0x30] sm:$0xff]
    %v1237 = vld [vmem:[#allocation2 + $0x38] sm:$0xff]
    %v1238 = vld [vmem:[#allocation2 + $0x40] sm:$0xff]
    %v1239 = vld [vmem:[#allocation2 + $0x48] sm:$0xf]
    %v1250 = vrot.slane %v1230, 1
    %v1251 = vrot.slane %v1231, 1
    %v1252 = vsel %vm160, %v1250, %v1251
    %v1253 = vrot.slane %v1232, 1
    %v1254 = vsel %vm160, %v1251, %v1253
    %v1255 = vrot.slane %v1233, 1
    %v1256 = vsel %vm160, %v1253, %v1255
    %v1257 = vrot.slane %v1234, 1
    %v1258 = vsel %vm160, %v1255, %v1257
    %v1259 = vrot.slane %v1235, 1
    %v1260 = vrot.slane %v1236, 1
    %v1261 = vsel %vm160, %v1259, %v1260
    %v1262 = vrot.slane %v1237, 1
    %v1263 = vsel %vm160, %v1260, %v1262
    %v1264 = vrot.slane %v1238, 1
    %v1265 = vsel %vm160, %v1262, %v1264
    %v1266 = vrot.slane %v1239, 1
    %v1267 = vsel %vm160, %v1264, %v1266
    %v1276 = vrot.slane %v1230, 2
    %v1277 = vrot.slane %v1231, 2
    %v1278 = vsel %vm187, %v1276, %v1277
    %v1279 = vrot.slane %v1232, 2
    %v1280 = vsel %vm187, %v1277, %v1279
    %v1281 = vrot.slane %v1233, 2
    %v1282 = vsel %vm187, %v1279, %v1281
    %v1283 = vrot.slane %v1234, 2
    %v1284 = vsel %vm187, %v1281, %v1283
    %v1285 = vrot.slane %v1235, 2
    %v1286 = vrot.slane %v1236, 2
    %v1287 = vsel %vm187, %v1285, %v1286
    %v1288 = vrot.slane %v1237, 2
    %v1289 = vsel %vm187, %v1286, %v1288
    %v1290 = vrot.slane %v1238, 2
    %v1291 = vsel %vm187, %v1288, %v1290
    %v1292 = vrot.slane %v1239, 2
    %v1293 = vsel %vm187, %v1290, %v1292
    %v1302 = vrot.slane %v1230, 3
    %v1303 = vrot.slane %v1231, 3
    %v1304 = vsel %vm214, %v1302, %v1303
    %v1305 = vrot.slane %v1232, 3
    %v1306 = vsel %vm214, %v1303, %v1305
    %v1307 = vrot.slane %v1233, 3
    %v1308 = vsel %vm214, %v1305, %v1307
    %v1309 = vrot.slane %v1234, 3
    %v1310 = vsel %vm214, %v1307, %v1309
    %v1311 = vrot.slane %v1235, 3
    %v1312 = vrot.slane %v1236, 3
    %v1313 = vsel %vm214, %v1311, %v1312
    %v1314 = vrot.slane %v1237, 3
    %v1315 = vsel %vm214, %v1312, %v1314
    %v1316 = vrot.slane %v1238, 3
    %v1317 = vsel %vm214, %v1314, %v1316
    %v1318 = vrot.slane %v1239, 3
    %v1319 = vsel %vm214, %v1316, %v1318
    %v1328 = vrot.slane %v1230, 4
    %v1329 = vrot.slane %v1231, 4
    %v1330 = vsel %vm241, %v1328, %v1329
    %v1331 = vrot.slane %v1232, 4
    %v1332 = vsel %vm241, %v1329, %v1331
    %v1333 = vrot.slane %v1233, 4
    %v1334 = vsel %vm241, %v1331, %v1333
    %v1335 = vrot.slane %v1234, 4
    %v1336 = vsel %vm241, %v1333, %v1335
    %v1337 = vrot.slane %v1235, 4
    %v1338 = vrot.slane %v1236, 4
    %v1339 = vsel %vm241, %v1337, %v1338
    %v1340 = vrot.slane %v1237, 4
    %v1341 = vsel %vm241, %v1338, %v1340
    %v1342 = vrot.slane %v1238, 4
    %v1343 = vsel %vm241, %v1340, %v1342
    %v1344 = vrot.slane %v1239, 4
    %v1345 = vsel %vm241, %v1342, %v1344
    %s1354 = scalar_lea.vmem [#allocation7], 1280
    %v1355 = vld [vmem:[%s1354] sm:$0xff]
    %v1356 = vld [vmem:[%s1354 + $0x8] sm:$0xff]
    %v1357 = vld [vmem:[%s1354 + $0x10] sm:$0xff]
    %v1358 = vld [vmem:[%s1354 + $0x18] sm:$0xff]
    %v1359 = vld [vmem:[%s1354 + $0x20] sm:$0xff]
    %v1360 = vld [vmem:[%s1354 + $0x28] sm:$0xff]
    %v1361 = vld [vmem:[%s1354 + $0x30] sm:$0xff]
    %v1362 = vld [vmem:[%s1354 + $0x38] sm:$0xff]
    %v1363 = vld [vmem:[%s1354 + $0x40] sm:$0xff]
    %v1364 = vld [vmem:[%s1354 + $0x48] sm:$0xff]
    %v1365 = vld [vmem:[%s1354 + $0x50] sm:$0xff]
    %v1366 = vld [vmem:[%s1354 + $0x58] sm:$0xff]
    %v1367 = vld [vmem:[%s1354 + $0x60] sm:$0xff]
    %v1368 = vld [vmem:[%s1354 + $0x68] sm:$0xff]
    %v1369 = vld [vmem:[%s1354 + $0x70] sm:$0xff]
    %v1370 = vld [vmem:[%s1354 + $0x78] sm:$0xff]
    %v1371 = vld [vmem:[%s1354 + $0x80] sm:$0xff]
    %v1372 = vld [vmem:[%s1354 + $0x88] sm:$0xff]
    %v1373 = vld [vmem:[%s1354 + $0x90] sm:$0xff]
    %v1374 = vld [vmem:[%s1354 + $0x98] sm:$0xff]
    %v1375 = vld [vmem:[%s1354 + $0xa0] sm:$0xff]
    %v1376 = vld [vmem:[%s1354 + $0xa8] sm:$0xff]
    %v1377 = vld [vmem:[%s1354 + $0xb0] sm:$0xff]
    %v1378 = vld [vmem:[%s1354 + $0xb8] sm:$0xff]
    %v1379 = vld [vmem:[%s1354 + $0xc0] sm:$0xff]
    %v1380 = vld [vmem:[%s1354 + $0xc8] sm:$0xff]
    %v1381 = vld [vmem:[%s1354 + $0xd0] sm:$0xff]
    %v1382 = vld [vmem:[%s1354 + $0xd8] sm:$0xff]
    %v1383 = vld [vmem:[%s1354 + $0xe0] sm:$0xff]
    %v1384 = vld [vmem:[%s1354 + $0xe8] sm:$0xff]
    %v1385 = vld [vmem:[%s1354 + $0xf0] sm:$0xff]
    %v1386 = vld [vmem:[%s1354 + $0xf8] sm:$0xff]
    %v1387 = vld [vmem:[%s1354 + $0x100] sm:$0xff]
    %v1388 = vld [vmem:[%s1354 + $0x108] sm:$0xff]
    %v1389 = vld [vmem:[%s1354 + $0x110] sm:$0xff]
    %v1390 = vld [vmem:[%s1354 + $0x118] sm:$0xff]
    %v1391 = vld [vmem:[%s1354 + $0x120] sm:$0xff]
    %v1392 = vld [vmem:[%s1354 + $0x128] sm:$0xff]
    %v1393 = vld [vmem:[%s1354 + $0x130] sm:$0xff]
    %v1394 = vld [vmem:[%s1354 + $0x138] sm:$0xff]
    %v1395 = vld [vmem:[%s1354 + $0x140] sm:$0xff]
    %v1396 = vld [vmem:[%s1354 + $0x148] sm:$0xff]
    %v1397 = vld [vmem:[%s1354 + $0x150] sm:$0xff]
    %v1398 = vld [vmem:[%s1354 + $0x158] sm:$0xff]
    %v1399 = vld [vmem:[%s1354 + $0x160] sm:$0xff]
    %v1400 = vld [vmem:[%s1354 + $0x168] sm:$0xff]
    %v1401 = vld [vmem:[%s1354 + $0x170] sm:$0xff]
    %v1402 = vld [vmem:[%s1354 + $0x178] sm:$0xff]
    %v1403 = vld [vmem:[%s1354 + $0x180] sm:$0xff]
    %v1404 = vld [vmem:[%s1354 + $0x188] sm:$0xff]
    %v1405 = vld [vmem:[%s1354 + $0x190] sm:$0xff]
    %v1406 = vld [vmem:[%s1354 + $0x198] sm:$0xff]
    %v1407 = vld [vmem:[%s1354 + $0x1a0] sm:$0xff]
    %v1408 = vld [vmem:[%s1354 + $0x1a8] sm:$0xff]
    %v1409 = vld [vmem:[%s1354 + $0x1b0] sm:$0xff]
    %v1410 = vld [vmem:[%s1354 + $0x1b8] sm:$0xff]
    %v1411 = vld [vmem:[%s1354 + $0x1c0] sm:$0xff]
    %v1412 = vld [vmem:[%s1354 + $0x1c8] sm:$0xff]
    %v1413 = vld [vmem:[%s1354 + $0x1d0] sm:$0xff]
    %v1414 = vld [vmem:[%s1354 + $0x1d8] sm:$0xff]
    %v1415 = vld [vmem:[%s1354 + $0x1e0] sm:$0xff]
    %v1416 = vld [vmem:[%s1354 + $0x1e8] sm:$0xff]
    %v1417 = vld [vmem:[%s1354 + $0x1f0] sm:$0xff]
    %v1418 = vld [vmem:[%s1354 + $0x1f8] sm:$0xff]
    %v1419 = vld [vmem:[%s1354 + $0x200] sm:$0xff]
    %v1420 = vld [vmem:[%s1354 + $0x208] sm:$0xff]
    %v1421 = vld [vmem:[%s1354 + $0x210] sm:$0xff]
    %v1422 = vld [vmem:[%s1354 + $0x218] sm:$0xff]
    %v1423 = vld [vmem:[%s1354 + $0x220] sm:$0xff]
    %v1424 = vld [vmem:[%s1354 + $0x228] sm:$0xff]
    %v1425 = vld [vmem:[%s1354 + $0x230] sm:$0xff]
    %v1426 = vld [vmem:[%s1354 + $0x238] sm:$0xff]
    %v1427 = vld [vmem:[%s1354 + $0x240] sm:$0xff]
    %v1428 = vld [vmem:[%s1354 + $0x248] sm:$0xff]
    %v1429 = vld [vmem:[%s1354 + $0x250] sm:$0xff]
    %v1430 = vld [vmem:[%s1354 + $0x258] sm:$0xff]
    %v1431 = vld [vmem:[%s1354 + $0x260] sm:$0xff]
    %v1432 = vld [vmem:[%s1354 + $0x268] sm:$0xff]
    %v1433 = vld [vmem:[%s1354 + $0x270] sm:$0xff]
    %v1434 = vld [vmem:[%s1354 + $0x278] sm:$0xff]
    %s1435 = scalar_lea.vmem [#allocation9], 2
    %v1436 = vld [vmem:[%s1435] sm:$0x1]
    %v1438 = vlaneseq
    %v1439 = vshrl.u32 %v1438, 7
    %v1440 = vsub.s32 0, %v1439
    %v1441 = vrot.slane %v1436, %v1440
    %1443 = vmatprep.subr.mxu0 0.0
    %1444 = vmatpush1.msra.mxu0 %v1370
    %1445 = vmatprep.subr.mxu0 0.0
    %1446 = vmatpush1.msra.mxu0 %v1369
    %1447 = vmatprep.subr.mxu0 0.0
    %1448 = vmatpush1.msra.mxu0 %v1368
    %1449 = vmatprep.subr.mxu0 0.0
    %1450 = vmatpush1.msra.mxu0 %v1367
    %1451 = vmatprep.subr.mxu0 0.0
    %1452 = vmatpush1.msra.mxu0 %v1366
    %1453 = vmatprep.subr.mxu0 0.0
    %1454 = vmatpush1.msra.mxu0 %v1365
    %1455 = vmatprep.subr.mxu0 0.0
    %1456 = vmatpush1.msra.mxu0 %v1364
    %1457 = vmatprep.subr.mxu0 0.0
    %1458 = vmatpush1.msra.mxu0 %v1363
    %1459 = vmatprep.subr.mxu0 0.0
    %1460 = vmatpush1.msra.mxu0 %v1362
    %1461 = vmatprep.subr.mxu0 0.0
    %1462 = vmatpush1.msra.mxu0 %v1361
    %1463 = vmatprep.subr.mxu0 0.0
    %1464 = vmatpush1.msra.mxu0 %v1360
    %1465 = vmatprep.subr.mxu0 0.0
    %1466 = vmatpush1.msra.mxu0 %v1359
    %1467 = vmatprep.subr.mxu0 0.0
    %1468 = vmatpush1.msra.mxu0 %v1358
    %1469 = vmatprep.subr.mxu0 0.0
    %1470 = vmatpush1.msra.mxu0 %v1357
    %1471 = vmatprep.subr.mxu0 0.0
    %1472 = vmatpush1.msra.mxu0 %v1356
    %1473 = vmatprep.subr.mxu0 0.0
    %1474 = vmatpush1.msra.mxu0 %v1355
    %1475 = vmatprep.subr.mxu0 0.0
    %1476 = vmatpush2.msra.mxu0 %v1386
    %1477 = vmatprep.subr.mxu0 0.0
    %1478 = vmatpush2.msra.mxu0 %v1385
    %1479 = vmatprep.subr.mxu0 0.0
    %1480 = vmatpush2.msra.mxu0 %v1384
    %1481 = vmatprep.subr.mxu0 0.0
    %1482 = vmatpush2.msra.mxu0 %v1383
    %1483 = vmatprep.subr.mxu0 0.0
    %1484 = vmatpush2.msra.mxu0 %v1382
    %1485 = vmatprep.subr.mxu0 0.0
    %1486 = vmatpush2.msra.mxu0 %v1381
    %1487 = vmatprep.subr.mxu0 0.0
    %1488 = vmatpush2.msra.mxu0 %v1380
    %1489 = vmatprep.subr.mxu0 0.0
    %1490 = vmatpush2.msra.mxu0 %v1379
    %1491 = vmatprep.subr.mxu0 0.0
    %1492 = vmatpush2.msra.mxu0 %v1378
    %1493 = vmatprep.subr.mxu0 0.0
    %1494 = vmatpush2.msra.mxu0 %v1377
    %1495 = vmatprep.subr.mxu0 0.0
    %1496 = vmatpush2.msra.mxu0 %v1376
    %1497 = vmatprep.subr.mxu0 0.0
    %1498 = vmatpush2.msra.mxu0 %v1375
    %1499 = vmatprep.subr.mxu0 0.0
    %1500 = vmatpush2.msra.mxu0 %v1374
    %1501 = vmatprep.subr.mxu0 0.0
    %1502 = vmatpush2.msra.mxu0 %v1373
    %1503 = vmatprep.subr.mxu0 0.0
    %1504 = vmatpush2.msra.mxu0 %v1372
    %1505 = vmatprep.subr.mxu0 0.0
    %1506 = vmatpush2.msra.mxu0 %v1371
    %1507 = vmatprep.mubr.f32.mxu0 %v1252
    %1508 = vmatmul.mubr.f32.gmra.mxu0 %v1230
    %v1509 = vpop.f32.mrf.mxu0
    %v1510 = vadd.f32 %v1441, %v1509
    %v1511 = vpop.f32.mrf.mxu0
    %1512 = vmatprep.mubr.f32.mxu0 %v1254
    %1513 = vmatmul.mubr.f32.gmra.mxu0 %v1231
    %v1514 = vpop.f32.mrf.mxu0
    %v1515 = vadd.f32 %v1441, %v1514
    %v1516 = vpop.f32.mrf.mxu0
    %1517 = vmatprep.mubr.f32.mxu0 %v1256
    %1518 = vmatmul.mubr.f32.gmra.mxu0 %v1232
    %v1519 = vpop.f32.mrf.mxu0
    %v1520 = vadd.f32 %v1441, %v1519
    %v1521 = vpop.f32.mrf.mxu0
    %1522 = vmatprep.mubr.f32.mxu0 %v1258
    %1523 = vmatmul.mubr.f32.gmra.mxu0 %v1233
    %v1524 = vpop.f32.mrf.mxu0
    %v1525 = vadd.f32 %v1441, %v1524
    %v1526 = vpop.f32.mrf.mxu0
    %1527 = vmatprep.mubr.f32.mxu0 %v1261
    %1528 = vmatmul.mubr.f32.gmra.mxu0 %v1235
    %v1529 = vpop.f32.mrf.mxu0
    %v1530 = vadd.f32 %v1441, %v1529
    %v1531 = vpop.f32.mrf.mxu0
    %1532 = vmatprep.mubr.f32.mxu0 %v1263
    %1533 = vmatmul.mubr.f32.gmra.mxu0 %v1236
    %v1534 = vpop.f32.mrf.mxu0
    %v1535 = vadd.f32 %v1441, %v1534
    %v1536 = vpop.f32.mrf.mxu0
    %1537 = vmatprep.mubr.f32.mxu0 %v1265
    %1538 = vmatmul.mubr.f32.gmra.mxu0 %v1237
    %v1539 = vpop.f32.mrf.mxu0
    %v1540 = vadd.f32 %v1441, %v1539
    %v1541 = vpop.f32.mrf.mxu0
    %1542 = vmatprep.mubr.f32.mxu0 %v1267
    %1543 = vmatmul.mubr.f32.gmra.mxu0 %v1238
    %v1544 = vpop.f32.mrf.mxu0
    %v1545 = vadd.f32 %v1441, %v1544
    %v1546 = vpop.f32.mrf.mxu0
    %1547 = vdwg.mxu0
    %1548 = vmatprep.subr.mxu0 0.0
    %1549 = vmatpush1.msra.mxu0 %v1402
    %1550 = vmatprep.subr.mxu0 0.0
    %1551 = vmatpush1.msra.mxu0 %v1401
    %1552 = vmatprep.subr.mxu0 0.0
    %1553 = vmatpush1.msra.mxu0 %v1400
    %1554 = vmatprep.subr.mxu0 0.0
    %1555 = vmatpush1.msra.mxu0 %v1399
    %1556 = vmatprep.subr.mxu0 0.0
    %1557 = vmatpush1.msra.mxu0 %v1398
    %1558 = vmatprep.subr.mxu0 0.0
    %1559 = vmatpush1.msra.mxu0 %v1397
    %1560 = vmatprep.subr.mxu0 0.0
    %1561 = vmatpush1.msra.mxu0 %v1396
    %1562 = vmatprep.subr.mxu0 0.0
    %1563 = vmatpush1.msra.mxu0 %v1395
    %1564 = vmatprep.subr.mxu0 0.0
    %1565 = vmatpush1.msra.mxu0 %v1394
    %1566 = vmatprep.subr.mxu0 0.0
    %1567 = vmatpush1.msra.mxu0 %v1393
    %1568 = vmatprep.subr.mxu0 0.0
    %1569 = vmatpush1.msra.mxu0 %v1392
    %1570 = vmatprep.subr.mxu0 0.0
    %1571 = vmatpush1.msra.mxu0 %v1391
    %1572 = vmatprep.subr.mxu0 0.0
    %1573 = vmatpush1.msra.mxu0 %v1390
    %1574 = vmatprep.subr.mxu0 0.0
    %1575 = vmatpush1.msra.mxu0 %v1389
    %1576 = vmatprep.subr.mxu0 0.0
    %1577 = vmatpush1.msra.mxu0 %v1388
    %1578 = vmatprep.subr.mxu0 0.0
    %1579 = vmatpush1.msra.mxu0 %v1387
    %1580 = vmatprep.subr.mxu0 0.0
    %1581 = vmatpush2.msra.mxu0 %v1418
    %1582 = vmatprep.subr.mxu0 0.0
    %1583 = vmatpush2.msra.mxu0 %v1417
    %1584 = vmatprep.subr.mxu0 0.0
    %1585 = vmatpush2.msra.mxu0 %v1416
    %1586 = vmatprep.subr.mxu0 0.0
    %1587 = vmatpush2.msra.mxu0 %v1415
    %1588 = vmatprep.subr.mxu0 0.0
    %1589 = vmatpush2.msra.mxu0 %v1414
    %1590 = vmatprep.subr.mxu0 0.0
    %1591 = vmatpush2.msra.mxu0 %v1413
    %1592 = vmatprep.subr.mxu0 0.0
    %1593 = vmatpush2.msra.mxu0 %v1412
    %1594 = vmatprep.subr.mxu0 0.0
    %1595 = vmatpush2.msra.mxu0 %v1411
    %1596 = vmatprep.subr.mxu0 0.0
    %1597 = vmatpush2.msra.mxu0 %v1410
    %1598 = vmatprep.subr.mxu0 0.0
    %1599 = vmatpush2.msra.mxu0 %v1409
    %1600 = vmatprep.subr.mxu0 0.0
    %1601 = vmatpush2.msra.mxu0 %v1408
    %1602 = vmatprep.subr.mxu0 0.0
    %1603 = vmatpush2.msra.mxu0 %v1407
    %1604 = vmatprep.subr.mxu0 0.0
    %1605 = vmatpush2.msra.mxu0 %v1406
    %1606 = vmatprep.subr.mxu0 0.0
    %1607 = vmatpush2.msra.mxu0 %v1405
    %1608 = vmatprep.subr.mxu0 0.0
    %1609 = vmatpush2.msra.mxu0 %v1404
    %1610 = vmatprep.subr.mxu0 0.0
    %1611 = vmatpush2.msra.mxu0 %v1403
    %1612 = vmatprep.mubr.f32.mxu0 %v1304
    %1613 = vmatmul.mubr.f32.gmra.mxu0 %v1278
    %v1614 = vpop.f32.mrf.mxu0
    %v1615 = vadd.f32 %v1510, %v1614
    %v1616 = vpop.f32.mrf.mxu0
    %1617 = vmatprep.mubr.f32.mxu0 %v1306
    %1618 = vmatmul.mubr.f32.gmra.mxu0 %v1280
    %v1619 = vpop.f32.mrf.mxu0
    %v1620 = vadd.f32 %v1515, %v1619
    %v1621 = vpop.f32.mrf.mxu0
    %1622 = vmatprep.mubr.f32.mxu0 %v1308
    %1623 = vmatmul.mubr.f32.gmra.mxu0 %v1282
    %v1624 = vpop.f32.mrf.mxu0
    %v1625 = vadd.f32 %v1520, %v1624
    %v1626 = vpop.f32.mrf.mxu0
    %1627 = vmatprep.mubr.f32.mxu0 %v1310
    %1628 = vmatmul.mubr.f32.gmra.mxu0 %v1284
    %v1629 = vpop.f32.mrf.mxu0
    %v1630 = vadd.f32 %v1525, %v1629
    %v1631 = vpop.f32.mrf.mxu0
    %1632 = vmatprep.mubr.f32.mxu0 %v1313
    %1633 = vmatmul.mubr.f32.gmra.mxu0 %v1287
    %v1634 = vpop.f32.mrf.mxu0
    %v1635 = vadd.f32 %v1530, %v1634
    %v1636 = vpop.f32.mrf.mxu0
    %1637 = vmatprep.mubr.f32.mxu0 %v1315
    %1638 = vmatmul.mubr.f32.gmra.mxu0 %v1289
    %v1639 = vpop.f32.mrf.mxu0
    %v1640 = vadd.f32 %v1535, %v1639
    %v1641 = vpop.f32.mrf.mxu0
    %1642 = vmatprep.mubr.f32.mxu0 %v1317
    %1643 = vmatmul.mubr.f32.gmra.mxu0 %v1291
    %v1644 = vpop.f32.mrf.mxu0
    %v1645 = vadd.f32 %v1540, %v1644
    %v1646 = vpop.f32.mrf.mxu0
    %1647 = vmatprep.mubr.f32.mxu0 %v1319
    %1648 = vmatmul.mubr.f32.gmra.mxu0 %v1293
    %v1649 = vpop.f32.mrf.mxu0
    %v1650 = vadd.f32 %v1545, %v1649
    %v1651 = vpop.f32.mrf.mxu0
    %1652 = vdwg.mxu0
    %1653 = vmatprep.subr.mxu0 0.0
    %1654 = vmatpush1.msra.mxu0 %v1434
    %1655 = vmatprep.subr.mxu0 0.0
    %1656 = vmatpush1.msra.mxu0 %v1433
    %1657 = vmatprep.subr.mxu0 0.0
    %1658 = vmatpush1.msra.mxu0 %v1432
    %1659 = vmatprep.subr.mxu0 0.0
    %1660 = vmatpush1.msra.mxu0 %v1431
    %1661 = vmatprep.subr.mxu0 0.0
    %1662 = vmatpush1.msra.mxu0 %v1430
    %1663 = vmatprep.subr.mxu0 0.0
    %1664 = vmatpush1.msra.mxu0 %v1429
    %1665 = vmatprep.subr.mxu0 0.0
    %1666 = vmatpush1.msra.mxu0 %v1428
    %1667 = vmatprep.subr.mxu0 0.0
    %1668 = vmatpush1.msra.mxu0 %v1427
    %1669 = vmatprep.subr.mxu0 0.0
    %1670 = vmatpush1.msra.mxu0 %v1426
    %1671 = vmatprep.subr.mxu0 0.0
    %1672 = vmatpush1.msra.mxu0 %v1425
    %1673 = vmatprep.subr.mxu0 0.0
    %1674 = vmatpush1.msra.mxu0 %v1424
    %1675 = vmatprep.subr.mxu0 0.0
    %1676 = vmatpush1.msra.mxu0 %v1423
    %1677 = vmatprep.subr.mxu0 0.0
    %1678 = vmatpush1.msra.mxu0 %v1422
    %1679 = vmatprep.subr.mxu0 0.0
    %1680 = vmatpush1.msra.mxu0 %v1421
    %1681 = vmatprep.subr.mxu0 0.0
    %1682 = vmatpush1.msra.mxu0 %v1420
    %1683 = vmatprep.subr.mxu0 0.0
    %1684 = vmatpush1.msra.mxu0 %v1419
    %1685 = vmatprep.subr.mxu0 0.0
    %1686 = vmatpush2.msra.mxu0 0.0
    %1687 = vmatprep.subr.mxu0 0.0
    %1688 = vmatpush2.msra.mxu0 0.0
    %1689 = vmatprep.subr.mxu0 0.0
    %1690 = vmatpush2.msra.mxu0 0.0
    %1691 = vmatprep.subr.mxu0 0.0
    %1692 = vmatpush2.msra.mxu0 0.0
    %1693 = vmatprep.subr.mxu0 0.0
    %1694 = vmatpush2.msra.mxu0 0.0
    %1695 = vmatprep.subr.mxu0 0.0
    %1696 = vmatpush2.msra.mxu0 0.0
    %1697 = vmatprep.subr.mxu0 0.0
    %1698 = vmatpush2.msra.mxu0 0.0
    %1699 = vmatprep.subr.mxu0 0.0
    %1700 = vmatpush2.msra.mxu0 0.0
    %1701 = vmatprep.subr.mxu0 0.0
    %1702 = vmatpush2.msra.mxu0 0.0
    %1703 = vmatprep.subr.mxu0 0.0
    %1704 = vmatpush2.msra.mxu0 0.0
    %1705 = vmatprep.subr.mxu0 0.0
    %1706 = vmatpush2.msra.mxu0 0.0
    %1707 = vmatprep.subr.mxu0 0.0
    %1708 = vmatpush2.msra.mxu0 0.0
    %1709 = vmatprep.subr.mxu0 0.0
    %1710 = vmatpush2.msra.mxu0 0.0
    %1711 = vmatprep.subr.mxu0 0.0
    %1712 = vmatpush2.msra.mxu0 0.0
    %1713 = vmatprep.subr.mxu0 0.0
    %1714 = vmatpush2.msra.mxu0 0.0
    %1715 = vmatprep.subr.mxu0 0.0
    %1716 = vmatpush2.msra.mxu0 0.0
    %1717 = vmatprep.mubr.f32.mxu0 0.0
    %1718 = vmatmul.mubr.f32.gmra.mxu0 %v1330
    %v1719 = vpop.f32.mrf.mxu0
    %v1720 = vadd.f32 %v1615, %v1719
    %v1721 = vpop.f32.mrf.mxu0
    %1722 = vmatprep.mubr.f32.mxu0 0.0
    %1723 = vmatmul.mubr.f32.gmra.mxu0 %v1332
    %v1724 = vpop.f32.mrf.mxu0
    %v1725 = vadd.f32 %v1620, %v1724
    %v1726 = vpop.f32.mrf.mxu0
    %1727 = vmatprep.mubr.f32.mxu0 0.0
    %1728 = vmatmul.mubr.f32.gmra.mxu0 %v1334
    %v1729 = vpop.f32.mrf.mxu0
    %v1730 = vadd.f32 %v1625, %v1729
    %v1731 = vpop.f32.mrf.mxu0
    %1732 = vmatprep.mubr.f32.mxu0 0.0
    %1733 = vmatmul.mubr.f32.gmra.mxu0 %v1336
    %v1734 = vpop.f32.mrf.mxu0
    %v1735 = vadd.f32 %v1630, %v1734
    %v1736 = vpop.f32.mrf.mxu0
    %1737 = vmatprep.mubr.f32.mxu0 0.0
    %1738 = vmatmul.mubr.f32.gmra.mxu0 %v1339
    %v1739 = vpop.f32.mrf.mxu0
    %v1740 = vadd.f32 %v1635, %v1739
    %v1741 = vpop.f32.mrf.mxu0
    %1742 = vmatprep.mubr.f32.mxu0 0.0
    %1743 = vmatmul.mubr.f32.gmra.mxu0 %v1341
    %v1744 = vpop.f32.mrf.mxu0
    %v1745 = vadd.f32 %v1640, %v1744
    %v1746 = vpop.f32.mrf.mxu0
    %1747 = vmatprep.mubr.f32.mxu0 0.0
    %1748 = vmatmul.mubr.f32.gmra.mxu0 %v1343
    %v1749 = vpop.f32.mrf.mxu0
    %v1750 = vadd.f32 %v1645, %v1749
    %v1751 = vpop.f32.mrf.mxu0
    %1752 = vmatprep.mubr.f32.mxu0 0.0
    %1753 = vmatmul.mubr.f32.gmra.mxu0 %v1345
    %v1754 = vpop.f32.mrf.mxu0
    %v1755 = vadd.f32 %v1650, %v1754
    %v1756 = vpop.f32.mrf.mxu0
    %1757 = vdwg.mxu0
    %v1758 = vtanh.pop %v1720
    %v1759 = vtanh.pop %v1725
    %v1760 = vtanh.pop %v1730
    %v1761 = vtanh.pop %v1735
    %v1762 = vtanh.pop %v1740
    %v1763 = vtanh.pop %v1745
    %v1764 = vtanh.pop %v1750
    %v1765 = vtanh.pop %v1755
    %1766 = vst [vmem:[#allocation3 + $0x2] sm:$0xff] %v1758
    %1767 = vst [vmem:[#allocation3 + $0xa] sm:$0xff] %v1759
    %1768 = vst [vmem:[#allocation3 + $0x12] sm:$0xff] %v1760
    %1769 = vst [vmem:[#allocation3 + $0x1a] sm:$0xff] %v1761
    %1770 = vst [vmem:[#allocation3 + $0x2a] sm:$0xff] %v1762
    %1771 = vst [vmem:[#allocation3 + $0x32] sm:$0xff] %v1763
    %1772 = vst [vmem:[#allocation3 + $0x3a] sm:$0xff] %v1764
    %1773 = vst [vmem:[#allocation3 + $0x42] sm:$0xff] %v1765
    %v1774 = vld [vmem:[#allocation3] sm:$0xff]
    %v1775 = vld [vmem:[#allocation3 + $0x8] sm:$0xff]
    %v1776 = vld [vmem:[#allocation3 + $0x10] sm:$0xff]
    %v1777 = vld [vmem:[#allocation3 + $0x18] sm:$0xff]
    %v1778 = vld [vmem:[#allocation3 + $0x20] sm:$0xf]
    %v1779 = vld [vmem:[#allocation3 + $0x28] sm:$0xff]
    %v1780 = vld [vmem:[#allocation3 + $0x30] sm:$0xff]
    %v1781 = vld [vmem:[#allocation3 + $0x38] sm:$0xff]
    %v1782 = vld [vmem:[#allocation3 + $0x40] sm:$0xff]
    %v1783 = vld [vmem:[#allocation3 + $0x48] sm:$0xf]
    %v1794 = vrot.slane %v1774, 1
    %v1795 = vrot.slane %v1775, 1
    %v1796 = vsel %vm160, %v1794, %v1795
    %v1797 = vrot.slane %v1776, 1
    %v1798 = vsel %vm160, %v1795, %v1797
    %v1799 = vrot.slane %v1777, 1
    %v1800 = vsel %vm160, %v1797, %v1799
    %v1801 = vrot.slane %v1778, 1
    %v1802 = vsel %vm160, %v1799, %v1801
    %v1803 = vrot.slane %v1779, 1
    %v1804 = vrot.slane %v1780, 1
    %v1805 = vsel %vm160, %v1803, %v1804
    %v1806 = vrot.slane %v1781, 1
    %v1807 = vsel %vm160, %v1804, %v1806
    %v1808 = vrot.slane %v1782, 1
    %v1809 = vsel %vm160, %v1806, %v1808
    %v1810 = vrot.slane %v1783, 1
    %v1811 = vsel %vm160, %v1808, %v1810
    %v1820 = vrot.slane %v1774, 2
    %v1821 = vrot.slane %v1775, 2
    %v1822 = vsel %vm187, %v1820, %v1821
    %v1823 = vrot.slane %v1776, 2
    %v1824 = vsel %vm187, %v1821, %v1823
    %v1825 = vrot.slane %v1777, 2
    %v1826 = vsel %vm187, %v1823, %v1825
    %v1827 = vrot.slane %v1778, 2
    %v1828 = vsel %vm187, %v1825, %v1827
    %v1829 = vrot.slane %v1779, 2
    %v1830 = vrot.slane %v1780, 2
    %v1831 = vsel %vm187, %v1829, %v1830
    %v1832 = vrot.slane %v1781, 2
    %v1833 = vsel %vm187, %v1830, %v1832
    %v1834 = vrot.slane %v1782, 2
    %v1835 = vsel %vm187, %v1832, %v1834
    %v1836 = vrot.slane %v1783, 2
    %v1837 = vsel %vm187, %v1834, %v1836
    %v1846 = vrot.slane %v1774, 3
    %v1847 = vrot.slane %v1775, 3
    %v1848 = vsel %vm214, %v1846, %v1847
    %v1849 = vrot.slane %v1776, 3
    %v1850 = vsel %vm214, %v1847, %v1849
    %v1851 = vrot.slane %v1777, 3
    %v1852 = vsel %vm214, %v1849, %v1851
    %v1853 = vrot.slane %v1778, 3
    %v1854 = vsel %vm214, %v1851, %v1853
    %v1855 = vrot.slane %v1779, 3
    %v1856 = vrot.slane %v1780, 3
    %v1857 = vsel %vm214, %v1855, %v1856
    %v1858 = vrot.slane %v1781, 3
    %v1859 = vsel %vm214, %v1856, %v1858
    %v1860 = vrot.slane %v1782, 3
    %v1861 = vsel %vm214, %v1858, %v1860
    %v1862 = vrot.slane %v1783, 3
    %v1863 = vsel %vm214, %v1860, %v1862
    %v1872 = vrot.slane %v1774, 4
    %v1873 = vrot.slane %v1775, 4
    %v1874 = vsel %vm241, %v1872, %v1873
    %v1875 = vrot.slane %v1776, 4
    %v1876 = vsel %vm241, %v1873, %v1875
    %v1877 = vrot.slane %v1777, 4
    %v1878 = vsel %vm241, %v1875, %v1877
    %v1879 = vrot.slane %v1778, 4
    %v1880 = vsel %vm241, %v1877, %v1879
    %v1881 = vrot.slane %v1779, 4
    %v1882 = vrot.slane %v1780, 4
    %v1883 = vsel %vm241, %v1881, %v1882
    %v1884 = vrot.slane %v1781, 4
    %v1885 = vsel %vm241, %v1882, %v1884
    %v1886 = vrot.slane %v1782, 4
    %v1887 = vsel %vm241, %v1884, %v1886
    %v1888 = vrot.slane %v1783, 4
    %v1889 = vsel %vm241, %v1886, %v1888
    %s1898 = scalar_lea.vmem [#allocation7], 1920
    %v1899 = vld [vmem:[%s1898] sm:$0xff]
    %v1900 = vld [vmem:[%s1898 + $0x8] sm:$0xff]
    %v1901 = vld [vmem:[%s1898 + $0x10] sm:$0xff]
    %v1902 = vld [vmem:[%s1898 + $0x18] sm:$0xff]
    %v1903 = vld [vmem:[%s1898 + $0x20] sm:$0xff]
    %v1904 = vld [vmem:[%s1898 + $0x28] sm:$0xff]
    %v1905 = vld [vmem:[%s1898 + $0x30] sm:$0xff]
    %v1906 = vld [vmem:[%s1898 + $0x38] sm:$0xff]
    %v1907 = vld [vmem:[%s1898 + $0x40] sm:$0xff]
    %v1908 = vld [vmem:[%s1898 + $0x48] sm:$0xff]
    %v1909 = vld [vmem:[%s1898 + $0x50] sm:$0xff]
    %v1910 = vld [vmem:[%s1898 + $0x58] sm:$0xff]
    %v1911 = vld [vmem:[%s1898 + $0x60] sm:$0xff]
    %v1912 = vld [vmem:[%s1898 + $0x68] sm:$0xff]
    %v1913 = vld [vmem:[%s1898 + $0x70] sm:$0xff]
    %v1914 = vld [vmem:[%s1898 + $0x78] sm:$0xff]
    %v1915 = vld [vmem:[%s1898 + $0x80] sm:$0xff]
    %v1916 = vld [vmem:[%s1898 + $0x88] sm:$0xff]
    %v1917 = vld [vmem:[%s1898 + $0x90] sm:$0xff]
    %v1918 = vld [vmem:[%s1898 + $0x98] sm:$0xff]
    %v1919 = vld [vmem:[%s1898 + $0xa0] sm:$0xff]
    %v1920 = vld [vmem:[%s1898 + $0xa8] sm:$0xff]
    %v1921 = vld [vmem:[%s1898 + $0xb0] sm:$0xff]
    %v1922 = vld [vmem:[%s1898 + $0xb8] sm:$0xff]
    %v1923 = vld [vmem:[%s1898 + $0xc0] sm:$0xff]
    %v1924 = vld [vmem:[%s1898 + $0xc8] sm:$0xff]
    %v1925 = vld [vmem:[%s1898 + $0xd0] sm:$0xff]
    %v1926 = vld [vmem:[%s1898 + $0xd8] sm:$0xff]
    %v1927 = vld [vmem:[%s1898 + $0xe0] sm:$0xff]
    %v1928 = vld [vmem:[%s1898 + $0xe8] sm:$0xff]
    %v1929 = vld [vmem:[%s1898 + $0xf0] sm:$0xff]
    %v1930 = vld [vmem:[%s1898 + $0xf8] sm:$0xff]
    %v1931 = vld [vmem:[%s1898 + $0x100] sm:$0xff]
    %v1932 = vld [vmem:[%s1898 + $0x108] sm:$0xff]
    %v1933 = vld [vmem:[%s1898 + $0x110] sm:$0xff]
    %v1934 = vld [vmem:[%s1898 + $0x118] sm:$0xff]
    %v1935 = vld [vmem:[%s1898 + $0x120] sm:$0xff]
    %v1936 = vld [vmem:[%s1898 + $0x128] sm:$0xff]
    %v1937 = vld [vmem:[%s1898 + $0x130] sm:$0xff]
    %v1938 = vld [vmem:[%s1898 + $0x138] sm:$0xff]
    %v1939 = vld [vmem:[%s1898 + $0x140] sm:$0xff]
    %v1940 = vld [vmem:[%s1898 + $0x148] sm:$0xff]
    %v1941 = vld [vmem:[%s1898 + $0x150] sm:$0xff]
    %v1942 = vld [vmem:[%s1898 + $0x158] sm:$0xff]
    %v1943 = vld [vmem:[%s1898 + $0x160] sm:$0xff]
    %v1944 = vld [vmem:[%s1898 + $0x168] sm:$0xff]
    %v1945 = vld [vmem:[%s1898 + $0x170] sm:$0xff]
    %v1946 = vld [vmem:[%s1898 + $0x178] sm:$0xff]
    %v1947 = vld [vmem:[%s1898 + $0x180] sm:$0xff]
    %v1948 = vld [vmem:[%s1898 + $0x188] sm:$0xff]
    %v1949 = vld [vmem:[%s1898 + $0x190] sm:$0xff]
    %v1950 = vld [vmem:[%s1898 + $0x198] sm:$0xff]
    %v1951 = vld [vmem:[%s1898 + $0x1a0] sm:$0xff]
    %v1952 = vld [vmem:[%s1898 + $0x1a8] sm:$0xff]
    %v1953 = vld [vmem:[%s1898 + $0x1b0] sm:$0xff]
    %v1954 = vld [vmem:[%s1898 + $0x1b8] sm:$0xff]
    %v1955 = vld [vmem:[%s1898 + $0x1c0] sm:$0xff]
    %v1956 = vld [vmem:[%s1898 + $0x1c8] sm:$0xff]
    %v1957 = vld [vmem:[%s1898 + $0x1d0] sm:$0xff]
    %v1958 = vld [vmem:[%s1898 + $0x1d8] sm:$0xff]
    %v1959 = vld [vmem:[%s1898 + $0x1e0] sm:$0xff]
    %v1960 = vld [vmem:[%s1898 + $0x1e8] sm:$0xff]
    %v1961 = vld [vmem:[%s1898 + $0x1f0] sm:$0xff]
    %v1962 = vld [vmem:[%s1898 + $0x1f8] sm:$0xff]
    %v1963 = vld [vmem:[%s1898 + $0x200] sm:$0xff]
    %v1964 = vld [vmem:[%s1898 + $0x208] sm:$0xff]
    %v1965 = vld [vmem:[%s1898 + $0x210] sm:$0xff]
    %v1966 = vld [vmem:[%s1898 + $0x218] sm:$0xff]
    %v1967 = vld [vmem:[%s1898 + $0x220] sm:$0xff]
    %v1968 = vld [vmem:[%s1898 + $0x228] sm:$0xff]
    %v1969 = vld [vmem:[%s1898 + $0x230] sm:$0xff]
    %v1970 = vld [vmem:[%s1898 + $0x238] sm:$0xff]
    %v1971 = vld [vmem:[%s1898 + $0x240] sm:$0xff]
    %v1972 = vld [vmem:[%s1898 + $0x248] sm:$0xff]
    %v1973 = vld [vmem:[%s1898 + $0x250] sm:$0xff]
    %v1974 = vld [vmem:[%s1898 + $0x258] sm:$0xff]
    %v1975 = vld [vmem:[%s1898 + $0x260] sm:$0xff]
    %v1976 = vld [vmem:[%s1898 + $0x268] sm:$0xff]
    %v1977 = vld [vmem:[%s1898 + $0x270] sm:$0xff]
    %v1978 = vld [vmem:[%s1898 + $0x278] sm:$0xff]
    %s1979 = scalar_lea.vmem [#allocation9], 3
    %v1980 = vld [vmem:[%s1979] sm:$0x1]
    %v1982 = vlaneseq
    %v1983 = vshrl.u32 %v1982, 7
    %v1984 = vsub.s32 0, %v1983
    %v1985 = vrot.slane %v1980, %v1984
    %1987 = vmatprep.subr.mxu0 0.0
    %1988 = vmatpush1.msra.mxu0 %v1914
    %1989 = vmatprep.subr.mxu0 0.0
    %1990 = vmatpush1.msra.mxu0 %v1913
    %1991 = vmatprep.subr.mxu0 0.0
    %1992 = vmatpush1.msra.mxu0 %v1912
    %1993 = vmatprep.subr.mxu0 0.0
    %1994 = vmatpush1.msra.mxu0 %v1911
    %1995 = vmatprep.subr.mxu0 0.0
    %1996 = vmatpush1.msra.mxu0 %v1910
    %1997 = vmatprep.subr.mxu0 0.0
    %1998 = vmatpush1.msra.mxu0 %v1909
    %1999 = vmatprep.subr.mxu0 0.0
    %2000 = vmatpush1.msra.mxu0 %v1908
    %2001 = vmatprep.subr.mxu0 0.0
    %2002 = vmatpush1.msra.mxu0 %v1907
    %2003 = vmatprep.subr.mxu0 0.0
    %2004 = vmatpush1.msra.mxu0 %v1906
    %2005 = vmatprep.subr.mxu0 0.0
    %2006 = vmatpush1.msra.mxu0 %v1905
    %2007 = vmatprep.subr.mxu0 0.0
    %2008 = vmatpush1.msra.mxu0 %v1904
    %2009 = vmatprep.subr.mxu0 0.0
    %2010 = vmatpush1.msra.mxu0 %v1903
    %2011 = vmatprep.subr.mxu0 0.0
    %2012 = vmatpush1.msra.mxu0 %v1902
    %2013 = vmatprep.subr.mxu0 0.0
    %2014 = vmatpush1.msra.mxu0 %v1901
    %2015 = vmatprep.subr.mxu0 0.0
    %2016 = vmatpush1.msra.mxu0 %v1900
    %2017 = vmatprep.subr.mxu0 0.0
    %2018 = vmatpush1.msra.mxu0 %v1899
    %2019 = vmatprep.subr.mxu0 0.0
    %2020 = vmatpush2.msra.mxu0 %v1930
    %2021 = vmatprep.subr.mxu0 0.0
    %2022 = vmatpush2.msra.mxu0 %v1929
    %2023 = vmatprep.subr.mxu0 0.0
    %2024 = vmatpush2.msra.mxu0 %v1928
    %2025 = vmatprep.subr.mxu0 0.0
    %2026 = vmatpush2.msra.mxu0 %v1927
    %2027 = vmatprep.subr.mxu0 0.0
    %2028 = vmatpush2.msra.mxu0 %v1926
    %2029 = vmatprep.subr.mxu0 0.0
    %2030 = vmatpush2.msra.mxu0 %v1925
    %2031 = vmatprep.subr.mxu0 0.0
    %2032 = vmatpush2.msra.mxu0 %v1924
    %2033 = vmatprep.subr.mxu0 0.0
    %2034 = vmatpush2.msra.mxu0 %v1923
    %2035 = vmatprep.subr.mxu0 0.0
    %2036 = vmatpush2.msra.mxu0 %v1922
    %2037 = vmatprep.subr.mxu0 0.0
    %2038 = vmatpush2.msra.mxu0 %v1921
    %2039 = vmatprep.subr.mxu0 0.0
    %2040 = vmatpush2.msra.mxu0 %v1920
    %2041 = vmatprep.subr.mxu0 0.0
    %2042 = vmatpush2.msra.mxu0 %v1919
    %2043 = vmatprep.subr.mxu0 0.0
    %2044 = vmatpush2.msra.mxu0 %v1918
    %2045 = vmatprep.subr.mxu0 0.0
    %2046 = vmatpush2.msra.mxu0 %v1917
    %2047 = vmatprep.subr.mxu0 0.0
    %2048 = vmatpush2.msra.mxu0 %v1916
    %2049 = vmatprep.subr.mxu0 0.0
    %2050 = vmatpush2.msra.mxu0 %v1915
    %2051 = vmatprep.mubr.f32.mxu0 %v1796
    %2052 = vmatmul.mubr.f32.gmra.mxu0 %v1774
    %v2053 = vpop.f32.mrf.mxu0
    %v2054 = vadd.f32 %v1985, %v2053
    %v2055 = vpop.f32.mrf.mxu0
    %2056 = vmatprep.mubr.f32.mxu0 %v1798
    %2057 = vmatmul.mubr.f32.gmra.mxu0 %v1775
    %v2058 = vpop.f32.mrf.mxu0
    %v2059 = vadd.f32 %v1985, %v2058
    %v2060 = vpop.f32.mrf.mxu0
    %2061 = vmatprep.mubr.f32.mxu0 %v1800
    %2062 = vmatmul.mubr.f32.gmra.mxu0 %v1776
    %v2063 = vpop.f32.mrf.mxu0
    %v2064 = vadd.f32 %v1985, %v2063
    %v2065 = vpop.f32.mrf.mxu0
    %2066 = vmatprep.mubr.f32.mxu0 %v1802
    %2067 = vmatmul.mubr.f32.gmra.mxu0 %v1777
    %v2068 = vpop.f32.mrf.mxu0
    %v2069 = vadd.f32 %v1985, %v2068
    %v2070 = vpop.f32.mrf.mxu0
    %2071 = vmatprep.mubr.f32.mxu0 %v1805
    %2072 = vmatmul.mubr.f32.gmra.mxu0 %v1779
    %v2073 = vpop.f32.mrf.mxu0
    %v2074 = vadd.f32 %v1985, %v2073
    %v2075 = vpop.f32.mrf.mxu0
    %2076 = vmatprep.mubr.f32.mxu0 %v1807
    %2077 = vmatmul.mubr.f32.gmra.mxu0 %v1780
    %v2078 = vpop.f32.mrf.mxu0
    %v2079 = vadd.f32 %v1985, %v2078
    %v2080 = vpop.f32.mrf.mxu0
    %2081 = vmatprep.mubr.f32.mxu0 %v1809
    %2082 = vmatmul.mubr.f32.gmra.mxu0 %v1781
    %v2083 = vpop.f32.mrf.mxu0
    %v2084 = vadd.f32 %v1985, %v2083
    %v2085 = vpop.f32.mrf.mxu0
    %2086 = vmatprep.mubr.f32.mxu0 %v1811
    %2087 = vmatmul.mubr.f32.gmra.mxu0 %v1782
    %v2088 = vpop.f32.mrf.mxu0
    %v2089 = vadd.f32 %v1985, %v2088
    %v2090 = vpop.f32.mrf.mxu0
    %2091 = vdwg.mxu0
    %2092 = vmatprep.subr.mxu0 0.0
    %2093 = vmatpush1.msra.mxu0 %v1946
    %2094 = vmatprep.subr.mxu0 0.0
    %2095 = vmatpush1.msra.mxu0 %v1945
    %2096 = vmatprep.subr.mxu0 0.0
    %2097 = vmatpush1.msra.mxu0 %v1944
    %2098 = vmatprep.subr.mxu0 0.0
    %2099 = vmatpush1.msra.mxu0 %v1943
    %2100 = vmatprep.subr.mxu0 0.0
    %2101 = vmatpush1.msra.mxu0 %v1942
    %2102 = vmatprep.subr.mxu0 0.0
    %2103 = vmatpush1.msra.mxu0 %v1941
    %2104 = vmatprep.subr.mxu0 0.0
    %2105 = vmatpush1.msra.mxu0 %v1940
    %2106 = vmatprep.subr.mxu0 0.0
    %2107 = vmatpush1.msra.mxu0 %v1939
    %2108 = vmatprep.subr.mxu0 0.0
    %2109 = vmatpush1.msra.mxu0 %v1938
    %2110 = vmatprep.subr.mxu0 0.0
    %2111 = vmatpush1.msra.mxu0 %v1937
    %2112 = vmatprep.subr.mxu0 0.0
    %2113 = vmatpush1.msra.mxu0 %v1936
    %2114 = vmatprep.subr.mxu0 0.0
    %2115 = vmatpush1.msra.mxu0 %v1935
    %2116 = vmatprep.subr.mxu0 0.0
    %2117 = vmatpush1.msra.mxu0 %v1934
    %2118 = vmatprep.subr.mxu0 0.0
    %2119 = vmatpush1.msra.mxu0 %v1933
    %2120 = vmatprep.subr.mxu0 0.0
    %2121 = vmatpush1.msra.mxu0 %v1932
    %2122 = vmatprep.subr.mxu0 0.0
    %2123 = vmatpush1.msra.mxu0 %v1931
    %2124 = vmatprep.subr.mxu0 0.0
    %2125 = vmatpush2.msra.mxu0 %v1962
    %2126 = vmatprep.subr.mxu0 0.0
    %2127 = vmatpush2.msra.mxu0 %v1961
    %2128 = vmatprep.subr.mxu0 0.0
    %2129 = vmatpush2.msra.mxu0 %v1960
    %2130 = vmatprep.subr.mxu0 0.0
    %2131 = vmatpush2.msra.mxu0 %v1959
    %2132 = vmatprep.subr.mxu0 0.0
    %2133 = vmatpush2.msra.mxu0 %v1958
    %2134 = vmatprep.subr.mxu0 0.0
    %2135 = vmatpush2.msra.mxu0 %v1957
    %2136 = vmatprep.subr.mxu0 0.0
    %2137 = vmatpush2.msra.mxu0 %v1956
    %2138 = vmatprep.subr.mxu0 0.0
    %2139 = vmatpush2.msra.mxu0 %v1955
    %2140 = vmatprep.subr.mxu0 0.0
    %2141 = vmatpush2.msra.mxu0 %v1954
    %2142 = vmatprep.subr.mxu0 0.0
    %2143 = vmatpush2.msra.mxu0 %v1953
    %2144 = vmatprep.subr.mxu0 0.0
    %2145 = vmatpush2.msra.mxu0 %v1952
    %2146 = vmatprep.subr.mxu0 0.0
    %2147 = vmatpush2.msra.mxu0 %v1951
    %2148 = vmatprep.subr.mxu0 0.0
    %2149 = vmatpush2.msra.mxu0 %v1950
    %2150 = vmatprep.subr.mxu0 0.0
    %2151 = vmatpush2.msra.mxu0 %v1949
    %2152 = vmatprep.subr.mxu0 0.0
    %2153 = vmatpush2.msra.mxu0 %v1948
    %2154 = vmatprep.subr.mxu0 0.0
    %2155 = vmatpush2.msra.mxu0 %v1947
    %2156 = vmatprep.mubr.f32.mxu0 %v1848
    %2157 = vmatmul.mubr.f32.gmra.mxu0 %v1822
    %v2158 = vpop.f32.mrf.mxu0
    %v2159 = vadd.f32 %v2054, %v2158
    %v2160 = vpop.f32.mrf.mxu0
    %2161 = vmatprep.mubr.f32.mxu0 %v1850
    %2162 = vmatmul.mubr.f32.gmra.mxu0 %v1824
    %v2163 = vpop.f32.mrf.mxu0
    %v2164 = vadd.f32 %v2059, %v2163
    %v2165 = vpop.f32.mrf.mxu0
    %2166 = vmatprep.mubr.f32.mxu0 %v1852
    %2167 = vmatmul.mubr.f32.gmra.mxu0 %v1826
    %v2168 = vpop.f32.mrf.mxu0
    %v2169 = vadd.f32 %v2064, %v2168
    %v2170 = vpop.f32.mrf.mxu0
    %2171 = vmatprep.mubr.f32.mxu0 %v1854
    %2172 = vmatmul.mubr.f32.gmra.mxu0 %v1828
    %v2173 = vpop.f32.mrf.mxu0
    %v2174 = vadd.f32 %v2069, %v2173
    %v2175 = vpop.f32.mrf.mxu0
    %2176 = vmatprep.mubr.f32.mxu0 %v1857
    %2177 = vmatmul.mubr.f32.gmra.mxu0 %v1831
    %v2178 = vpop.f32.mrf.mxu0
    %v2179 = vadd.f32 %v2074, %v2178
    %v2180 = vpop.f32.mrf.mxu0
    %2181 = vmatprep.mubr.f32.mxu0 %v1859
    %2182 = vmatmul.mubr.f32.gmra.mxu0 %v1833
    %v2183 = vpop.f32.mrf.mxu0
    %v2184 = vadd.f32 %v2079, %v2183
    %v2185 = vpop.f32.mrf.mxu0
    %2186 = vmatprep.mubr.f32.mxu0 %v1861
    %2187 = vmatmul.mubr.f32.gmra.mxu0 %v1835
    %v2188 = vpop.f32.mrf.mxu0
    %v2189 = vadd.f32 %v2084, %v2188
    %v2190 = vpop.f32.mrf.mxu0
    %2191 = vmatprep.mubr.f32.mxu0 %v1863
    %2192 = vmatmul.mubr.f32.gmra.mxu0 %v1837
    %v2193 = vpop.f32.mrf.mxu0
    %v2194 = vadd.f32 %v2089, %v2193
    %v2195 = vpop.f32.mrf.mxu0
    %2196 = vdwg.mxu0
    %2197 = vmatprep.subr.mxu0 0.0
    %2198 = vmatpush1.msra.mxu0 %v1978
    %2199 = vmatprep.subr.mxu0 0.0
    %2200 = vmatpush1.msra.mxu0 %v1977
    %2201 = vmatprep.subr.mxu0 0.0
    %2202 = vmatpush1.msra.mxu0 %v1976
    %2203 = vmatprep.subr.mxu0 0.0
    %2204 = vmatpush1.msra.mxu0 %v1975
    %2205 = vmatprep.subr.mxu0 0.0
    %2206 = vmatpush1.msra.mxu0 %v1974
    %2207 = vmatprep.subr.mxu0 0.0
    %2208 = vmatpush1.msra.mxu0 %v1973
    %2209 = vmatprep.subr.mxu0 0.0
    %2210 = vmatpush1.msra.mxu0 %v1972
    %2211 = vmatprep.subr.mxu0 0.0
    %2212 = vmatpush1.msra.mxu0 %v1971
    %2213 = vmatprep.subr.mxu0 0.0
    %2214 = vmatpush1.msra.mxu0 %v1970
    %2215 = vmatprep.subr.mxu0 0.0
    %2216 = vmatpush1.msra.mxu0 %v1969
    %2217 = vmatprep.subr.mxu0 0.0
    %2218 = vmatpush1.msra.mxu0 %v1968
    %2219 = vmatprep.subr.mxu0 0.0
    %2220 = vmatpush1.msra.mxu0 %v1967
    %2221 = vmatprep.subr.mxu0 0.0
    %2222 = vmatpush1.msra.mxu0 %v1966
    %2223 = vmatprep.subr.mxu0 0.0
    %2224 = vmatpush1.msra.mxu0 %v1965
    %2225 = vmatprep.subr.mxu0 0.0
    %2226 = vmatpush1.msra.mxu0 %v1964
    %2227 = vmatprep.subr.mxu0 0.0
    %2228 = vmatpush1.msra.mxu0 %v1963
    %2229 = vmatprep.subr.mxu0 0.0
    %2230 = vmatpush2.msra.mxu0 0.0
    %2231 = vmatprep.subr.mxu0 0.0
    %2232 = vmatpush2.msra.mxu0 0.0
    %2233 = vmatprep.subr.mxu0 0.0
    %2234 = vmatpush2.msra.mxu0 0.0
    %2235 = vmatprep.subr.mxu0 0.0
    %2236 = vmatpush2.msra.mxu0 0.0
    %2237 = vmatprep.subr.mxu0 0.0
    %2238 = vmatpush2.msra.mxu0 0.0
    %2239 = vmatprep.subr.mxu0 0.0
    %2240 = vmatpush2.msra.mxu0 0.0
    %2241 = vmatprep.subr.mxu0 0.0
    %2242 = vmatpush2.msra.mxu0 0.0
    %2243 = vmatprep.subr.mxu0 0.0
    %2244 = vmatpush2.msra.mxu0 0.0
    %2245 = vmatprep.subr.mxu0 0.0
    %2246 = vmatpush2.msra.mxu0 0.0
    %2247 = vmatprep.subr.mxu0 0.0
    %2248 = vmatpush2.msra.mxu0 0.0
    %2249 = vmatprep.subr.mxu0 0.0
    %2250 = vmatpush2.msra.mxu0 0.0
    %2251 = vmatprep.subr.mxu0 0.0
    %2252 = vmatpush2.msra.mxu0 0.0
    %2253 = vmatprep.subr.mxu0 0.0
    %2254 = vmatpush2.msra.mxu0 0.0
    %2255 = vmatprep.subr.mxu0 0.0
    %2256 = vmatpush2.msra.mxu0 0.0
    %2257 = vmatprep.subr.mxu0 0.0
    %2258 = vmatpush2.msra.mxu0 0.0
    %2259 = vmatprep.subr.mxu0 0.0
    %2260 = vmatpush2.msra.mxu0 0.0
    %2261 = vmatprep.mubr.f32.mxu0 0.0
    %2262 = vmatmul.mubr.f32.gmra.mxu0 %v1874
    %v2263 = vpop.f32.mrf.mxu0
    %v2264 = vadd.f32 %v2159, %v2263
    %v2265 = vpop.f32.mrf.mxu0
    %2266 = vmatprep.mubr.f32.mxu0 0.0
    %2267 = vmatmul.mubr.f32.gmra.mxu0 %v1876
    %v2268 = vpop.f32.mrf.mxu0
    %v2269 = vadd.f32 %v2164, %v2268
    %v2270 = vpop.f32.mrf.mxu0
    %2271 = vmatprep.mubr.f32.mxu0 0.0
    %2272 = vmatmul.mubr.f32.gmra.mxu0 %v1878
    %v2273 = vpop.f32.mrf.mxu0
    %v2274 = vadd.f32 %v2169, %v2273
    %v2275 = vpop.f32.mrf.mxu0
    %2276 = vmatprep.mubr.f32.mxu0 0.0
    %2277 = vmatmul.mubr.f32.gmra.mxu0 %v1880
    %v2278 = vpop.f32.mrf.mxu0
    %v2279 = vadd.f32 %v2174, %v2278
    %v2280 = vpop.f32.mrf.mxu0
    %2281 = vmatprep.mubr.f32.mxu0 0.0
    %2282 = vmatmul.mubr.f32.gmra.mxu0 %v1883
    %v2283 = vpop.f32.mrf.mxu0
    %v2284 = vadd.f32 %v2179, %v2283
    %v2285 = vpop.f32.mrf.mxu0
    %2286 = vmatprep.mubr.f32.mxu0 0.0
    %2287 = vmatmul.mubr.f32.gmra.mxu0 %v1885
    %v2288 = vpop.f32.mrf.mxu0
    %v2289 = vadd.f32 %v2184, %v2288
    %v2290 = vpop.f32.mrf.mxu0
    %2291 = vmatprep.mubr.f32.mxu0 0.0
    %2292 = vmatmul.mubr.f32.gmra.mxu0 %v1887
    %v2293 = vpop.f32.mrf.mxu0
    %v2294 = vadd.f32 %v2189, %v2293
    %v2295 = vpop.f32.mrf.mxu0
    %2296 = vmatprep.mubr.f32.mxu0 0.0
    %2297 = vmatmul.mubr.f32.gmra.mxu0 %v1889
    %v2298 = vpop.f32.mrf.mxu0
    %v2299 = vadd.f32 %v2194, %v2298
    %v2300 = vpop.f32.mrf.mxu0
    %2301 = vdwg.mxu0
    %v2302 = vtanh.pop %v2264
    %v2303 = vtanh.pop %v2269
    %v2304 = vtanh.pop %v2274
    %v2305 = vtanh.pop %v2279
    %v2306 = vtanh.pop %v2284
    %v2307 = vtanh.pop %v2289
    %v2308 = vtanh.pop %v2294
    %v2309 = vtanh.pop %v2299
    %2310 = vst [vmem:[#allocation2 + $0x2] sm:$0xff] %v2302
    %2311 = vst [vmem:[#allocation2 + $0xa] sm:$0xff] %v2303
    %2312 = vst [vmem:[#allocation2 + $0x12] sm:$0xff] %v2304
    %2313 = vst [vmem:[#allocation2 + $0x1a] sm:$0xff] %v2305
    %2314 = vst [vmem:[#allocation2 + $0x2a] sm:$0xff] %v2306
    %2315 = vst [vmem:[#allocation2 + $0x32] sm:$0xff] %v2307
    %2316 = vst [vmem:[#allocation2 + $0x3a] sm:$0xff] %v2308
    %2317 = vst [vmem:[#allocation2 + $0x42] sm:$0xff] %v2309
    %v2318 = vld [vmem:[#allocation2] sm:$0xff]
    %v2319 = vld [vmem:[#allocation2 + $0x8] sm:$0xff]
    %v2320 = vld [vmem:[#allocation2 + $0x10] sm:$0xff]
    %v2321 = vld [vmem:[#allocation2 + $0x18] sm:$0xff]
    %v2322 = vld [vmem:[#allocation2 + $0x20] sm:$0xf]
    %v2323 = vld [vmem:[#allocation2 + $0x28] sm:$0xff]
    %v2324 = vld [vmem:[#allocation2 + $0x30] sm:$0xff]
    %v2325 = vld [vmem:[#allocation2 + $0x38] sm:$0xff]
    %v2326 = vld [vmem:[#allocation2 + $0x40] sm:$0xff]
    %v2327 = vld [vmem:[#allocation2 + $0x48] sm:$0xf]
    %v2338 = vrot.slane %v2318, 1
    %v2339 = vrot.slane %v2319, 1
    %v2340 = vsel %vm160, %v2338, %v2339
    %v2341 = vrot.slane %v2320, 1
    %v2342 = vsel %vm160, %v2339, %v2341
    %v2343 = vrot.slane %v2321, 1
    %v2344 = vsel %vm160, %v2341, %v2343
    %v2345 = vrot.slane %v2322, 1
    %v2346 = vsel %vm160, %v2343, %v2345
    %v2347 = vrot.slane %v2323, 1
    %v2348 = vrot.slane %v2324, 1
    %v2349 = vsel %vm160, %v2347, %v2348
    %v2350 = vrot.slane %v2325, 1
    %v2351 = vsel %vm160, %v2348, %v2350
    %v2352 = vrot.slane %v2326, 1
    %v2353 = vsel %vm160, %v2350, %v2352
    %v2354 = vrot.slane %v2327, 1
    %v2355 = vsel %vm160, %v2352, %v2354
    %v2364 = vrot.slane %v2318, 2
    %v2365 = vrot.slane %v2319, 2
    %v2366 = vsel %vm187, %v2364, %v2365
    %v2367 = vrot.slane %v2320, 2
    %v2368 = vsel %vm187, %v2365, %v2367
    %v2369 = vrot.slane %v2321, 2
    %v2370 = vsel %vm187, %v2367, %v2369
    %v2371 = vrot.slane %v2322, 2
    %v2372 = vsel %vm187, %v2369, %v2371
    %v2373 = vrot.slane %v2323, 2
    %v2374 = vrot.slane %v2324, 2
    %v2375 = vsel %vm187, %v2373, %v2374
    %v2376 = vrot.slane %v2325, 2
    %v2377 = vsel %vm187, %v2374, %v2376
    %v2378 = vrot.slane %v2326, 2
    %v2379 = vsel %vm187, %v2376, %v2378
    %v2380 = vrot.slane %v2327, 2
    %v2381 = vsel %vm187, %v2378, %v2380
    %v2390 = vrot.slane %v2318, 3
    %v2391 = vrot.slane %v2319, 3
    %v2392 = vsel %vm214, %v2390, %v2391
    %v2393 = vrot.slane %v2320, 3
    %v2394 = vsel %vm214, %v2391, %v2393
    %v2395 = vrot.slane %v2321, 3
    %v2396 = vsel %vm214, %v2393, %v2395
    %v2397 = vrot.slane %v2322, 3
    %v2398 = vsel %vm214, %v2395, %v2397
    %v2399 = vrot.slane %v2323, 3
    %v2400 = vrot.slane %v2324, 3
    %v2401 = vsel %vm214, %v2399, %v2400
    %v2402 = vrot.slane %v2325, 3
    %v2403 = vsel %vm214, %v2400, %v2402
    %v2404 = vrot.slane %v2326, 3
    %v2405 = vsel %vm214, %v2402, %v2404
    %v2406 = vrot.slane %v2327, 3
    %v2407 = vsel %vm214, %v2404, %v2406
    %v2416 = vrot.slane %v2318, 4
    %v2417 = vrot.slane %v2319, 4
    %v2418 = vsel %vm241, %v2416, %v2417
    %v2419 = vrot.slane %v2320, 4
    %v2420 = vsel %vm241, %v2417, %v2419
    %v2421 = vrot.slane %v2321, 4
    %v2422 = vsel %vm241, %v2419, %v2421
    %v2423 = vrot.slane %v2322, 4
    %v2424 = vsel %vm241, %v2421, %v2423
    %v2425 = vrot.slane %v2323, 4
    %v2426 = vrot.slane %v2324, 4
    %v2427 = vsel %vm241, %v2425, %v2426
    %v2428 = vrot.slane %v2325, 4
    %v2429 = vsel %vm241, %v2426, %v2428
    %v2430 = vrot.slane %v2326, 4
    %v2431 = vsel %vm241, %v2428, %v2430
    %v2432 = vrot.slane %v2327, 4
    %v2433 = vsel %vm241, %v2430, %v2432
    %s2442 = scalar_lea.vmem [#allocation7], 2560
    %v2443 = vld [vmem:[%s2442] sm:$0xff]
    %v2444 = vld [vmem:[%s2442 + $0x8] sm:$0xff]
    %v2445 = vld [vmem:[%s2442 + $0x10] sm:$0xff]
    %v2446 = vld [vmem:[%s2442 + $0x18] sm:$0xff]
    %v2447 = vld [vmem:[%s2442 + $0x20] sm:$0xff]
    %v2448 = vld [vmem:[%s2442 + $0x28] sm:$0xff]
    %v2449 = vld [vmem:[%s2442 + $0x30] sm:$0xff]
    %v2450 = vld [vmem:[%s2442 + $0x38] sm:$0xff]
    %v2451 = vld [vmem:[%s2442 + $0x40] sm:$0xff]
    %v2452 = vld [vmem:[%s2442 + $0x48] sm:$0xff]
    %v2453 = vld [vmem:[%s2442 + $0x50] sm:$0xff]
    %v2454 = vld [vmem:[%s2442 + $0x58] sm:$0xff]
    %v2455 = vld [vmem:[%s2442 + $0x60] sm:$0xff]
    %v2456 = vld [vmem:[%s2442 + $0x68] sm:$0xff]
    %v2457 = vld [vmem:[%s2442 + $0x70] sm:$0xff]
    %v2458 = vld [vmem:[%s2442 + $0x78] sm:$0xff]
    %v2459 = vld [vmem:[%s2442 + $0x80] sm:$0xff]
    %v2460 = vld [vmem:[%s2442 + $0x88] sm:$0xff]
    %v2461 = vld [vmem:[%s2442 + $0x90] sm:$0xff]
    %v2462 = vld [vmem:[%s2442 + $0x98] sm:$0xff]
    %v2463 = vld [vmem:[%s2442 + $0xa0] sm:$0xff]
    %v2464 = vld [vmem:[%s2442 + $0xa8] sm:$0xff]
    %v2465 = vld [vmem:[%s2442 + $0xb0] sm:$0xff]
    %v2466 = vld [vmem:[%s2442 + $0xb8] sm:$0xff]
    %v2467 = vld [vmem:[%s2442 + $0xc0] sm:$0xff]
    %v2468 = vld [vmem:[%s2442 + $0xc8] sm:$0xff]
    %v2469 = vld [vmem:[%s2442 + $0xd0] sm:$0xff]
    %v2470 = vld [vmem:[%s2442 + $0xd8] sm:$0xff]
    %v2471 = vld [vmem:[%s2442 + $0xe0] sm:$0xff]
    %v2472 = vld [vmem:[%s2442 + $0xe8] sm:$0xff]
    %v2473 = vld [vmem:[%s2442 + $0xf0] sm:$0xff]
    %v2474 = vld [vmem:[%s2442 + $0xf8] sm:$0xff]
    %v2475 = vld [vmem:[%s2442 + $0x100] sm:$0xff]
    %v2476 = vld [vmem:[%s2442 + $0x108] sm:$0xff]
    %v2477 = vld [vmem:[%s2442 + $0x110] sm:$0xff]
    %v2478 = vld [vmem:[%s2442 + $0x118] sm:$0xff]
    %v2479 = vld [vmem:[%s2442 + $0x120] sm:$0xff]
    %v2480 = vld [vmem:[%s2442 + $0x128] sm:$0xff]
    %v2481 = vld [vmem:[%s2442 + $0x130] sm:$0xff]
    %v2482 = vld [vmem:[%s2442 + $0x138] sm:$0xff]
    %v2483 = vld [vmem:[%s2442 + $0x140] sm:$0xff]
    %v2484 = vld [vmem:[%s2442 + $0x148] sm:$0xff]
    %v2485 = vld [vmem:[%s2442 + $0x150] sm:$0xff]
    %v2486 = vld [vmem:[%s2442 + $0x158] sm:$0xff]
    %v2487 = vld [vmem:[%s2442 + $0x160] sm:$0xff]
    %v2488 = vld [vmem:[%s2442 + $0x168] sm:$0xff]
    %v2489 = vld [vmem:[%s2442 + $0x170] sm:$0xff]
    %v2490 = vld [vmem:[%s2442 + $0x178] sm:$0xff]
    %v2491 = vld [vmem:[%s2442 + $0x180] sm:$0xff]
    %v2492 = vld [vmem:[%s2442 + $0x188] sm:$0xff]
    %v2493 = vld [vmem:[%s2442 + $0x190] sm:$0xff]
    %v2494 = vld [vmem:[%s2442 + $0x198] sm:$0xff]
    %v2495 = vld [vmem:[%s2442 + $0x1a0] sm:$0xff]
    %v2496 = vld [vmem:[%s2442 + $0x1a8] sm:$0xff]
    %v2497 = vld [vmem:[%s2442 + $0x1b0] sm:$0xff]
    %v2498 = vld [vmem:[%s2442 + $0x1b8] sm:$0xff]
    %v2499 = vld [vmem:[%s2442 + $0x1c0] sm:$0xff]
    %v2500 = vld [vmem:[%s2442 + $0x1c8] sm:$0xff]
    %v2501 = vld [vmem:[%s2442 + $0x1d0] sm:$0xff]
    %v2502 = vld [vmem:[%s2442 + $0x1d8] sm:$0xff]
    %v2503 = vld [vmem:[%s2442 + $0x1e0] sm:$0xff]
    %v2504 = vld [vmem:[%s2442 + $0x1e8] sm:$0xff]
    %v2505 = vld [vmem:[%s2442 + $0x1f0] sm:$0xff]
    %v2506 = vld [vmem:[%s2442 + $0x1f8] sm:$0xff]
    %v2507 = vld [vmem:[%s2442 + $0x200] sm:$0xff]
    %v2508 = vld [vmem:[%s2442 + $0x208] sm:$0xff]
    %v2509 = vld [vmem:[%s2442 + $0x210] sm:$0xff]
    %v2510 = vld [vmem:[%s2442 + $0x218] sm:$0xff]
    %v2511 = vld [vmem:[%s2442 + $0x220] sm:$0xff]
    %v2512 = vld [vmem:[%s2442 + $0x228] sm:$0xff]
    %v2513 = vld [vmem:[%s2442 + $0x230] sm:$0xff]
    %v2514 = vld [vmem:[%s2442 + $0x238] sm:$0xff]
    %v2515 = vld [vmem:[%s2442 + $0x240] sm:$0xff]
    %v2516 = vld [vmem:[%s2442 + $0x248] sm:$0xff]
    %v2517 = vld [vmem:[%s2442 + $0x250] sm:$0xff]
    %v2518 = vld [vmem:[%s2442 + $0x258] sm:$0xff]
    %v2519 = vld [vmem:[%s2442 + $0x260] sm:$0xff]
    %v2520 = vld [vmem:[%s2442 + $0x268] sm:$0xff]
    %v2521 = vld [vmem:[%s2442 + $0x270] sm:$0xff]
    %v2522 = vld [vmem:[%s2442 + $0x278] sm:$0xff]
    %s2523 = scalar_lea.vmem [#allocation9], 4
    %v2524 = vld [vmem:[%s2523] sm:$0x1]
    %v2526 = vlaneseq
    %v2527 = vshrl.u32 %v2526, 7
    %v2528 = vsub.s32 0, %v2527
    %v2529 = vrot.slane %v2524, %v2528
    %2531 = vmatprep.subr.mxu0 0.0
    %2532 = vmatpush1.msra.mxu0 %v2458
    %2533 = vmatprep.subr.mxu0 0.0
    %2534 = vmatpush1.msra.mxu0 %v2457
    %2535 = vmatprep.subr.mxu0 0.0
    %2536 = vmatpush1.msra.mxu0 %v2456
    %2537 = vmatprep.subr.mxu0 0.0
    %2538 = vmatpush1.msra.mxu0 %v2455
    %2539 = vmatprep.subr.mxu0 0.0
    %2540 = vmatpush1.msra.mxu0 %v2454
    %2541 = vmatprep.subr.mxu0 0.0
    %2542 = vmatpush1.msra.mxu0 %v2453
    %2543 = vmatprep.subr.mxu0 0.0
    %2544 = vmatpush1.msra.mxu0 %v2452
    %2545 = vmatprep.subr.mxu0 0.0
    %2546 = vmatpush1.msra.mxu0 %v2451
    %2547 = vmatprep.subr.mxu0 0.0
    %2548 = vmatpush1.msra.mxu0 %v2450
    %2549 = vmatprep.subr.mxu0 0.0
    %2550 = vmatpush1.msra.mxu0 %v2449
    %2551 = vmatprep.subr.mxu0 0.0
    %2552 = vmatpush1.msra.mxu0 %v2448
    %2553 = vmatprep.subr.mxu0 0.0
    %2554 = vmatpush1.msra.mxu0 %v2447
    %2555 = vmatprep.subr.mxu0 0.0
    %2556 = vmatpush1.msra.mxu0 %v2446
    %2557 = vmatprep.subr.mxu0 0.0
    %2558 = vmatpush1.msra.mxu0 %v2445
    %2559 = vmatprep.subr.mxu0 0.0
    %2560 = vmatpush1.msra.mxu0 %v2444
    %2561 = vmatprep.subr.mxu0 0.0
    %2562 = vmatpush1.msra.mxu0 %v2443
    %2563 = vmatprep.subr.mxu0 0.0
    %2564 = vmatpush2.msra.mxu0 %v2474
    %2565 = vmatprep.subr.mxu0 0.0
    %2566 = vmatpush2.msra.mxu0 %v2473
    %2567 = vmatprep.subr.mxu0 0.0
    %2568 = vmatpush2.msra.mxu0 %v2472
    %2569 = vmatprep.subr.mxu0 0.0
    %2570 = vmatpush2.msra.mxu0 %v2471
    %2571 = vmatprep.subr.mxu0 0.0
    %2572 = vmatpush2.msra.mxu0 %v2470
    %2573 = vmatprep.subr.mxu0 0.0
    %2574 = vmatpush2.msra.mxu0 %v2469
    %2575 = vmatprep.subr.mxu0 0.0
    %2576 = vmatpush2.msra.mxu0 %v2468
    %2577 = vmatprep.subr.mxu0 0.0
    %2578 = vmatpush2.msra.mxu0 %v2467
    %2579 = vmatprep.subr.mxu0 0.0
    %2580 = vmatpush2.msra.mxu0 %v2466
    %2581 = vmatprep.subr.mxu0 0.0
    %2582 = vmatpush2.msra.mxu0 %v2465
    %2583 = vmatprep.subr.mxu0 0.0
    %2584 = vmatpush2.msra.mxu0 %v2464
    %2585 = vmatprep.subr.mxu0 0.0
    %2586 = vmatpush2.msra.mxu0 %v2463
    %2587 = vmatprep.subr.mxu0 0.0
    %2588 = vmatpush2.msra.mxu0 %v2462
    %2589 = vmatprep.subr.mxu0 0.0
    %2590 = vmatpush2.msra.mxu0 %v2461
    %2591 = vmatprep.subr.mxu0 0.0
    %2592 = vmatpush2.msra.mxu0 %v2460
    %2593 = vmatprep.subr.mxu0 0.0
    %2594 = vmatpush2.msra.mxu0 %v2459
    %2595 = vmatprep.mubr.f32.mxu0 %v2340
    %2596 = vmatmul.mubr.f32.gmra.mxu0 %v2318
    %v2597 = vpop.f32.mrf.mxu0
    %v2598 = vadd.f32 %v2529, %v2597
    %v2599 = vpop.f32.mrf.mxu0
    %2600 = vmatprep.mubr.f32.mxu0 %v2342
    %2601 = vmatmul.mubr.f32.gmra.mxu0 %v2319
    %v2602 = vpop.f32.mrf.mxu0
    %v2603 = vadd.f32 %v2529, %v2602
    %v2604 = vpop.f32.mrf.mxu0
    %2605 = vmatprep.mubr.f32.mxu0 %v2344
    %2606 = vmatmul.mubr.f32.gmra.mxu0 %v2320
    %v2607 = vpop.f32.mrf.mxu0
    %v2608 = vadd.f32 %v2529, %v2607
    %v2609 = vpop.f32.mrf.mxu0
    %2610 = vmatprep.mubr.f32.mxu0 %v2346
    %2611 = vmatmul.mubr.f32.gmra.mxu0 %v2321
    %v2612 = vpop.f32.mrf.mxu0
    %v2613 = vadd.f32 %v2529, %v2612
    %v2614 = vpop.f32.mrf.mxu0
    %2615 = vmatprep.mubr.f32.mxu0 %v2349
    %2616 = vmatmul.mubr.f32.gmra.mxu0 %v2323
    %v2617 = vpop.f32.mrf.mxu0
    %v2618 = vadd.f32 %v2529, %v2617
    %v2619 = vpop.f32.mrf.mxu0
    %2620 = vmatprep.mubr.f32.mxu0 %v2351
    %2621 = vmatmul.mubr.f32.gmra.mxu0 %v2324
    %v2622 = vpop.f32.mrf.mxu0
    %v2623 = vadd.f32 %v2529, %v2622
    %v2624 = vpop.f32.mrf.mxu0
    %2625 = vmatprep.mubr.f32.mxu0 %v2353
    %2626 = vmatmul.mubr.f32.gmra.mxu0 %v2325
    %v2627 = vpop.f32.mrf.mxu0
    %v2628 = vadd.f32 %v2529, %v2627
    %v2629 = vpop.f32.mrf.mxu0
    %2630 = vmatprep.mubr.f32.mxu0 %v2355
    %2631 = vmatmul.mubr.f32.gmra.mxu0 %v2326
    %v2632 = vpop.f32.mrf.mxu0
    %v2633 = vadd.f32 %v2529, %v2632
    %v2634 = vpop.f32.mrf.mxu0
    %2635 = vdwg.mxu0
    %2636 = vmatprep.subr.mxu0 0.0
    %2637 = vmatpush1.msra.mxu0 %v2490
    %2638 = vmatprep.subr.mxu0 0.0
    %2639 = vmatpush1.msra.mxu0 %v2489
    %2640 = vmatprep.subr.mxu0 0.0
    %2641 = vmatpush1.msra.mxu0 %v2488
    %2642 = vmatprep.subr.mxu0 0.0
    %2643 = vmatpush1.msra.mxu0 %v2487
    %2644 = vmatprep.subr.mxu0 0.0
    %2645 = vmatpush1.msra.mxu0 %v2486
    %2646 = vmatprep.subr.mxu0 0.0
    %2647 = vmatpush1.msra.mxu0 %v2485
    %2648 = vmatprep.subr.mxu0 0.0
    %2649 = vmatpush1.msra.mxu0 %v2484
    %2650 = vmatprep.subr.mxu0 0.0
    %2651 = vmatpush1.msra.mxu0 %v2483
    %2652 = vmatprep.subr.mxu0 0.0
    %2653 = vmatpush1.msra.mxu0 %v2482
    %2654 = vmatprep.subr.mxu0 0.0
    %2655 = vmatpush1.msra.mxu0 %v2481
    %2656 = vmatprep.subr.mxu0 0.0
    %2657 = vmatpush1.msra.mxu0 %v2480
    %2658 = vmatprep.subr.mxu0 0.0
    %2659 = vmatpush1.msra.mxu0 %v2479
    %2660 = vmatprep.subr.mxu0 0.0
    %2661 = vmatpush1.msra.mxu0 %v2478
    %2662 = vmatprep.subr.mxu0 0.0
    %2663 = vmatpush1.msra.mxu0 %v2477
    %2664 = vmatprep.subr.mxu0 0.0
    %2665 = vmatpush1.msra.mxu0 %v2476
    %2666 = vmatprep.subr.mxu0 0.0
    %2667 = vmatpush1.msra.mxu0 %v2475
    %2668 = vmatprep.subr.mxu0 0.0
    %2669 = vmatpush2.msra.mxu0 %v2506
    %2670 = vmatprep.subr.mxu0 0.0
    %2671 = vmatpush2.msra.mxu0 %v2505
    %2672 = vmatprep.subr.mxu0 0.0
    %2673 = vmatpush2.msra.mxu0 %v2504
    %2674 = vmatprep.subr.mxu0 0.0
    %2675 = vmatpush2.msra.mxu0 %v2503
    %2676 = vmatprep.subr.mxu0 0.0
    %2677 = vmatpush2.msra.mxu0 %v2502
    %2678 = vmatprep.subr.mxu0 0.0
    %2679 = vmatpush2.msra.mxu0 %v2501
    %2680 = vmatprep.subr.mxu0 0.0
    %2681 = vmatpush2.msra.mxu0 %v2500
    %2682 = vmatprep.subr.mxu0 0.0
    %2683 = vmatpush2.msra.mxu0 %v2499
    %2684 = vmatprep.subr.mxu0 0.0
    %2685 = vmatpush2.msra.mxu0 %v2498
    %2686 = vmatprep.subr.mxu0 0.0
    %2687 = vmatpush2.msra.mxu0 %v2497
    %2688 = vmatprep.subr.mxu0 0.0
    %2689 = vmatpush2.msra.mxu0 %v2496
    %2690 = vmatprep.subr.mxu0 0.0
    %2691 = vmatpush2.msra.mxu0 %v2495
    %2692 = vmatprep.subr.mxu0 0.0
    %2693 = vmatpush2.msra.mxu0 %v2494
    %2694 = vmatprep.subr.mxu0 0.0
    %2695 = vmatpush2.msra.mxu0 %v2493
    %2696 = vmatprep.subr.mxu0 0.0
    %2697 = vmatpush2.msra.mxu0 %v2492
    %2698 = vmatprep.subr.mxu0 0.0
    %2699 = vmatpush2.msra.mxu0 %v2491
    %2700 = vmatprep.mubr.f32.mxu0 %v2392
    %2701 = vmatmul.mubr.f32.gmra.mxu0 %v2366
    %v2702 = vpop.f32.mrf.mxu0
    %v2703 = vadd.f32 %v2598, %v2702
    %v2704 = vpop.f32.mrf.mxu0
    %2705 = vmatprep.mubr.f32.mxu0 %v2394
    %2706 = vmatmul.mubr.f32.gmra.mxu0 %v2368
    %v2707 = vpop.f32.mrf.mxu0
    %v2708 = vadd.f32 %v2603, %v2707
    %v2709 = vpop.f32.mrf.mxu0
    %2710 = vmatprep.mubr.f32.mxu0 %v2396
    %2711 = vmatmul.mubr.f32.gmra.mxu0 %v2370
    %v2712 = vpop.f32.mrf.mxu0
    %v2713 = vadd.f32 %v2608, %v2712
    %v2714 = vpop.f32.mrf.mxu0
    %2715 = vmatprep.mubr.f32.mxu0 %v2398
    %2716 = vmatmul.mubr.f32.gmra.mxu0 %v2372
    %v2717 = vpop.f32.mrf.mxu0
    %v2718 = vadd.f32 %v2613, %v2717
    %v2719 = vpop.f32.mrf.mxu0
    %2720 = vmatprep.mubr.f32.mxu0 %v2401
    %2721 = vmatmul.mubr.f32.gmra.mxu0 %v2375
    %v2722 = vpop.f32.mrf.mxu0
    %v2723 = vadd.f32 %v2618, %v2722
    %v2724 = vpop.f32.mrf.mxu0
    %2725 = vmatprep.mubr.f32.mxu0 %v2403
    %2726 = vmatmul.mubr.f32.gmra.mxu0 %v2377
    %v2727 = vpop.f32.mrf.mxu0
    %v2728 = vadd.f32 %v2623, %v2727
    %v2729 = vpop.f32.mrf.mxu0
    %2730 = vmatprep.mubr.f32.mxu0 %v2405
    %2731 = vmatmul.mubr.f32.gmra.mxu0 %v2379
    %v2732 = vpop.f32.mrf.mxu0
    %v2733 = vadd.f32 %v2628, %v2732
    %v2734 = vpop.f32.mrf.mxu0
    %2735 = vmatprep.mubr.f32.mxu0 %v2407
    %2736 = vmatmul.mubr.f32.gmra.mxu0 %v2381
    %v2737 = vpop.f32.mrf.mxu0
    %v2738 = vadd.f32 %v2633, %v2737
    %v2739 = vpop.f32.mrf.mxu0
    %2740 = vdwg.mxu0
    %2741 = vmatprep.subr.mxu0 0.0
    %2742 = vmatpush1.msra.mxu0 %v2522
    %2743 = vmatprep.subr.mxu0 0.0
    %2744 = vmatpush1.msra.mxu0 %v2521
    %2745 = vmatprep.subr.mxu0 0.0
    %2746 = vmatpush1.msra.mxu0 %v2520
    %2747 = vmatprep.subr.mxu0 0.0
    %2748 = vmatpush1.msra.mxu0 %v2519
    %2749 = vmatprep.subr.mxu0 0.0
    %2750 = vmatpush1.msra.mxu0 %v2518
    %2751 = vmatprep.subr.mxu0 0.0
    %2752 = vmatpush1.msra.mxu0 %v2517
    %2753 = vmatprep.subr.mxu0 0.0
    %2754 = vmatpush1.msra.mxu0 %v2516
    %2755 = vmatprep.subr.mxu0 0.0
    %2756 = vmatpush1.msra.mxu0 %v2515
    %2757 = vmatprep.subr.mxu0 0.0
    %2758 = vmatpush1.msra.mxu0 %v2514
    %2759 = vmatprep.subr.mxu0 0.0
    %2760 = vmatpush1.msra.mxu0 %v2513
    %2761 = vmatprep.subr.mxu0 0.0
    %2762 = vmatpush1.msra.mxu0 %v2512
    %2763 = vmatprep.subr.mxu0 0.0
    %2764 = vmatpush1.msra.mxu0 %v2511
    %2765 = vmatprep.subr.mxu0 0.0
    %2766 = vmatpush1.msra.mxu0 %v2510
    %2767 = vmatprep.subr.mxu0 0.0
    %2768 = vmatpush1.msra.mxu0 %v2509
    %2769 = vmatprep.subr.mxu0 0.0
    %2770 = vmatpush1.msra.mxu0 %v2508
    %2771 = vmatprep.subr.mxu0 0.0
    %2772 = vmatpush1.msra.mxu0 %v2507
    %2773 = vmatprep.subr.mxu0 0.0
    %2774 = vmatpush2.msra.mxu0 0.0
    %2775 = vmatprep.subr.mxu0 0.0
    %2776 = vmatpush2.msra.mxu0 0.0
    %2777 = vmatprep.subr.mxu0 0.0
    %2778 = vmatpush2.msra.mxu0 0.0
    %2779 = vmatprep.subr.mxu0 0.0
    %2780 = vmatpush2.msra.mxu0 0.0
    %2781 = vmatprep.subr.mxu0 0.0
    %2782 = vmatpush2.msra.mxu0 0.0
    %2783 = vmatprep.subr.mxu0 0.0
    %2784 = vmatpush2.msra.mxu0 0.0
    %2785 = vmatprep.subr.mxu0 0.0
    %2786 = vmatpush2.msra.mxu0 0.0
    %2787 = vmatprep.subr.mxu0 0.0
    %2788 = vmatpush2.msra.mxu0 0.0
    %2789 = vmatprep.subr.mxu0 0.0
    %2790 = vmatpush2.msra.mxu0 0.0
    %2791 = vmatprep.subr.mxu0 0.0
    %2792 = vmatpush2.msra.mxu0 0.0
    %2793 = vmatprep.subr.mxu0 0.0
    %2794 = vmatpush2.msra.mxu0 0.0
    %2795 = vmatprep.subr.mxu0 0.0
    %2796 = vmatpush2.msra.mxu0 0.0
    %2797 = vmatprep.subr.mxu0 0.0
    %2798 = vmatpush2.msra.mxu0 0.0
    %2799 = vmatprep.subr.mxu0 0.0
    %2800 = vmatpush2.msra.mxu0 0.0
    %2801 = vmatprep.subr.mxu0 0.0
    %2802 = vmatpush2.msra.mxu0 0.0
    %2803 = vmatprep.subr.mxu0 0.0
    %2804 = vmatpush2.msra.mxu0 0.0
    %2805 = vmatprep.mubr.f32.mxu0 0.0
    %2806 = vmatmul.mubr.f32.gmra.mxu0 %v2418
    %v2807 = vpop.f32.mrf.mxu0
    %v2808 = vadd.f32 %v2703, %v2807
    %v2809 = vpop.f32.mrf.mxu0
    %2810 = vmatprep.mubr.f32.mxu0 0.0
    %2811 = vmatmul.mubr.f32.gmra.mxu0 %v2420
    %v2812 = vpop.f32.mrf.mxu0
    %v2813 = vadd.f32 %v2708, %v2812
    %v2814 = vpop.f32.mrf.mxu0
    %2815 = vmatprep.mubr.f32.mxu0 0.0
    %2816 = vmatmul.mubr.f32.gmra.mxu0 %v2422
    %v2817 = vpop.f32.mrf.mxu0
    %v2818 = vadd.f32 %v2713, %v2817
    %v2819 = vpop.f32.mrf.mxu0
    %2820 = vmatprep.mubr.f32.mxu0 0.0
    %2821 = vmatmul.mubr.f32.gmra.mxu0 %v2424
    %v2822 = vpop.f32.mrf.mxu0
    %v2823 = vadd.f32 %v2718, %v2822
    %v2824 = vpop.f32.mrf.mxu0
    %2825 = vmatprep.mubr.f32.mxu0 0.0
    %2826 = vmatmul.mubr.f32.gmra.mxu0 %v2427
    %v2827 = vpop.f32.mrf.mxu0
    %v2828 = vadd.f32 %v2723, %v2827
    %v2829 = vpop.f32.mrf.mxu0
    %2830 = vmatprep.mubr.f32.mxu0 0.0
    %2831 = vmatmul.mubr.f32.gmra.mxu0 %v2429
    %v2832 = vpop.f32.mrf.mxu0
    %v2833 = vadd.f32 %v2728, %v2832
    %v2834 = vpop.f32.mrf.mxu0
    %2835 = vmatprep.mubr.f32.mxu0 0.0
    %2836 = vmatmul.mubr.f32.gmra.mxu0 %v2431
    %v2837 = vpop.f32.mrf.mxu0
    %v2838 = vadd.f32 %v2733, %v2837
    %v2839 = vpop.f32.mrf.mxu0
    %2840 = vmatprep.mubr.f32.mxu0 0.0
    %2841 = vmatmul.mubr.f32.gmra.mxu0 %v2433
    %v2842 = vpop.f32.mrf.mxu0
    %v2843 = vadd.f32 %v2738, %v2842
    %v2844 = vpop.f32.mrf.mxu0
    %2845 = vdwg.mxu0
    %v2846 = vtanh.pop %v2808
    %v2847 = vtanh.pop %v2813
    %v2848 = vtanh.pop %v2818
    %v2849 = vtanh.pop %v2823
    %v2850 = vtanh.pop %v2828
    %v2851 = vtanh.pop %v2833
    %v2852 = vtanh.pop %v2838
    %v2853 = vtanh.pop %v2843
    %2854 = vxpose.xlu0.b32.start [1/16] %v2846, 128
    %2855 = vxpose.xlu0.b32.cont [2/16] %v2847, 128
    %2856 = vxpose.xlu0.b32.cont [3/16] %v2848, 128
    %2857 = vxpose.xlu0.b32.cont [4/16] %v2849, 128
    %2858 = vxpose.xlu0.b32.cont [5/16] 0.0, 128
    %2859 = vxpose.xlu0.b32.cont [6/16] 0.0, 128
    %2860 = vxpose.xlu0.b32.cont [7/16] 0.0, 128
    %2861 = vxpose.xlu0.b32.cont [8/16] 0.0, 128
    %2862 = vxpose.xlu0.b32.cont [9/16] 0.0, 128
    %2863 = vxpose.xlu0.b32.cont [10/16] 0.0, 128
    %2864 = vxpose.xlu0.b32.cont [11/16] 0.0, 128
    %2865 = vxpose.xlu0.b32.cont [12/16] 0.0, 128
    %2866 = vxpose.xlu0.b32.cont [13/16] 0.0, 128
    %2867 = vxpose.xlu0.b32.cont [14/16] 0.0, 128
    %2868 = vxpose.xlu0.b32.cont [15/16] 0.0, 128
    %2869 = vxpose.xlu0.b32.end [16/16] 0.0, 128
    %v2870 = vpop.trf.xlu0
    %v2871 = vpop.trf.xlu0
    %v2872 = vpop.trf.xlu0
    %v2873 = vpop.trf.xlu0
    %v2874 = vpop.trf.xlu0
    %v2875 = vpop.trf.xlu0
    %v2876 = vpop.trf.xlu0
    %v2877 = vpop.trf.xlu0
    %v2878 = vpop.trf.xlu0
    %v2879 = vpop.trf.xlu0
    %v2880 = vpop.trf.xlu0
    %v2881 = vpop.trf.xlu0
    %v2882 = vpop.trf.xlu0
    %v2883 = vpop.trf.xlu0
    %v2884 = vpop.trf.xlu0
    %v2885 = vpop.trf.xlu0
    %2886 = vxpose.xlu0.b32.start [1/16] %v2850, 128
    %2887 = vxpose.xlu0.b32.cont [2/16] %v2851, 128
    %2888 = vxpose.xlu0.b32.cont [3/16] %v2852, 128
    %2889 = vxpose.xlu0.b32.cont [4/16] %v2853, 128
    %2890 = vxpose.xlu0.b32.cont [5/16] 0.0, 128
    %2891 = vxpose.xlu0.b32.cont [6/16] 0.0, 128
    %2892 = vxpose.xlu0.b32.cont [7/16] 0.0, 128
    %2893 = vxpose.xlu0.b32.cont [8/16] 0.0, 128
    %2894 = vxpose.xlu0.b32.cont [9/16] 0.0, 128
    %2895 = vxpose.xlu0.b32.cont [10/16] 0.0, 128
    %2896 = vxpose.xlu0.b32.cont [11/16] 0.0, 128
    %2897 = vxpose.xlu0.b32.cont [12/16] 0.0, 128
    %2898 = vxpose.xlu0.b32.cont [13/16] 0.0, 128
    %2899 = vxpose.xlu0.b32.cont [14/16] 0.0, 128
    %2900 = vxpose.xlu0.b32.cont [15/16] 0.0, 128
    %2901 = vxpose.xlu0.b32.end [16/16] 0.0, 128
    %v2902 = vpop.trf.xlu0
    %v2903 = vpop.trf.xlu0
    %v2904 = vpop.trf.xlu0
    %v2905 = vpop.trf.xlu0
    %v2906 = vpop.trf.xlu0
    %v2907 = vpop.trf.xlu0
    %v2908 = vpop.trf.xlu0
    %v2909 = vpop.trf.xlu0
    %v2910 = vpop.trf.xlu0
    %v2911 = vpop.trf.xlu0
    %v2912 = vpop.trf.xlu0
    %v2913 = vpop.trf.xlu0
    %v2914 = vpop.trf.xlu0
    %v2915 = vpop.trf.xlu0
    %v2916 = vpop.trf.xlu0
    %v2917 = vpop.trf.xlu0
    %vm2918 = vcmask 261120
    %2919 = vst.msk [vmem:[#allocation10] sm:$0xff] %vm2918, %v2870
    %2920 = vst.msk [vmem:[#allocation10 + $0x8] sm:$0xff] %vm2918, %v2871
    %2921 = vst.msk [vmem:[#allocation10 + $0x10] sm:$0xff] %vm2918, %v2902
    %2922 = vst.msk [vmem:[#allocation10 + $0x18] sm:$0xff] %vm2918, %v2903
    // Predicated region
    $region26: #{postnet_forward.1} parent=1 // pred_check
      _
    $region27: #{postnet_forward.1} parent=1 // pred_check_branch
      %2924 = sbr.rel (0) target = $region29
    $region28: #{postnet_forward.1} parent=1 // pred_region
      %s2926 = ssub.s32 512, 512
      %2927 = vsyncadd [#allocation6], %s2926
      %s2928 = sshll.u32 [#allocation10], 4
      %s2929 = int_to_ptr.vmem [resolvable:$true] %s2928
      %2934 = dma.vmem_to_hbm [thread:$0]  %s2929, 512, %s3, [#allocation6], 128, 128, 8
    $region29: #{postnet_forward.1} parent=1 // pred_fallthru
      _
    // Predicated region
    $region30: #{postnet_forward.1} parent=1 // pred_check
      _
    $region31: #{postnet_forward.1} parent=1 // pred_check_branch
      %2936 = sbr.rel (0) target = $region33
    $region32: #{postnet_forward.1} parent=1 // pred_region
      %2937 = dma.done [#allocation6], 512
    $region33: #{postnet_forward.1} parent=1 // pred_fallthru
      _
    %2938 = vsyncpa [#allocation5], 1
    %2939 = vsyncpa [#allocation8], 1
    %2940 = vsyncpa [#allocation6], 1

</llo_original>
